<compile_context>
chip_gen: v7x
topology: tpu7x:2x2x1
jax: 0.10.0
libtpu: 0.0.40
codegen_flags: <defaults>
</compile_context>

<pallas_src>
import numpy as np
import jax
import jax.numpy as jnp
from jax.experimental import pallas as pl
from jax.experimental.pallas import tpu as pltpu

DAYS = 10
NWIN = 3            # time_length // days = 30 // 10
EPS = 1e-5


def _sigmoid(z):
    return 1.0 / (1.0 + jnp.exp(-z))


def _sum_days(t):
    """Sum a (NWIN, DAYS, TB, X) tensor over the DAYS axis (explicit VPU adds)."""
    acc = t[:, 0]
    for k in range(1, t.shape[1]):
        acc = acc + t[:, k]
    return acc


def _ln_win(v, g, b):
    """LayerNorm over the leading window axis. v: (NWIN, TB, X); g,b: (NWIN, 1)."""
    mu = (v[0] + v[1] + v[2]) * (1.0 / NWIN)
    d0, d1, d2 = v[0] - mu, v[1] - mu, v[2] - mu
    var = (d0 * d0 + d1 * d1 + d2 * d2) * (1.0 / NWIN)
    inv = jax.lax.rsqrt(var + EPS)
    return (v - mu[None]) * inv[None] * g[:, :, None] + b[:, :, None]


def _fnet_kernel(x_ref,
                 tsg_ref, tsb_ref,
                 wp_ref, bp_ref,
                 w1_ref, b1_ref, w2_ref, b2_ref,
                 w3_ref, b3_ref, w4_ref, b4_ref,
                 lng_ref, lnb_ref,
                 wih_ref, whh_ref, bl_ref,
                 wlin_ref, blin_ref,
                 out_ref):
    f32 = jnp.float32
    d = float(DAYS)

    xw = x_ref[...]                       # (NWIN, DAYS, TB, C)
    TB = xw.shape[2]
    C = xw.shape[3]
    M = NWIN * TB                         # matmul M dim

    # ---------------- FactorExtraction: per-window TS statistics -----------
    mean_x = _sum_days(xw) * (1.0 / d)                  # (NWIN, TB, C)
    xc = xw - mean_x[:, None]                           # (NWIN, DAYS, TB, C)
    std_x = jnp.sqrt(_sum_days(xc * xc) * (1.0 / (d - 1.0)))
    zscore = mean_x / std_x
    ret = xw[:, DAYS - 1] / xw[:, 0] - 1.0
    dsum = d * (d + 1.0) / 2.0
    decay = xw[:, 0] * (1.0 / dsum)
    for k in range(1, DAYS):
        decay = decay + xw[:, k] * ((k + 1.0) / dsum)

    # pairwise cov / corr over channel pairs (i < j), exact f32 VPU math
    cov_blocks, corr_blocks = [], []
    for i in range(C - 1):
        prod = xc[:, :, :, i:i + 1] * xc[:, :, :, i + 1:]       # (NWIN,DAYS,TB,C-1-i)
        cblk = _sum_days(prod) * (1.0 / (d - 1.0))              # (NWIN,TB,C-1-i)
        cov_blocks.append(cblk)
        corr_blocks.append(cblk / (std_x[:, :, i:i + 1] * std_x[:, :, i + 1:]))
    cov = jnp.concatenate(cov_blocks, axis=-1)                  # (NWIN, TB, P)
    corr = jnp.concatenate(corr_blocks, axis=-1)                # (NWIN, TB, P)

    # TS_LayerNorm1d over the 3 windows for every factor branch
    x1 = _ln_win(corr,   tsg_ref[0], tsb_ref[0])
    x2 = _ln_win(cov,    tsg_ref[1], tsb_ref[1])
    x3 = _ln_win(std_x,  tsg_ref[2], tsb_ref[2])
    x4 = _ln_win(zscore, tsg_ref[3], tsb_ref[3])
    x5 = _ln_win(ret,    tsg_ref[4], tsb_ref[4])
    x6 = _ln_win(decay,  tsg_ref[5], tsb_ref[5])
    x7 = _ln_win(mean_x, tsg_ref[6], tsb_ref[6])

    # --------- param_extraction: Conv1d(C->7C, k=10, s=10) + LN ------------
    # Flatten the 10 day slabs along the lane axis (order k*C + c) in VMEM.
    xflat = jnp.concatenate([xw[:, k] for k in range(DAYS)], axis=-1)  # (NWIN,TB,DAYS*C)
    ch7 = wp_ref.shape[1]
    xp = jnp.dot(xflat.reshape(M, DAYS * C), wp_ref[...],
                 preferred_element_type=f32) + bp_ref[...]
    xfeat2 = _ln_win(xp.reshape(NWIN, TB, ch7), lng_ref[0], lnb_ref[0])

    # --------- encoder1..4: single contiguous concat + one matmul each -----
    feat = jnp.concatenate([x1, x2, x3, x4, x5, x6, x7, xfeat2], axis=-1)  # (NWIN,TB,ch1)

    def enc(v, w_ref, b_ref, g, b):
        cout = w_ref.shape[1]
        y = jnp.dot(v.reshape(M, v.shape[-1]), w_ref[...],
                    preferred_element_type=f32) + b_ref[...]
        return jnp.maximum(_ln_win(y.reshape(NWIN, TB, cout), g, b), 0.0)

    h = enc(feat, w1_ref, b1_ref, lng_ref[1], lnb_ref[1])
    h = enc(h,    w2_ref, b2_ref, lng_ref[2], lnb_ref[2])
    h = enc(h,    w3_ref, b3_ref, lng_ref[3], lnb_ref[3])
    h = enc(h,    w4_ref, b4_ref, lng_ref[4], lnb_ref[4])        # (NWIN, TB, e4)

    # --------------- LSTM: fused gates, precomputed x contribution ---------
    H = whh_ref.shape[0]
    e4 = wih_ref.shape[0]
    xg = jnp.dot(h.reshape(M, e4), wih_ref[...],
                 preferred_element_type=f32) + bl_ref[...]       # (M, 4H)
    xg = xg.reshape(NWIN, TB, 4 * H)

    h_t = jnp.zeros((TB, H), f32)
    c_t = jnp.zeros((TB, H), f32)
    hs = []
    for t in range(NWIN):
        gates = xg[t] + jnp.dot(h_t, whh_ref[...], preferred_element_type=f32)
        i_g = _sigmoid(gates[:, 0 * H:1 * H])
        f_g = _sigmoid(gates[:, 1 * H:2 * H])
        g_g = jnp.tanh(gates[:, 2 * H:3 * H])
        o_g = _sigmoid(gates[:, 3 * H:4 * H])
        c_t = f_g * c_t + i_g * g_g
        h_t = o_g * jnp.tanh(c_t)
        hs.append(h_t)

    # ---------- ln2 over the 3 timesteps + flatten + final Linear ----------
    mu = (hs[0] + hs[1] + hs[2]) * (1.0 / NWIN)
    d0, d1, d2 = hs[0] - mu, hs[1] - mu, hs[2] - mu
    inv = jax.lax.rsqrt((d0 * d0 + d1 * d1 + d2 * d2) * (1.0 / NWIN) + EPS)
    g2 = lng_ref[5]
    b2 = lnb_ref[5]
    acc = jnp.zeros((TB, H), f32)
    for t, dt in enumerate((d0, d1, d2)):
        n_t = dt * inv * g2[t:t + 1, :] + b2[t:t + 1, :]
        acc = acc + n_t * wlin_ref[t:t + 1, :]
    out_ref[...] = jnp.sum(acc, axis=-1, keepdims=True) + blin_ref[...]


def init_params(key, C, hidden=30):
    P = C * (C - 1) // 2
    ch7 = 7 * C
    ch1 = 2 * P + 5 * C + ch7
    e1, e2, e3, e4 = ch1 // 2, ch1 // 4, ch1 // 8, ch1 // 16
    dims = dict(P=P, ch1=ch1, e1=e1, e2=e2, e3=e3, e4=e4, H=hidden, ch7=ch7)

    keys = iter(jax.random.split(key, 64))

    def nrm(shape, scale=0.1):
        return (scale * jax.random.normal(next(keys), shape)).astype(jnp.float32)

    p = {}
    p["ts_gamma"] = 1.0 + nrm((7, NWIN, 1))
    p["ts_beta"] = nrm((7, NWIN, 1))

    wp = nrm((ch7, C, DAYS), scale=(2.0 / (C * DAYS)) ** 0.5)    # kaiming-ish
    p["wp"] = jnp.transpose(wp, (2, 1, 0)).reshape(DAYS * C, ch7)
    p["bp"] = nrm((1, ch7))

    def enc_w(cin, cout):
        w = nrm((cout, cin), scale=(2.0 / cin) ** 0.5)
        return w.T, nrm((1, cout))

    p["w1"], p["b1"] = enc_w(ch1, e1)
    p["w2"], p["b2"] = enc_w(e1, e2)
    p["w3"], p["b3"] = enc_w(e2, e3)
    p["w4"], p["b4"] = enc_w(e3, e4)

    # stacked LayerNorm affines: [param_extraction, enc1, enc2, enc3, enc4, ln2]
    p["ln_gamma"] = 1.0 + nrm((6, NWIN, 1))
    p["ln_beta"] = nrm((6, NWIN, 1))

    H = hidden
    s = (1.0 / H) ** 0.5
    p["wih"] = nrm((e4, 4 * H), scale=s)      # fused gates [i | f | g | o]
    p["whh"] = nrm((H, 4 * H), scale=s)
    p["blstm"] = nrm((1, 4 * H), scale=s)

    p["wlin"] = nrm((NWIN, H), scale=1.0)     # trunc_normal-ish
    p["blin"] = nrm((1, 1))
    return p, dims


def factor_net_forward(x, params, batch_tile=8):
    B, T, C = x.shape
    assert T == NWIN * DAYS
    TB = batch_tile
    G = -(-B // TB)                 # ceil(B / TB)
    Bpad = G * TB

    xf = x.astype(jnp.float32)
    if Bpad != B:                   # pad with edge replication (discarded later)
        pad = jnp.broadcast_to(xf[-1:], (Bpad - B, T, C))
        xf = jnp.concatenate([xf, pad], axis=0)

    # (NWIN, DAYS, Bpad, C): windows & days on leading axes, batch on sublanes.
    xr = jnp.transpose(xf.reshape(Bpad, NWIN, DAYS, C), (1, 2, 0, 3))

    weights = [params["ts_gamma"], params["ts_beta"],
               params["wp"], params["bp"],
               params["w1"], params["b1"], params["w2"], params["b2"],
               params["w3"], params["b3"], params["w4"], params["b4"],
               params["ln_gamma"], params["ln_beta"],
               params["wih"], params["whh"], params["blstm"],
               params["wlin"], params["blin"]]

    x_spec = pl.BlockSpec((NWIN, DAYS, TB, C), lambda g: (0, 0, g, 0))
    w_specs = [pl.BlockSpec(w.shape, lambda g, n=w.ndim: (0,) * n) for w in weights]

    out = pl.pallas_call(
        _fnet_kernel,
        out_shape=jax.ShapeDtypeStruct((Bpad, 1), jnp.float32),
        grid=(G,),
        in_specs=[x_spec] + w_specs,
        out_specs=pl.BlockSpec((TB, 1), lambda g: (g, 0)),
        compiler_params=pltpu.CompilerParams(
            dimension_semantics=("parallel",),
            vmem_limit_bytes=64 * 1024 * 1024),
    )(xr, *weights)
    return out[:B]                  # (B, 1)


def reference_forward(x, params, dims):
    # Plain-JAX mirror of the same math (for validation).
    hp = jax.lax.Precision.HIGHEST
    B, T, C = x.shape
    d = float(DAYS)
    xw = x.astype(jnp.float32).reshape(B, NWIN, DAYS, C)
    ii, jj = np.triu_indices(C, k=1)
    xa, xb = xw[..., ii], xw[..., jj]

    def ln_t(v, g, b):              # v: (B, NWIN, N); g, b: (NWIN, 1)
        mu = v.mean(axis=1, keepdims=True)
        var = ((v - mu) ** 2).mean(axis=1, keepdims=True)
        return (v - mu) * jax.lax.rsqrt(var + EPS) * g[None] + b[None]

    mean_x = xw.mean(axis=2)
    xc = xw - mean_x[:, :, None, :]
    std_x = jnp.sqrt((xc * xc).sum(axis=2) / (d - 1.0))
    zscore = mean_x / std_x
    ret = xw[:, :, -1, :] / xw[:, :, 0, :] - 1.0
    dw = jnp.arange(1, DAYS + 1, dtype=jnp.float32) / (DAYS * (DAYS + 1) / 2.0)
    decay = (xw * dw[None, None, :, None]).sum(axis=2)

    ma, mb = xa.mean(axis=2), xb.mean(axis=2)
    ac, bc = xa - ma[:, :, None, :], xb - mb[:, :, None, :]
    cov = (ac * bc).sum(axis=2) / (d - 1.0)
    sa = jnp.sqrt((ac * ac).sum(axis=2) / (d - 1.0))
    sb = jnp.sqrt((bc * bc).sum(axis=2) / (d - 1.0))
    corr = cov / (sa * sb)

    tg, tb = params["ts_gamma"], params["ts_beta"]
    branches = [corr, cov, std_x, zscore, ret, decay, mean_x]
    xfeat = jnp.concatenate(
        [ln_t(v, tg[k], tb[k]) for k, v in enumerate(branches)], axis=2)

    lng, lnb = params["ln_gamma"], params["ln_beta"]
    xflat = xw.reshape(B, NWIN, DAYS * C)
    xp = jnp.einsum("btk,ko->bto", xflat, params["wp"], precision=hp) + params["bp"][None]
    xfeat2 = ln_t(xp, lng[0], lnb[0])
    h = jnp.concatenate([xfeat, xfeat2], axis=2)

    for k, (wn, bn) in enumerate((("w1", "b1"), ("w2", "b2"),
                                  ("w3", "b3"), ("w4", "b4"))):
        y = jnp.einsum("btk,ko->bto", h, params[wn], precision=hp) + params[bn][None]
        h = jnp.maximum(ln_t(y, lng[k + 1], lnb[k + 1]), 0.0)

    H = dims["H"]
    h_t = jnp.zeros((B, H), jnp.float32)
    c_t = jnp.zeros((B, H), jnp.float32)
    outs = []
    for t in range(NWIN):
        gates = (jnp.dot(h[:, t, :], params["wih"], precision=hp)
                 + jnp.dot(h_t, params["whh"], precision=hp) + params["blstm"])
        i_g = 1.0 / (1.0 + jnp.exp(-gates[:, 0 * H:1 * H]))
        f_g = 1.0 / (1.0 + jnp.exp(-gates[:, 1 * H:2 * H]))
        g_g = jnp.tanh(gates[:, 2 * H:3 * H])
        o_g = 1.0 / (1.0 + jnp.exp(-gates[:, 3 * H:4 * H]))
        c_t = f_g * c_t + i_g * g_g
        h_t = o_g * jnp.tanh(c_t)
        outs.append(h_t)
    lstm_out = jnp.stack(outs, axis=1)                    # (B, NWIN, H)
    ln_out = ln_t(lstm_out, lng[5], lnb[5])
    out = jnp.einsum("btc,tc->b", ln_out, params["wlin"], precision=hp)
    return out[:, None] + params["blin"]


if __name__ == "__main__":
    B, C, T = 12, 4, NWIN * DAYS
    x = jax.random.normal(jax.random.PRNGKey(0), (B, T, C), dtype=jnp.float32) + 5.0
    params, dims = init_params(jax.random.PRNGKey(42), C)

    fwd = jax.jit(lambda inp: factor_net_forward(inp, params, batch_tile=8))
    y = jax.block_until_ready(fwd(x))
    assert y.shape == (B, 1)

    y_ref = reference_forward(x, params, dims)
    if not bool(jnp.allclose(y, y_ref, rtol=1e-2, atol=1e-2)):
        raise AssertionError(
            f"kernel/reference mismatch:\n{np.asarray(y).ravel()}\nvs\n"
            f"{np.asarray(y_ref).ravel()}")
    print("KERNEL_OK")
</pallas_src>

<mosaic_0001>
module attributes {stable_mosaic.version = 11 : i64} {
  func.func @_fnet_kernel(%arg0: i32, %arg1: memref<3x10x8x4xf32, #tpu.memory_space<vmem>>, %arg2: memref<7x3x1xf32, #tpu.memory_space<vmem>>, %arg3: memref<7x3x1xf32, #tpu.memory_space<vmem>>, %arg4: memref<40x28xf32, #tpu.memory_space<vmem>>, %arg5: memref<1x28xf32, #tpu.memory_space<vmem>>, %arg6: memref<60x30xf32, #tpu.memory_space<vmem>>, %arg7: memref<1x30xf32, #tpu.memory_space<vmem>>, %arg8: memref<30x15xf32, #tpu.memory_space<vmem>>, %arg9: memref<1x15xf32, #tpu.memory_space<vmem>>, %arg10: memref<15x7xf32, #tpu.memory_space<vmem>>, %arg11: memref<1x7xf32, #tpu.memory_space<vmem>>, %arg12: memref<7x3xf32, #tpu.memory_space<vmem>>, %arg13: memref<1x3xf32, #tpu.memory_space<vmem>>, %arg14: memref<6x3x1xf32, #tpu.memory_space<vmem>>, %arg15: memref<6x3x1xf32, #tpu.memory_space<vmem>>, %arg16: memref<3x120xf32, #tpu.memory_space<vmem>>, %arg17: memref<30x120xf32, #tpu.memory_space<vmem>>, %arg18: memref<1x120xf32, #tpu.memory_space<vmem>>, %arg19: memref<3x30xf32, #tpu.memory_space<vmem>>, %arg20: memref<1x1xf32, #tpu.memory_space<vmem>>, %arg21: memref<8x1xf32, #tpu.memory_space<vmem>>) attributes {dimension_semantics = [#tpu.dimension_semantics<parallel>], iteration_bounds = array<i64: 2>, scalar_prefetch = 0 : i64, scratch_operands = 0 : i64, tpu.core_type = #tpu.core_type<tc>, window_params = [{transform_indices = @transform_0, window_bounds = array<i64: 3, 10, 8, 4>}, {pipeline_mode = #tpu.pipeline_mode<synchronous>, transform_indices = @transform_1, window_bounds = array<i64: 7, 3, 1>}, {pipeline_mode = #tpu.pipeline_mode<synchronous>, transform_indices = @transform_2, window_bounds = array<i64: 7, 3, 1>}, {pipeline_mode = #tpu.pipeline_mode<synchronous>, transform_indices = @transform_3, window_bounds = array<i64: 40, 28>}, {pipeline_mode = #tpu.pipeline_mode<synchronous>, transform_indices = @transform_4, window_bounds = array<i64: 1, 28>}, {pipeline_mode = #tpu.pipeline_mode<synchronous>, transform_indices = @transform_5, window_bounds = array<i64: 60, 30>}, {pipeline_mode = #tpu.pipeline_mode<synchronous>, transform_indices = @transform_6, window_bounds = array<i64: 1, 30>}, {pipeline_mode = #tpu.pipeline_mode<synchronous>, transform_indices = @transform_7, window_bounds = array<i64: 30, 15>}, {pipeline_mode = #tpu.pipeline_mode<synchronous>, transform_indices = @transform_8, window_bounds = array<i64: 1, 15>}, {pipeline_mode = #tpu.pipeline_mode<synchronous>, transform_indices = @transform_9, window_bounds = array<i64: 15, 7>}, {pipeline_mode = #tpu.pipeline_mode<synchronous>, transform_indices = @transform_10, window_bounds = array<i64: 1, 7>}, {pipeline_mode = #tpu.pipeline_mode<synchronous>, transform_indices = @transform_11, window_bounds = array<i64: 7, 3>}, {pipeline_mode = #tpu.pipeline_mode<synchronous>, transform_indices = @transform_12, window_bounds = array<i64: 1, 3>}, {pipeline_mode = #tpu.pipeline_mode<synchronous>, transform_indices = @transform_13, window_bounds = array<i64: 6, 3, 1>}, {pipeline_mode = #tpu.pipeline_mode<synchronous>, transform_indices = @transform_14, window_bounds = array<i64: 6, 3, 1>}, {pipeline_mode = #tpu.pipeline_mode<synchronous>, transform_indices = @transform_15, window_bounds = array<i64: 3, 120>}, {pipeline_mode = #tpu.pipeline_mode<synchronous>, transform_indices = @transform_16, window_bounds = array<i64: 30, 120>}, {pipeline_mode = #tpu.pipeline_mode<synchronous>, transform_indices = @transform_17, window_bounds = array<i64: 1, 120>}, {pipeline_mode = #tpu.pipeline_mode<synchronous>, transform_indices = @transform_18, window_bounds = array<i64: 3, 30>}, {pipeline_mode = #tpu.pipeline_mode<synchronous>, transform_indices = @transform_19, window_bounds = array<i64: 1, 1>}, {transform_indices = @transform_20, window_bounds = array<i64: 8, 1>}]} {
    %c0 = arith.constant 0 : index
    %c0_0 = arith.constant 0 : index
    %c0_1 = arith.constant 0 : index
    %c0_2 = arith.constant 0 : index
    %0 = vector.load %arg1[%c0, %c0_0, %c0_1, %c0_2] : memref<3x10x8x4xf32, #tpu.memory_space<vmem>>, vector<3x10x8x4xf32>
    %1 = vector.extract_strided_slice %0 {offsets = [0, 0, 0, 0], sizes = [3, 1, 8, 4], strides = [1, 1, 1, 1]} : vector<3x10x8x4xf32> to vector<3x1x8x4xf32>
    %2 = vector.shape_cast %1 : vector<3x1x8x4xf32> to vector<3x8x4xf32>
    %3 = vector.extract_strided_slice %0 {offsets = [0, 1, 0, 0], sizes = [3, 1, 8, 4], strides = [1, 1, 1, 1]} : vector<3x10x8x4xf32> to vector<3x1x8x4xf32>
    %4 = vector.shape_cast %3 : vector<3x1x8x4xf32> to vector<3x8x4xf32>
    %5 = arith.addf %2, %4 : vector<3x8x4xf32>
    %6 = vector.extract_strided_slice %0 {offsets = [0, 2, 0, 0], sizes = [3, 1, 8, 4], strides = [1, 1, 1, 1]} : vector<3x10x8x4xf32> to vector<3x1x8x4xf32>
    %7 = vector.shape_cast %6 : vector<3x1x8x4xf32> to vector<3x8x4xf32>
    %8 = arith.addf %5, %7 : vector<3x8x4xf32>
    %9 = vector.extract_strided_slice %0 {offsets = [0, 3, 0, 0], sizes = [3, 1, 8, 4], strides = [1, 1, 1, 1]} : vector<3x10x8x4xf32> to vector<3x1x8x4xf32>
    %10 = vector.shape_cast %9 : vector<3x1x8x4xf32> to vector<3x8x4xf32>
    %11 = arith.addf %8, %10 : vector<3x8x4xf32>
    %12 = vector.extract_strided_slice %0 {offsets = [0, 4, 0, 0], sizes = [3, 1, 8, 4], strides = [1, 1, 1, 1]} : vector<3x10x8x4xf32> to vector<3x1x8x4xf32>
    %13 = vector.shape_cast %12 : vector<3x1x8x4xf32> to vector<3x8x4xf32>
    %14 = arith.addf %11, %13 : vector<3x8x4xf32>
    %15 = vector.extract_strided_slice %0 {offsets = [0, 5, 0, 0], sizes = [3, 1, 8, 4], strides = [1, 1, 1, 1]} : vector<3x10x8x4xf32> to vector<3x1x8x4xf32>
    %16 = vector.shape_cast %15 : vector<3x1x8x4xf32> to vector<3x8x4xf32>
    %17 = arith.addf %14, %16 : vector<3x8x4xf32>
    %18 = vector.extract_strided_slice %0 {offsets = [0, 6, 0, 0], sizes = [3, 1, 8, 4], strides = [1, 1, 1, 1]} : vector<3x10x8x4xf32> to vector<3x1x8x4xf32>
    %19 = vector.shape_cast %18 : vector<3x1x8x4xf32> to vector<3x8x4xf32>
    %20 = arith.addf %17, %19 : vector<3x8x4xf32>
    %21 = vector.extract_strided_slice %0 {offsets = [0, 7, 0, 0], sizes = [3, 1, 8, 4], strides = [1, 1, 1, 1]} : vector<3x10x8x4xf32> to vector<3x1x8x4xf32>
    %22 = vector.shape_cast %21 : vector<3x1x8x4xf32> to vector<3x8x4xf32>
    %23 = arith.addf %20, %22 : vector<3x8x4xf32>
    %24 = vector.extract_strided_slice %0 {offsets = [0, 8, 0, 0], sizes = [3, 1, 8, 4], strides = [1, 1, 1, 1]} : vector<3x10x8x4xf32> to vector<3x1x8x4xf32>
    %25 = vector.shape_cast %24 : vector<3x1x8x4xf32> to vector<3x8x4xf32>
    %26 = arith.addf %23, %25 : vector<3x8x4xf32>
    %27 = vector.extract_strided_slice %0 {offsets = [0, 9, 0, 0], sizes = [3, 1, 8, 4], strides = [1, 1, 1, 1]} : vector<3x10x8x4xf32> to vector<3x1x8x4xf32>
    %28 = vector.shape_cast %27 : vector<3x1x8x4xf32> to vector<3x8x4xf32>
    %29 = arith.addf %26, %28 : vector<3x8x4xf32>
    %cst = arith.constant 1.000000e-01 : f32
    %30 = vector.broadcast %cst : f32 to vector<3x8x4xf32>
    %31 = arith.mulf %29, %30 : vector<3x8x4xf32>
    %32 = vector.shape_cast %31 : vector<3x8x4xf32> to vector<3x1x8x4xf32>
    %33 = vector.broadcast %32 : vector<3x1x8x4xf32> to vector<3x10x8x4xf32>
    %34 = arith.subf %0, %33 : vector<3x10x8x4xf32>
    %35 = arith.mulf %34, %34 : vector<3x10x8x4xf32>
    %36 = vector.extract_strided_slice %35 {offsets = [0, 0, 0, 0], sizes = [3, 1, 8, 4], strides = [1, 1, 1, 1]} : vector<3x10x8x4xf32> to vector<3x1x8x4xf32>
    %37 = vector.shape_cast %36 : vector<3x1x8x4xf32> to vector<3x8x4xf32>
    %38 = vector.extract_strided_slice %35 {offsets = [0, 1, 0, 0], sizes = [3, 1, 8, 4], strides = [1, 1, 1, 1]} : vector<3x10x8x4xf32> to vector<3x1x8x4xf32>
    %39 = vector.shape_cast %38 : vector<3x1x8x4xf32> to vector<3x8x4xf32>
    %40 = arith.addf %37, %39 : vector<3x8x4xf32>
    %41 = vector.extract_strided_slice %35 {offsets = [0, 2, 0, 0], sizes = [3, 1, 8, 4], strides = [1, 1, 1, 1]} : vector<3x10x8x4xf32> to vector<3x1x8x4xf32>
    %42 = vector.shape_cast %41 : vector<3x1x8x4xf32> to vector<3x8x4xf32>
    %43 = arith.addf %40, %42 : vector<3x8x4xf32>
    %44 = vector.extract_strided_slice %35 {offsets = [0, 3, 0, 0], sizes = [3, 1, 8, 4], strides = [1, 1, 1, 1]} : vector<3x10x8x4xf32> to vector<3x1x8x4xf32>
    %45 = vector.shape_cast %44 : vector<3x1x8x4xf32> to vector<3x8x4xf32>
    %46 = arith.addf %43, %45 : vector<3x8x4xf32>
    %47 = vector.extract_strided_slice %35 {offsets = [0, 4, 0, 0], sizes = [3, 1, 8, 4], strides = [1, 1, 1, 1]} : vector<3x10x8x4xf32> to vector<3x1x8x4xf32>
    %48 = vector.shape_cast %47 : vector<3x1x8x4xf32> to vector<3x8x4xf32>
    %49 = arith.addf %46, %48 : vector<3x8x4xf32>
    %50 = vector.extract_strided_slice %35 {offsets = [0, 5, 0, 0], sizes = [3, 1, 8, 4], strides = [1, 1, 1, 1]} : vector<3x10x8x4xf32> to vector<3x1x8x4xf32>
    %51 = vector.shape_cast %50 : vector<3x1x8x4xf32> to vector<3x8x4xf32>
    %52 = arith.addf %49, %51 : vector<3x8x4xf32>
    %53 = vector.extract_strided_slice %35 {offsets = [0, 6, 0, 0], sizes = [3, 1, 8, 4], strides = [1, 1, 1, 1]} : vector<3x10x8x4xf32> to vector<3x1x8x4xf32>
    %54 = vector.shape_cast %53 : vector<3x1x8x4xf32> to vector<3x8x4xf32>
    %55 = arith.addf %52, %54 : vector<3x8x4xf32>
    %56 = vector.extract_strided_slice %35 {offsets = [0, 7, 0, 0], sizes = [3, 1, 8, 4], strides = [1, 1, 1, 1]} : vector<3x10x8x4xf32> to vector<3x1x8x4xf32>
    %57 = vector.shape_cast %56 : vector<3x1x8x4xf32> to vector<3x8x4xf32>
    %58 = arith.addf %55, %57 : vector<3x8x4xf32>
    %59 = vector.extract_strided_slice %35 {offsets = [0, 8, 0, 0], sizes = [3, 1, 8, 4], strides = [1, 1, 1, 1]} : vector<3x10x8x4xf32> to vector<3x1x8x4xf32>
    %60 = vector.shape_cast %59 : vector<3x1x8x4xf32> to vector<3x8x4xf32>
    %61 = arith.addf %58, %60 : vector<3x8x4xf32>
    %62 = vector.extract_strided_slice %35 {offsets = [0, 9, 0, 0], sizes = [3, 1, 8, 4], strides = [1, 1, 1, 1]} : vector<3x10x8x4xf32> to vector<3x1x8x4xf32>
    %63 = vector.shape_cast %62 : vector<3x1x8x4xf32> to vector<3x8x4xf32>
    %64 = arith.addf %61, %63 : vector<3x8x4xf32>
    %cst_3 = arith.constant 0.111111112 : f32
    %65 = vector.broadcast %cst_3 : f32 to vector<3x8x4xf32>
    %66 = arith.mulf %64, %65 : vector<3x8x4xf32>
    %67 = math.sqrt %66 : vector<3x8x4xf32>
    %68 = arith.divf %31, %67 : vector<3x8x4xf32>
    %69 = vector.extract_strided_slice %0 {offsets = [0, 9, 0, 0], sizes = [3, 1, 8, 4], strides = [1, 1, 1, 1]} : vector<3x10x8x4xf32> to vector<3x1x8x4xf32>
    %70 = vector.shape_cast %69 : vector<3x1x8x4xf32> to vector<3x8x4xf32>
    %71 = vector.extract_strided_slice %0 {offsets = [0, 0, 0, 0], sizes = [3, 1, 8, 4], strides = [1, 1, 1, 1]} : vector<3x10x8x4xf32> to vector<3x1x8x4xf32>
    %72 = vector.shape_cast %71 : vector<3x1x8x4xf32> to vector<3x8x4xf32>
    %73 = arith.divf %70, %72 : vector<3x8x4xf32>
    %cst_4 = arith.constant 1.000000e+00 : f32
    %74 = vector.broadcast %cst_4 : f32 to vector<3x8x4xf32>
    %75 = arith.subf %73, %74 : vector<3x8x4xf32>
    %76 = vector.extract_strided_slice %0 {offsets = [0, 0, 0, 0], sizes = [3, 1, 8, 4], strides = [1, 1, 1, 1]} : vector<3x10x8x4xf32> to vector<3x1x8x4xf32>
    %77 = vector.shape_cast %76 : vector<3x1x8x4xf32> to vector<3x8x4xf32>
    %cst_5 = arith.constant 0.0181818176 : f32
    %78 = vector.broadcast %cst_5 : f32 to vector<3x8x4xf32>
    %79 = arith.mulf %77, %78 : vector<3x8x4xf32>
    %80 = vector.extract_strided_slice %0 {offsets = [0, 1, 0, 0], sizes = [3, 1, 8, 4], strides = [1, 1, 1, 1]} : vector<3x10x8x4xf32> to vector<3x1x8x4xf32>
    %81 = vector.shape_cast %80 : vector<3x1x8x4xf32> to vector<3x8x4xf32>
    %cst_6 = arith.constant 0.0363636352 : f32
    %82 = vector.broadcast %cst_6 : f32 to vector<3x8x4xf32>
    %83 = arith.mulf %81, %82 : vector<3x8x4xf32>
    %84 = arith.addf %79, %83 : vector<3x8x4xf32>
    %85 = vector.extract_strided_slice %0 {offsets = [0, 2, 0, 0], sizes = [3, 1, 8, 4], strides = [1, 1, 1, 1]} : vector<3x10x8x4xf32> to vector<3x1x8x4xf32>
    %86 = vector.shape_cast %85 : vector<3x1x8x4xf32> to vector<3x8x4xf32>
    %cst_7 = arith.constant 0.0545454547 : f32
    %87 = vector.broadcast %cst_7 : f32 to vector<3x8x4xf32>
    %88 = arith.mulf %86, %87 : vector<3x8x4xf32>
    %89 = arith.addf %84, %88 : vector<3x8x4xf32>
    %90 = vector.extract_strided_slice %0 {offsets = [0, 3, 0, 0], sizes = [3, 1, 8, 4], strides = [1, 1, 1, 1]} : vector<3x10x8x4xf32> to vector<3x1x8x4xf32>
    %91 = vector.shape_cast %90 : vector<3x1x8x4xf32> to vector<3x8x4xf32>
    %cst_8 = arith.constant 0.0727272704 : f32
    %92 = vector.broadcast %cst_8 : f32 to vector<3x8x4xf32>
    %93 = arith.mulf %91, %92 : vector<3x8x4xf32>
    %94 = arith.addf %89, %93 : vector<3x8x4xf32>
    %95 = vector.extract_strided_slice %0 {offsets = [0, 4, 0, 0], sizes = [3, 1, 8, 4], strides = [1, 1, 1, 1]} : vector<3x10x8x4xf32> to vector<3x1x8x4xf32>
    %96 = vector.shape_cast %95 : vector<3x1x8x4xf32> to vector<3x8x4xf32>
    %cst_9 = arith.constant 0.0909090936 : f32
    %97 = vector.broadcast %cst_9 : f32 to vector<3x8x4xf32>
    %98 = arith.mulf %96, %97 : vector<3x8x4xf32>
    %99 = arith.addf %94, %98 : vector<3x8x4xf32>
    %100 = vector.extract_strided_slice %0 {offsets = [0, 5, 0, 0], sizes = [3, 1, 8, 4], strides = [1, 1, 1, 1]} : vector<3x10x8x4xf32> to vector<3x1x8x4xf32>
    %101 = vector.shape_cast %100 : vector<3x1x8x4xf32> to vector<3x8x4xf32>
    %cst_10 = arith.constant 0.109090909 : f32
    %102 = vector.broadcast %cst_10 : f32 to vector<3x8x4xf32>
    %103 = arith.mulf %101, %102 : vector<3x8x4xf32>
    %104 = arith.addf %99, %103 : vector<3x8x4xf32>
    %105 = vector.extract_strided_slice %0 {offsets = [0, 6, 0, 0], sizes = [3, 1, 8, 4], strides = [1, 1, 1, 1]} : vector<3x10x8x4xf32> to vector<3x1x8x4xf32>
    %106 = vector.shape_cast %105 : vector<3x1x8x4xf32> to vector<3x8x4xf32>
    %cst_11 = arith.constant 0.127272725 : f32
    %107 = vector.broadcast %cst_11 : f32 to vector<3x8x4xf32>
    %108 = arith.mulf %106, %107 : vector<3x8x4xf32>
    %109 = arith.addf %104, %108 : vector<3x8x4xf32>
    %110 = vector.extract_strided_slice %0 {offsets = [0, 7, 0, 0], sizes = [3, 1, 8, 4], strides = [1, 1, 1, 1]} : vector<3x10x8x4xf32> to vector<3x1x8x4xf32>
    %111 = vector.shape_cast %110 : vector<3x1x8x4xf32> to vector<3x8x4xf32>
    %cst_12 = arith.constant 0.145454541 : f32
    %112 = vector.broadcast %cst_12 : f32 to vector<3x8x4xf32>
    %113 = arith.mulf %111, %112 : vector<3x8x4xf32>
    %114 = arith.addf %109, %113 : vector<3x8x4xf32>
    %115 = vector.extract_strided_slice %0 {offsets = [0, 8, 0, 0], sizes = [3, 1, 8, 4], strides = [1, 1, 1, 1]} : vector<3x10x8x4xf32> to vector<3x1x8x4xf32>
    %116 = vector.shape_cast %115 : vector<3x1x8x4xf32> to vector<3x8x4xf32>
    %cst_13 = arith.constant 0.163636357 : f32
    %117 = vector.broadcast %cst_13 : f32 to vector<3x8x4xf32>
    %118 = arith.mulf %116, %117 : vector<3x8x4xf32>
    %119 = arith.addf %114, %118 : vector<3x8x4xf32>
    %120 = vector.extract_strided_slice %0 {offsets = [0, 9, 0, 0], sizes = [3, 1, 8, 4], strides = [1, 1, 1, 1]} : vector<3x10x8x4xf32> to vector<3x1x8x4xf32>
    %121 = vector.shape_cast %120 : vector<3x1x8x4xf32> to vector<3x8x4xf32>
    %cst_14 = arith.constant 0.181818187 : f32
    %122 = vector.broadcast %cst_14 : f32 to vector<3x8x4xf32>
    %123 = arith.mulf %121, %122 : vector<3x8x4xf32>
    %124 = arith.addf %119, %123 : vector<3x8x4xf32>
    %125 = vector.extract_strided_slice %34 {offsets = [0, 0, 0, 0], sizes = [3, 10, 8, 1], strides = [1, 1, 1, 1]} : vector<3x10x8x4xf32> to vector<3x10x8x1xf32>
    %126 = vector.extract_strided_slice %34 {offsets = [0, 0, 0, 1], sizes = [3, 10, 8, 3], strides = [1, 1, 1, 1]} : vector<3x10x8x4xf32> to vector<3x10x8x3xf32>
    %127 = vector.broadcast %125 : vector<3x10x8x1xf32> to vector<3x10x8x3xf32>
    %128 = arith.mulf %127, %126 : vector<3x10x8x3xf32>
    %129 = vector.extract_strided_slice %128 {offsets = [0, 0, 0, 0], sizes = [3, 1, 8, 3], strides = [1, 1, 1, 1]} : vector<3x10x8x3xf32> to vector<3x1x8x3xf32>
    %130 = vector.shape_cast %129 : vector<3x1x8x3xf32> to vector<3x8x3xf32>
    %131 = vector.extract_strided_slice %128 {offsets = [0, 1, 0, 0], sizes = [3, 1, 8, 3], strides = [1, 1, 1, 1]} : vector<3x10x8x3xf32> to vector<3x1x8x3xf32>
    %132 = vector.shape_cast %131 : vector<3x1x8x3xf32> to vector<3x8x3xf32>
    %133 = arith.addf %130, %132 : vector<3x8x3xf32>
    %134 = vector.extract_strided_slice %128 {offsets = [0, 2, 0, 0], sizes = [3, 1, 8, 3], strides = [1, 1, 1, 1]} : vector<3x10x8x3xf32> to vector<3x1x8x3xf32>
    %135 = vector.shape_cast %134 : vector<3x1x8x3xf32> to vector<3x8x3xf32>
    %136 = arith.addf %133, %135 : vector<3x8x3xf32>
    %137 = vector.extract_strided_slice %128 {offsets = [0, 3, 0, 0], sizes = [3, 1, 8, 3], strides = [1, 1, 1, 1]} : vector<3x10x8x3xf32> to vector<3x1x8x3xf32>
    %138 = vector.shape_cast %137 : vector<3x1x8x3xf32> to vector<3x8x3xf32>
    %139 = arith.addf %136, %138 : vector<3x8x3xf32>
    %140 = vector.extract_strided_slice %128 {offsets = [0, 4, 0, 0], sizes = [3, 1, 8, 3], strides = [1, 1, 1, 1]} : vector<3x10x8x3xf32> to vector<3x1x8x3xf32>
    %141 = vector.shape_cast %140 : vector<3x1x8x3xf32> to vector<3x8x3xf32>
    %142 = arith.addf %139, %141 : vector<3x8x3xf32>
    %143 = vector.extract_strided_slice %128 {offsets = [0, 5, 0, 0], sizes = [3, 1, 8, 3], strides = [1, 1, 1, 1]} : vector<3x10x8x3xf32> to vector<3x1x8x3xf32>
    %144 = vector.shape_cast %143 : vector<3x1x8x3xf32> to vector<3x8x3xf32>
    %145 = arith.addf %142, %144 : vector<3x8x3xf32>
    %146 = vector.extract_strided_slice %128 {offsets = [0, 6, 0, 0], sizes = [3, 1, 8, 3], strides = [1, 1, 1, 1]} : vector<3x10x8x3xf32> to vector<3x1x8x3xf32>
    %147 = vector.shape_cast %146 : vector<3x1x8x3xf32> to vector<3x8x3xf32>
    %148 = arith.addf %145, %147 : vector<3x8x3xf32>
    %149 = vector.extract_strided_slice %128 {offsets = [0, 7, 0, 0], sizes = [3, 1, 8, 3], strides = [1, 1, 1, 1]} : vector<3x10x8x3xf32> to vector<3x1x8x3xf32>
    %150 = vector.shape_cast %149 : vector<3x1x8x3xf32> to vector<3x8x3xf32>
    %151 = arith.addf %148, %150 : vector<3x8x3xf32>
    %152 = vector.extract_strided_slice %128 {offsets = [0, 8, 0, 0], sizes = [3, 1, 8, 3], strides = [1, 1, 1, 1]} : vector<3x10x8x3xf32> to vector<3x1x8x3xf32>
    %153 = vector.shape_cast %152 : vector<3x1x8x3xf32> to vector<3x8x3xf32>
    %154 = arith.addf %151, %153 : vector<3x8x3xf32>
    %155 = vector.extract_strided_slice %128 {offsets = [0, 9, 0, 0], sizes = [3, 1, 8, 3], strides = [1, 1, 1, 1]} : vector<3x10x8x3xf32> to vector<3x1x8x3xf32>
    %156 = vector.shape_cast %155 : vector<3x1x8x3xf32> to vector<3x8x3xf32>
    %157 = arith.addf %154, %156 : vector<3x8x3xf32>
    %cst_15 = arith.constant 0.111111112 : f32
    %158 = vector.broadcast %cst_15 : f32 to vector<3x8x3xf32>
    %159 = arith.mulf %157, %158 : vector<3x8x3xf32>
    %160 = vector.extract_strided_slice %67 {offsets = [0, 0, 0], sizes = [3, 8, 1], strides = [1, 1, 1]} : vector<3x8x4xf32> to vector<3x8x1xf32>
    %161 = vector.extract_strided_slice %67 {offsets = [0, 0, 1], sizes = [3, 8, 3], strides = [1, 1, 1]} : vector<3x8x4xf32> to vector<3x8x3xf32>
    %162 = vector.broadcast %160 : vector<3x8x1xf32> to vector<3x8x3xf32>
    %163 = arith.mulf %162, %161 : vector<3x8x3xf32>
    %164 = arith.divf %159, %163 : vector<3x8x3xf32>
    %165 = vector.extract_strided_slice %34 {offsets = [0, 0, 0, 1], sizes = [3, 10, 8, 1], strides = [1, 1, 1, 1]} : vector<3x10x8x4xf32> to vector<3x10x8x1xf32>
    %166 = vector.extract_strided_slice %34 {offsets = [0, 0, 0, 2], sizes = [3, 10, 8, 2], strides = [1, 1, 1, 1]} : vector<3x10x8x4xf32> to vector<3x10x8x2xf32>
    %167 = vector.broadcast %165 : vector<3x10x8x1xf32> to vector<3x10x8x2xf32>
    %168 = arith.mulf %167, %166 : vector<3x10x8x2xf32>
    %169 = vector.extract_strided_slice %168 {offsets = [0, 0, 0, 0], sizes = [3, 1, 8, 2], strides = [1, 1, 1, 1]} : vector<3x10x8x2xf32> to vector<3x1x8x2xf32>
    %170 = vector.shape_cast %169 : vector<3x1x8x2xf32> to vector<3x8x2xf32>
    %171 = vector.extract_strided_slice %168 {offsets = [0, 1, 0, 0], sizes = [3, 1, 8, 2], strides = [1, 1, 1, 1]} : vector<3x10x8x2xf32> to vector<3x1x8x2xf32>
    %172 = vector.shape_cast %171 : vector<3x1x8x2xf32> to vector<3x8x2xf32>
    %173 = arith.addf %170, %172 : vector<3x8x2xf32>
    %174 = vector.extract_strided_slice %168 {offsets = [0, 2, 0, 0], sizes = [3, 1, 8, 2], strides = [1, 1, 1, 1]} : vector<3x10x8x2xf32> to vector<3x1x8x2xf32>
    %175 = vector.shape_cast %174 : vector<3x1x8x2xf32> to vector<3x8x2xf32>
    %176 = arith.addf %173, %175 : vector<3x8x2xf32>
    %177 = vector.extract_strided_slice %168 {offsets = [0, 3, 0, 0], sizes = [3, 1, 8, 2], strides = [1, 1, 1, 1]} : vector<3x10x8x2xf32> to vector<3x1x8x2xf32>
    %178 = vector.shape_cast %177 : vector<3x1x8x2xf32> to vector<3x8x2xf32>
    %179 = arith.addf %176, %178 : vector<3x8x2xf32>
    %180 = vector.extract_strided_slice %168 {offsets = [0, 4, 0, 0], sizes = [3, 1, 8, 2], strides = [1, 1, 1, 1]} : vector<3x10x8x2xf32> to vector<3x1x8x2xf32>
    %181 = vector.shape_cast %180 : vector<3x1x8x2xf32> to vector<3x8x2xf32>
    %182 = arith.addf %179, %181 : vector<3x8x2xf32>
    %183 = vector.extract_strided_slice %168 {offsets = [0, 5, 0, 0], sizes = [3, 1, 8, 2], strides = [1, 1, 1, 1]} : vector<3x10x8x2xf32> to vector<3x1x8x2xf32>
    %184 = vector.shape_cast %183 : vector<3x1x8x2xf32> to vector<3x8x2xf32>
    %185 = arith.addf %182, %184 : vector<3x8x2xf32>
    %186 = vector.extract_strided_slice %168 {offsets = [0, 6, 0, 0], sizes = [3, 1, 8, 2], strides = [1, 1, 1, 1]} : vector<3x10x8x2xf32> to vector<3x1x8x2xf32>
    %187 = vector.shape_cast %186 : vector<3x1x8x2xf32> to vector<3x8x2xf32>
    %188 = arith.addf %185, %187 : vector<3x8x2xf32>
    %189 = vector.extract_strided_slice %168 {offsets = [0, 7, 0, 0], sizes = [3, 1, 8, 2], strides = [1, 1, 1, 1]} : vector<3x10x8x2xf32> to vector<3x1x8x2xf32>
    %190 = vector.shape_cast %189 : vector<3x1x8x2xf32> to vector<3x8x2xf32>
    %191 = arith.addf %188, %190 : vector<3x8x2xf32>
    %192 = vector.extract_strided_slice %168 {offsets = [0, 8, 0, 0], sizes = [3, 1, 8, 2], strides = [1, 1, 1, 1]} : vector<3x10x8x2xf32> to vector<3x1x8x2xf32>
    %193 = vector.shape_cast %192 : vector<3x1x8x2xf32> to vector<3x8x2xf32>
    %194 = arith.addf %191, %193 : vector<3x8x2xf32>
    %195 = vector.extract_strided_slice %168 {offsets = [0, 9, 0, 0], sizes = [3, 1, 8, 2], strides = [1, 1, 1, 1]} : vector<3x10x8x2xf32> to vector<3x1x8x2xf32>
    %196 = vector.shape_cast %195 : vector<3x1x8x2xf32> to vector<3x8x2xf32>
    %197 = arith.addf %194, %196 : vector<3x8x2xf32>
    %cst_16 = arith.constant 0.111111112 : f32
    %198 = vector.broadcast %cst_16 : f32 to vector<3x8x2xf32>
    %199 = arith.mulf %197, %198 : vector<3x8x2xf32>
    %200 = vector.extract_strided_slice %67 {offsets = [0, 0, 1], sizes = [3, 8, 1], strides = [1, 1, 1]} : vector<3x8x4xf32> to vector<3x8x1xf32>
    %201 = vector.extract_strided_slice %67 {offsets = [0, 0, 2], sizes = [3, 8, 2], strides = [1, 1, 1]} : vector<3x8x4xf32> to vector<3x8x2xf32>
    %202 = vector.broadcast %200 : vector<3x8x1xf32> to vector<3x8x2xf32>
    %203 = arith.mulf %202, %201 : vector<3x8x2xf32>
    %204 = arith.divf %199, %203 : vector<3x8x2xf32>
    %205 = vector.extract_strided_slice %34 {offsets = [0, 0, 0, 2], sizes = [3, 10, 8, 1], strides = [1, 1, 1, 1]} : vector<3x10x8x4xf32> to vector<3x10x8x1xf32>
    %206 = vector.extract_strided_slice %34 {offsets = [0, 0, 0, 3], sizes = [3, 10, 8, 1], strides = [1, 1, 1, 1]} : vector<3x10x8x4xf32> to vector<3x10x8x1xf32>
    %207 = arith.mulf %205, %206 : vector<3x10x8x1xf32>
    %208 = vector.extract_strided_slice %207 {offsets = [0, 0, 0, 0], sizes = [3, 1, 8, 1], strides = [1, 1, 1, 1]} : vector<3x10x8x1xf32> to vector<3x1x8x1xf32>
    %209 = vector.shape_cast %208 : vector<3x1x8x1xf32> to vector<3x8x1xf32>
    %210 = vector.extract_strided_slice %207 {offsets = [0, 1, 0, 0], sizes = [3, 1, 8, 1], strides = [1, 1, 1, 1]} : vector<3x10x8x1xf32> to vector<3x1x8x1xf32>
    %211 = vector.shape_cast %210 : vector<3x1x8x1xf32> to vector<3x8x1xf32>
    %212 = arith.addf %209, %211 : vector<3x8x1xf32>
    %213 = vector.extract_strided_slice %207 {offsets = [0, 2, 0, 0], sizes = [3, 1, 8, 1], strides = [1, 1, 1, 1]} : vector<3x10x8x1xf32> to vector<3x1x8x1xf32>
    %214 = vector.shape_cast %213 : vector<3x1x8x1xf32> to vector<3x8x1xf32>
    %215 = arith.addf %212, %214 : vector<3x8x1xf32>
    %216 = vector.extract_strided_slice %207 {offsets = [0, 3, 0, 0], sizes = [3, 1, 8, 1], strides = [1, 1, 1, 1]} : vector<3x10x8x1xf32> to vector<3x1x8x1xf32>
    %217 = vector.shape_cast %216 : vector<3x1x8x1xf32> to vector<3x8x1xf32>
    %218 = arith.addf %215, %217 : vector<3x8x1xf32>
    %219 = vector.extract_strided_slice %207 {offsets = [0, 4, 0, 0], sizes = [3, 1, 8, 1], strides = [1, 1, 1, 1]} : vector<3x10x8x1xf32> to vector<3x1x8x1xf32>
    %220 = vector.shape_cast %219 : vector<3x1x8x1xf32> to vector<3x8x1xf32>
    %221 = arith.addf %218, %220 : vector<3x8x1xf32>
    %222 = vector.extract_strided_slice %207 {offsets = [0, 5, 0, 0], sizes = [3, 1, 8, 1], strides = [1, 1, 1, 1]} : vector<3x10x8x1xf32> to vector<3x1x8x1xf32>
    %223 = vector.shape_cast %222 : vector<3x1x8x1xf32> to vector<3x8x1xf32>
    %224 = arith.addf %221, %223 : vector<3x8x1xf32>
    %225 = vector.extract_strided_slice %207 {offsets = [0, 6, 0, 0], sizes = [3, 1, 8, 1], strides = [1, 1, 1, 1]} : vector<3x10x8x1xf32> to vector<3x1x8x1xf32>
    %226 = vector.shape_cast %225 : vector<3x1x8x1xf32> to vector<3x8x1xf32>
    %227 = arith.addf %224, %226 : vector<3x8x1xf32>
    %228 = vector.extract_strided_slice %207 {offsets = [0, 7, 0, 0], sizes = [3, 1, 8, 1], strides = [1, 1, 1, 1]} : vector<3x10x8x1xf32> to vector<3x1x8x1xf32>
    %229 = vector.shape_cast %228 : vector<3x1x8x1xf32> to vector<3x8x1xf32>
    %230 = arith.addf %227, %229 : vector<3x8x1xf32>
    %231 = vector.extract_strided_slice %207 {offsets = [0, 8, 0, 0], sizes = [3, 1, 8, 1], strides = [1, 1, 1, 1]} : vector<3x10x8x1xf32> to vector<3x1x8x1xf32>
    %232 = vector.shape_cast %231 : vector<3x1x8x1xf32> to vector<3x8x1xf32>
    %233 = arith.addf %230, %232 : vector<3x8x1xf32>
    %234 = vector.extract_strided_slice %207 {offsets = [0, 9, 0, 0], sizes = [3, 1, 8, 1], strides = [1, 1, 1, 1]} : vector<3x10x8x1xf32> to vector<3x1x8x1xf32>
    %235 = vector.shape_cast %234 : vector<3x1x8x1xf32> to vector<3x8x1xf32>
    %236 = arith.addf %233, %235 : vector<3x8x1xf32>
    %cst_17 = arith.constant 0.111111112 : f32
    %237 = vector.broadcast %cst_17 : f32 to vector<3x8x1xf32>
    %238 = arith.mulf %236, %237 : vector<3x8x1xf32>
    %239 = vector.extract_strided_slice %67 {offsets = [0, 0, 2], sizes = [3, 8, 1], strides = [1, 1, 1]} : vector<3x8x4xf32> to vector<3x8x1xf32>
    %240 = vector.extract_strided_slice %67 {offsets = [0, 0, 3], sizes = [3, 8, 1], strides = [1, 1, 1]} : vector<3x8x4xf32> to vector<3x8x1xf32>
    %241 = arith.mulf %239, %240 : vector<3x8x1xf32>
    %242 = arith.divf %238, %241 : vector<3x8x1xf32>
    %243 = tpu.concatenate %159, %199, %238 in 2 : vector<3x8x3xf32>, vector<3x8x2xf32>, vector<3x8x1xf32> -> vector<3x8x6xf32>
    %244 = tpu.concatenate %164, %204, %242 in 2 : vector<3x8x3xf32>, vector<3x8x2xf32>, vector<3x8x1xf32> -> vector<3x8x6xf32>
    %c0_18 = arith.constant 0 : index
    %c0_19 = arith.constant 0 : index
    %c0_20 = arith.constant 0 : index
    %245 = vector.load %arg2[%c0_18, %c0_19, %c0_20] : memref<7x3x1xf32, #tpu.memory_space<vmem>>, vector<1x3x1xf32>
    %246 = vector.shape_cast %245 : vector<1x3x1xf32> to vector<3x1xf32>
    %c0_21 = arith.constant 0 : index
    %c0_22 = arith.constant 0 : index
    %c0_23 = arith.constant 0 : index
    %247 = vector.load %arg3[%c0_21, %c0_22, %c0_23] : memref<7x3x1xf32, #tpu.memory_space<vmem>>, vector<1x3x1xf32>
    %248 = vector.shape_cast %247 : vector<1x3x1xf32> to vector<3x1xf32>
    %249 = vector.extract_strided_slice %244 {offsets = [0, 0, 0], sizes = [1, 8, 6], strides = [1, 1, 1]} : vector<3x8x6xf32> to vector<1x8x6xf32>
    %250 = vector.shape_cast %249 : vector<1x8x6xf32> to vector<8x6xf32>
    %251 = vector.extract_strided_slice %244 {offsets = [1, 0, 0], sizes = [1, 8, 6], strides = [1, 1, 1]} : vector<3x8x6xf32> to vector<1x8x6xf32>
    %252 = vector.shape_cast %251 : vector<1x8x6xf32> to vector<8x6xf32>
    %253 = arith.addf %250, %252 : vector<8x6xf32>
    %254 = vector.extract_strided_slice %244 {offsets = [2, 0, 0], sizes = [1, 8, 6], strides = [1, 1, 1]} : vector<3x8x6xf32> to vector<1x8x6xf32>
    %255 = vector.shape_cast %254 : vector<1x8x6xf32> to vector<8x6xf32>
    %256 = arith.addf %253, %255 : vector<8x6xf32>
    %cst_24 = arith.constant 0.333333343 : f32
    %257 = vector.broadcast %cst_24 : f32 to vector<8x6xf32>
    %258 = arith.mulf %256, %257 : vector<8x6xf32>
    %259 = vector.extract_strided_slice %244 {offsets = [0, 0, 0], sizes = [1, 8, 6], strides = [1, 1, 1]} : vector<3x8x6xf32> to vector<1x8x6xf32>
    %260 = vector.shape_cast %259 : vector<1x8x6xf32> to vector<8x6xf32>
    %261 = arith.subf %260, %258 : vector<8x6xf32>
    %262 = vector.extract_strided_slice %244 {offsets = [1, 0, 0], sizes = [1, 8, 6], strides = [1, 1, 1]} : vector<3x8x6xf32> to vector<1x8x6xf32>
    %263 = vector.shape_cast %262 : vector<1x8x6xf32> to vector<8x6xf32>
    %264 = arith.subf %263, %258 : vector<8x6xf32>
    %265 = vector.extract_strided_slice %244 {offsets = [2, 0, 0], sizes = [1, 8, 6], strides = [1, 1, 1]} : vector<3x8x6xf32> to vector<1x8x6xf32>
    %266 = vector.shape_cast %265 : vector<1x8x6xf32> to vector<8x6xf32>
    %267 = arith.subf %266, %258 : vector<8x6xf32>
    %268 = arith.mulf %261, %261 : vector<8x6xf32>
    %269 = arith.mulf %264, %264 : vector<8x6xf32>
    %270 = arith.addf %268, %269 : vector<8x6xf32>
    %271 = arith.mulf %267, %267 : vector<8x6xf32>
    %272 = arith.addf %270, %271 : vector<8x6xf32>
    %cst_25 = arith.constant 0.333333343 : f32
    %273 = vector.broadcast %cst_25 : f32 to vector<8x6xf32>
    %274 = arith.mulf %272, %273 : vector<8x6xf32>
    %cst_26 = arith.constant 9.99999974E-6 : f32
    %275 = vector.broadcast %cst_26 : f32 to vector<8x6xf32>
    %276 = arith.addf %274, %275 : vector<8x6xf32>
    %277 = math.rsqrt %276 : vector<8x6xf32>
    %278 = vector.shape_cast %258 : vector<8x6xf32> to vector<1x8x6xf32>
    %279 = vector.broadcast %278 : vector<1x8x6xf32> to vector<3x8x6xf32>
    %280 = arith.subf %244, %279 : vector<3x8x6xf32>
    %281 = vector.shape_cast %277 : vector<8x6xf32> to vector<1x8x6xf32>
    %282 = vector.broadcast %281 : vector<1x8x6xf32> to vector<3x8x6xf32>
    %283 = arith.mulf %280, %282 : vector<3x8x6xf32>
    %284 = vector.shape_cast %246 : vector<3x1xf32> to vector<3x1x1xf32>
    %285 = vector.broadcast %284 : vector<3x1x1xf32> to vector<3x8x6xf32>
    %286 = arith.mulf %283, %285 : vector<3x8x6xf32>
    %287 = vector.shape_cast %248 : vector<3x1xf32> to vector<3x1x1xf32>
    %288 = vector.broadcast %287 : vector<3x1x1xf32> to vector<3x8x6xf32>
    %289 = arith.addf %286, %288 : vector<3x8x6xf32>
    %c1 = arith.constant 1 : index
    %c0_27 = arith.constant 0 : index
    %c0_28 = arith.constant 0 : index
    %290 = vector.load %arg2[%c1, %c0_27, %c0_28] : memref<7x3x1xf32, #tpu.memory_space<vmem>>, vector<1x3x1xf32>
    %291 = vector.shape_cast %290 : vector<1x3x1xf32> to vector<3x1xf32>
    %c1_29 = arith.constant 1 : index
    %c0_30 = arith.constant 0 : index
    %c0_31 = arith.constant 0 : index
    %292 = vector.load %arg3[%c1_29, %c0_30, %c0_31] : memref<7x3x1xf32, #tpu.memory_space<vmem>>, vector<1x3x1xf32>
    %293 = vector.shape_cast %292 : vector<1x3x1xf32> to vector<3x1xf32>
    %294 = vector.extract_strided_slice %243 {offsets = [0, 0, 0], sizes = [1, 8, 6], strides = [1, 1, 1]} : vector<3x8x6xf32> to vector<1x8x6xf32>
    %295 = vector.shape_cast %294 : vector<1x8x6xf32> to vector<8x6xf32>
    %296 = vector.extract_strided_slice %243 {offsets = [1, 0, 0], sizes = [1, 8, 6], strides = [1, 1, 1]} : vector<3x8x6xf32> to vector<1x8x6xf32>
    %297 = vector.shape_cast %296 : vector<1x8x6xf32> to vector<8x6xf32>
    %298 = arith.addf %295, %297 : vector<8x6xf32>
    %299 = vector.extract_strided_slice %243 {offsets = [2, 0, 0], sizes = [1, 8, 6], strides = [1, 1, 1]} : vector<3x8x6xf32> to vector<1x8x6xf32>
    %300 = vector.shape_cast %299 : vector<1x8x6xf32> to vector<8x6xf32>
    %301 = arith.addf %298, %300 : vector<8x6xf32>
    %cst_32 = arith.constant 0.333333343 : f32
    %302 = vector.broadcast %cst_32 : f32 to vector<8x6xf32>
    %303 = arith.mulf %301, %302 : vector<8x6xf32>
    %304 = vector.extract_strided_slice %243 {offsets = [0, 0, 0], sizes = [1, 8, 6], strides = [1, 1, 1]} : vector<3x8x6xf32> to vector<1x8x6xf32>
    %305 = vector.shape_cast %304 : vector<1x8x6xf32> to vector<8x6xf32>
    %306 = arith.subf %305, %303 : vector<8x6xf32>
    %307 = vector.extract_strided_slice %243 {offsets = [1, 0, 0], sizes = [1, 8, 6], strides = [1, 1, 1]} : vector<3x8x6xf32> to vector<1x8x6xf32>
    %308 = vector.shape_cast %307 : vector<1x8x6xf32> to vector<8x6xf32>
    %309 = arith.subf %308, %303 : vector<8x6xf32>
    %310 = vector.extract_strided_slice %243 {offsets = [2, 0, 0], sizes = [1, 8, 6], strides = [1, 1, 1]} : vector<3x8x6xf32> to vector<1x8x6xf32>
    %311 = vector.shape_cast %310 : vector<1x8x6xf32> to vector<8x6xf32>
    %312 = arith.subf %311, %303 : vector<8x6xf32>
    %313 = arith.mulf %306, %306 : vector<8x6xf32>
    %314 = arith.mulf %309, %309 : vector<8x6xf32>
    %315 = arith.addf %313, %314 : vector<8x6xf32>
    %316 = arith.mulf %312, %312 : vector<8x6xf32>
    %317 = arith.addf %315, %316 : vector<8x6xf32>
    %cst_33 = arith.constant 0.333333343 : f32
    %318 = vector.broadcast %cst_33 : f32 to vector<8x6xf32>
    %319 = arith.mulf %317, %318 : vector<8x6xf32>
    %cst_34 = arith.constant 9.99999974E-6 : f32
    %320 = vector.broadcast %cst_34 : f32 to vector<8x6xf32>
    %321 = arith.addf %319, %320 : vector<8x6xf32>
    %322 = math.rsqrt %321 : vector<8x6xf32>
    %323 = vector.shape_cast %303 : vector<8x6xf32> to vector<1x8x6xf32>
    %324 = vector.broadcast %323 : vector<1x8x6xf32> to vector<3x8x6xf32>
    %325 = arith.subf %243, %324 : vector<3x8x6xf32>
    %326 = vector.shape_cast %322 : vector<8x6xf32> to vector<1x8x6xf32>
    %327 = vector.broadcast %326 : vector<1x8x6xf32> to vector<3x8x6xf32>
    %328 = arith.mulf %325, %327 : vector<3x8x6xf32>
    %329 = vector.shape_cast %291 : vector<3x1xf32> to vector<3x1x1xf32>
    %330 = vector.broadcast %329 : vector<3x1x1xf32> to vector<3x8x6xf32>
    %331 = arith.mulf %328, %330 : vector<3x8x6xf32>
    %332 = vector.shape_cast %293 : vector<3x1xf32> to vector<3x1x1xf32>
    %333 = vector.broadcast %332 : vector<3x1x1xf32> to vector<3x8x6xf32>
    %334 = arith.addf %331, %333 : vector<3x8x6xf32>
    %c2 = arith.constant 2 : index
    %c0_35 = arith.constant 0 : index
    %c0_36 = arith.constant 0 : index
    %335 = vector.load %arg2[%c2, %c0_35, %c0_36] : memref<7x3x1xf32, #tpu.memory_space<vmem>>, vector<1x3x1xf32>
    %336 = vector.shape_cast %335 : vector<1x3x1xf32> to vector<3x1xf32>
    %c2_37 = arith.constant 2 : index
    %c0_38 = arith.constant 0 : index
    %c0_39 = arith.constant 0 : index
    %337 = vector.load %arg3[%c2_37, %c0_38, %c0_39] : memref<7x3x1xf32, #tpu.memory_space<vmem>>, vector<1x3x1xf32>
    %338 = vector.shape_cast %337 : vector<1x3x1xf32> to vector<3x1xf32>
    %339 = vector.extract_strided_slice %67 {offsets = [0, 0, 0], sizes = [1, 8, 4], strides = [1, 1, 1]} : vector<3x8x4xf32> to vector<1x8x4xf32>
    %340 = vector.shape_cast %339 : vector<1x8x4xf32> to vector<8x4xf32>
    %341 = vector.extract_strided_slice %67 {offsets = [1, 0, 0], sizes = [1, 8, 4], strides = [1, 1, 1]} : vector<3x8x4xf32> to vector<1x8x4xf32>
    %342 = vector.shape_cast %341 : vector<1x8x4xf32> to vector<8x4xf32>
    %343 = arith.addf %340, %342 : vector<8x4xf32>
    %344 = vector.extract_strided_slice %67 {offsets = [2, 0, 0], sizes = [1, 8, 4], strides = [1, 1, 1]} : vector<3x8x4xf32> to vector<1x8x4xf32>
    %345 = vector.shape_cast %344 : vector<1x8x4xf32> to vector<8x4xf32>
    %346 = arith.addf %343, %345 : vector<8x4xf32>
    %cst_40 = arith.constant 0.333333343 : f32
    %347 = vector.broadcast %cst_40 : f32 to vector<8x4xf32>
    %348 = arith.mulf %346, %347 : vector<8x4xf32>
    %349 = vector.extract_strided_slice %67 {offsets = [0, 0, 0], sizes = [1, 8, 4], strides = [1, 1, 1]} : vector<3x8x4xf32> to vector<1x8x4xf32>
    %350 = vector.shape_cast %349 : vector<1x8x4xf32> to vector<8x4xf32>
    %351 = arith.subf %350, %348 : vector<8x4xf32>
    %352 = vector.extract_strided_slice %67 {offsets = [1, 0, 0], sizes = [1, 8, 4], strides = [1, 1, 1]} : vector<3x8x4xf32> to vector<1x8x4xf32>
    %353 = vector.shape_cast %352 : vector<1x8x4xf32> to vector<8x4xf32>
    %354 = arith.subf %353, %348 : vector<8x4xf32>
    %355 = vector.extract_strided_slice %67 {offsets = [2, 0, 0], sizes = [1, 8, 4], strides = [1, 1, 1]} : vector<3x8x4xf32> to vector<1x8x4xf32>
    %356 = vector.shape_cast %355 : vector<1x8x4xf32> to vector<8x4xf32>
    %357 = arith.subf %356, %348 : vector<8x4xf32>
    %358 = arith.mulf %351, %351 : vector<8x4xf32>
    %359 = arith.mulf %354, %354 : vector<8x4xf32>
    %360 = arith.addf %358, %359 : vector<8x4xf32>
    %361 = arith.mulf %357, %357 : vector<8x4xf32>
    %362 = arith.addf %360, %361 : vector<8x4xf32>
    %cst_41 = arith.constant 0.333333343 : f32
    %363 = vector.broadcast %cst_41 : f32 to vector<8x4xf32>
    %364 = arith.mulf %362, %363 : vector<8x4xf32>
    %cst_42 = arith.constant 9.99999974E-6 : f32
    %365 = vector.broadcast %cst_42 : f32 to vector<8x4xf32>
    %366 = arith.addf %364, %365 : vector<8x4xf32>
    %367 = math.rsqrt %366 : vector<8x4xf32>
    %368 = vector.shape_cast %348 : vector<8x4xf32> to vector<1x8x4xf32>
    %369 = vector.broadcast %368 : vector<1x8x4xf32> to vector<3x8x4xf32>
    %370 = arith.subf %67, %369 : vector<3x8x4xf32>
    %371 = vector.shape_cast %367 : vector<8x4xf32> to vector<1x8x4xf32>
    %372 = vector.broadcast %371 : vector<1x8x4xf32> to vector<3x8x4xf32>
    %373 = arith.mulf %370, %372 : vector<3x8x4xf32>
    %374 = vector.shape_cast %336 : vector<3x1xf32> to vector<3x1x1xf32>
    %375 = vector.broadcast %374 : vector<3x1x1xf32> to vector<3x8x4xf32>
    %376 = arith.mulf %373, %375 : vector<3x8x4xf32>
    %377 = vector.shape_cast %338 : vector<3x1xf32> to vector<3x1x1xf32>
    %378 = vector.broadcast %377 : vector<3x1x1xf32> to vector<3x8x4xf32>
    %379 = arith.addf %376, %378 : vector<3x8x4xf32>
    %c3 = arith.constant 3 : index
    %c0_43 = arith.constant 0 : index
    %c0_44 = arith.constant 0 : index
    %380 = vector.load %arg2[%c3, %c0_43, %c0_44] : memref<7x3x1xf32, #tpu.memory_space<vmem>>, vector<1x3x1xf32>
    %381 = vector.shape_cast %380 : vector<1x3x1xf32> to vector<3x1xf32>
    %c3_45 = arith.constant 3 : index
    %c0_46 = arith.constant 0 : index
    %c0_47 = arith.constant 0 : index
    %382 = vector.load %arg3[%c3_45, %c0_46, %c0_47] : memref<7x3x1xf32, #tpu.memory_space<vmem>>, vector<1x3x1xf32>
    %383 = vector.shape_cast %382 : vector<1x3x1xf32> to vector<3x1xf32>
    %384 = vector.extract_strided_slice %68 {offsets = [0, 0, 0], sizes = [1, 8, 4], strides = [1, 1, 1]} : vector<3x8x4xf32> to vector<1x8x4xf32>
    %385 = vector.shape_cast %384 : vector<1x8x4xf32> to vector<8x4xf32>
    %386 = vector.extract_strided_slice %68 {offsets = [1, 0, 0], sizes = [1, 8, 4], strides = [1, 1, 1]} : vector<3x8x4xf32> to vector<1x8x4xf32>
    %387 = vector.shape_cast %386 : vector<1x8x4xf32> to vector<8x4xf32>
    %388 = arith.addf %385, %387 : vector<8x4xf32>
    %389 = vector.extract_strided_slice %68 {offsets = [2, 0, 0], sizes = [1, 8, 4], strides = [1, 1, 1]} : vector<3x8x4xf32> to vector<1x8x4xf32>
    %390 = vector.shape_cast %389 : vector<1x8x4xf32> to vector<8x4xf32>
    %391 = arith.addf %388, %390 : vector<8x4xf32>
    %cst_48 = arith.constant 0.333333343 : f32
    %392 = vector.broadcast %cst_48 : f32 to vector<8x4xf32>
    %393 = arith.mulf %391, %392 : vector<8x4xf32>
    %394 = vector.extract_strided_slice %68 {offsets = [0, 0, 0], sizes = [1, 8, 4], strides = [1, 1, 1]} : vector<3x8x4xf32> to vector<1x8x4xf32>
    %395 = vector.shape_cast %394 : vector<1x8x4xf32> to vector<8x4xf32>
    %396 = arith.subf %395, %393 : vector<8x4xf32>
    %397 = vector.extract_strided_slice %68 {offsets = [1, 0, 0], sizes = [1, 8, 4], strides = [1, 1, 1]} : vector<3x8x4xf32> to vector<1x8x4xf32>
    %398 = vector.shape_cast %397 : vector<1x8x4xf32> to vector<8x4xf32>
    %399 = arith.subf %398, %393 : vector<8x4xf32>
    %400 = vector.extract_strided_slice %68 {offsets = [2, 0, 0], sizes = [1, 8, 4], strides = [1, 1, 1]} : vector<3x8x4xf32> to vector<1x8x4xf32>
    %401 = vector.shape_cast %400 : vector<1x8x4xf32> to vector<8x4xf32>
    %402 = arith.subf %401, %393 : vector<8x4xf32>
    %403 = arith.mulf %396, %396 : vector<8x4xf32>
    %404 = arith.mulf %399, %399 : vector<8x4xf32>
    %405 = arith.addf %403, %404 : vector<8x4xf32>
    %406 = arith.mulf %402, %402 : vector<8x4xf32>
    %407 = arith.addf %405, %406 : vector<8x4xf32>
    %cst_49 = arith.constant 0.333333343 : f32
    %408 = vector.broadcast %cst_49 : f32 to vector<8x4xf32>
    %409 = arith.mulf %407, %408 : vector<8x4xf32>
    %cst_50 = arith.constant 9.99999974E-6 : f32
    %410 = vector.broadcast %cst_50 : f32 to vector<8x4xf32>
    %411 = arith.addf %409, %410 : vector<8x4xf32>
    %412 = math.rsqrt %411 : vector<8x4xf32>
    %413 = vector.shape_cast %393 : vector<8x4xf32> to vector<1x8x4xf32>
    %414 = vector.broadcast %413 : vector<1x8x4xf32> to vector<3x8x4xf32>
    %415 = arith.subf %68, %414 : vector<3x8x4xf32>
    %416 = vector.shape_cast %412 : vector<8x4xf32> to vector<1x8x4xf32>
    %417 = vector.broadcast %416 : vector<1x8x4xf32> to vector<3x8x4xf32>
    %418 = arith.mulf %415, %417 : vector<3x8x4xf32>
    %419 = vector.shape_cast %381 : vector<3x1xf32> to vector<3x1x1xf32>
    %420 = vector.broadcast %419 : vector<3x1x1xf32> to vector<3x8x4xf32>
    %421 = arith.mulf %418, %420 : vector<3x8x4xf32>
    %422 = vector.shape_cast %383 : vector<3x1xf32> to vector<3x1x1xf32>
    %423 = vector.broadcast %422 : vector<3x1x1xf32> to vector<3x8x4xf32>
    %424 = arith.addf %421, %423 : vector<3x8x4xf32>
    %c4 = arith.constant 4 : index
    %c0_51 = arith.constant 0 : index
    %c0_52 = arith.constant 0 : index
    %425 = vector.load %arg2[%c4, %c0_51, %c0_52] : memref<7x3x1xf32, #tpu.memory_space<vmem>>, vector<1x3x1xf32>
    %426 = vector.shape_cast %425 : vector<1x3x1xf32> to vector<3x1xf32>
    %c4_53 = arith.constant 4 : index
    %c0_54 = arith.constant 0 : index
    %c0_55 = arith.constant 0 : index
    %427 = vector.load %arg3[%c4_53, %c0_54, %c0_55] : memref<7x3x1xf32, #tpu.memory_space<vmem>>, vector<1x3x1xf32>
    %428 = vector.shape_cast %427 : vector<1x3x1xf32> to vector<3x1xf32>
    %429 = vector.extract_strided_slice %75 {offsets = [0, 0, 0], sizes = [1, 8, 4], strides = [1, 1, 1]} : vector<3x8x4xf32> to vector<1x8x4xf32>
    %430 = vector.shape_cast %429 : vector<1x8x4xf32> to vector<8x4xf32>
    %431 = vector.extract_strided_slice %75 {offsets = [1, 0, 0], sizes = [1, 8, 4], strides = [1, 1, 1]} : vector<3x8x4xf32> to vector<1x8x4xf32>
    %432 = vector.shape_cast %431 : vector<1x8x4xf32> to vector<8x4xf32>
    %433 = arith.addf %430, %432 : vector<8x4xf32>
    %434 = vector.extract_strided_slice %75 {offsets = [2, 0, 0], sizes = [1, 8, 4], strides = [1, 1, 1]} : vector<3x8x4xf32> to vector<1x8x4xf32>
    %435 = vector.shape_cast %434 : vector<1x8x4xf32> to vector<8x4xf32>
    %436 = arith.addf %433, %435 : vector<8x4xf32>
    %cst_56 = arith.constant 0.333333343 : f32
    %437 = vector.broadcast %cst_56 : f32 to vector<8x4xf32>
    %438 = arith.mulf %436, %437 : vector<8x4xf32>
    %439 = vector.extract_strided_slice %75 {offsets = [0, 0, 0], sizes = [1, 8, 4], strides = [1, 1, 1]} : vector<3x8x4xf32> to vector<1x8x4xf32>
    %440 = vector.shape_cast %439 : vector<1x8x4xf32> to vector<8x4xf32>
    %441 = arith.subf %440, %438 : vector<8x4xf32>
    %442 = vector.extract_strided_slice %75 {offsets = [1, 0, 0], sizes = [1, 8, 4], strides = [1, 1, 1]} : vector<3x8x4xf32> to vector<1x8x4xf32>
    %443 = vector.shape_cast %442 : vector<1x8x4xf32> to vector<8x4xf32>
    %444 = arith.subf %443, %438 : vector<8x4xf32>
    %445 = vector.extract_strided_slice %75 {offsets = [2, 0, 0], sizes = [1, 8, 4], strides = [1, 1, 1]} : vector<3x8x4xf32> to vector<1x8x4xf32>
    %446 = vector.shape_cast %445 : vector<1x8x4xf32> to vector<8x4xf32>
    %447 = arith.subf %446, %438 : vector<8x4xf32>
    %448 = arith.mulf %441, %441 : vector<8x4xf32>
    %449 = arith.mulf %444, %444 : vector<8x4xf32>
    %450 = arith.addf %448, %449 : vector<8x4xf32>
    %451 = arith.mulf %447, %447 : vector<8x4xf32>
    %452 = arith.addf %450, %451 : vector<8x4xf32>
    %cst_57 = arith.constant 0.333333343 : f32
    %453 = vector.broadcast %cst_57 : f32 to vector<8x4xf32>
    %454 = arith.mulf %452, %453 : vector<8x4xf32>
    %cst_58 = arith.constant 9.99999974E-6 : f32
    %455 = vector.broadcast %cst_58 : f32 to vector<8x4xf32>
    %456 = arith.addf %454, %455 : vector<8x4xf32>
    %457 = math.rsqrt %456 : vector<8x4xf32>
    %458 = vector.shape_cast %438 : vector<8x4xf32> to vector<1x8x4xf32>
    %459 = vector.broadcast %458 : vector<1x8x4xf32> to vector<3x8x4xf32>
    %460 = arith.subf %75, %459 : vector<3x8x4xf32>
    %461 = vector.shape_cast %457 : vector<8x4xf32> to vector<1x8x4xf32>
    %462 = vector.broadcast %461 : vector<1x8x4xf32> to vector<3x8x4xf32>
    %463 = arith.mulf %460, %462 : vector<3x8x4xf32>
    %464 = vector.shape_cast %426 : vector<3x1xf32> to vector<3x1x1xf32>
    %465 = vector.broadcast %464 : vector<3x1x1xf32> to vector<3x8x4xf32>
    %466 = arith.mulf %463, %465 : vector<3x8x4xf32>
    %467 = vector.shape_cast %428 : vector<3x1xf32> to vector<3x1x1xf32>
    %468 = vector.broadcast %467 : vector<3x1x1xf32> to vector<3x8x4xf32>
    %469 = arith.addf %466, %468 : vector<3x8x4xf32>
    %c5 = arith.constant 5 : index
    %c0_59 = arith.constant 0 : index
    %c0_60 = arith.constant 0 : index
    %470 = vector.load %arg2[%c5, %c0_59, %c0_60] : memref<7x3x1xf32, #tpu.memory_space<vmem>>, vector<1x3x1xf32>
    %471 = vector.shape_cast %470 : vector<1x3x1xf32> to vector<3x1xf32>
    %c5_61 = arith.constant 5 : index
    %c0_62 = arith.constant 0 : index
    %c0_63 = arith.constant 0 : index
    %472 = vector.load %arg3[%c5_61, %c0_62, %c0_63] : memref<7x3x1xf32, #tpu.memory_space<vmem>>, vector<1x3x1xf32>
    %473 = vector.shape_cast %472 : vector<1x3x1xf32> to vector<3x1xf32>
    %474 = vector.extract_strided_slice %124 {offsets = [0, 0, 0], sizes = [1, 8, 4], strides = [1, 1, 1]} : vector<3x8x4xf32> to vector<1x8x4xf32>
    %475 = vector.shape_cast %474 : vector<1x8x4xf32> to vector<8x4xf32>
    %476 = vector.extract_strided_slice %124 {offsets = [1, 0, 0], sizes = [1, 8, 4], strides = [1, 1, 1]} : vector<3x8x4xf32> to vector<1x8x4xf32>
    %477 = vector.shape_cast %476 : vector<1x8x4xf32> to vector<8x4xf32>
    %478 = arith.addf %475, %477 : vector<8x4xf32>
    %479 = vector.extract_strided_slice %124 {offsets = [2, 0, 0], sizes = [1, 8, 4], strides = [1, 1, 1]} : vector<3x8x4xf32> to vector<1x8x4xf32>
    %480 = vector.shape_cast %479 : vector<1x8x4xf32> to vector<8x4xf32>
    %481 = arith.addf %478, %480 : vector<8x4xf32>
    %cst_64 = arith.constant 0.333333343 : f32
    %482 = vector.broadcast %cst_64 : f32 to vector<8x4xf32>
    %483 = arith.mulf %481, %482 : vector<8x4xf32>
    %484 = vector.extract_strided_slice %124 {offsets = [0, 0, 0], sizes = [1, 8, 4], strides = [1, 1, 1]} : vector<3x8x4xf32> to vector<1x8x4xf32>
    %485 = vector.shape_cast %484 : vector<1x8x4xf32> to vector<8x4xf32>
    %486 = arith.subf %485, %483 : vector<8x4xf32>
    %487 = vector.extract_strided_slice %124 {offsets = [1, 0, 0], sizes = [1, 8, 4], strides = [1, 1, 1]} : vector<3x8x4xf32> to vector<1x8x4xf32>
    %488 = vector.shape_cast %487 : vector<1x8x4xf32> to vector<8x4xf32>
    %489 = arith.subf %488, %483 : vector<8x4xf32>
    %490 = vector.extract_strided_slice %124 {offsets = [2, 0, 0], sizes = [1, 8, 4], strides = [1, 1, 1]} : vector<3x8x4xf32> to vector<1x8x4xf32>
    %491 = vector.shape_cast %490 : vector<1x8x4xf32> to vector<8x4xf32>
    %492 = arith.subf %491, %483 : vector<8x4xf32>
    %493 = arith.mulf %486, %486 : vector<8x4xf32>
    %494 = arith.mulf %489, %489 : vector<8x4xf32>
    %495 = arith.addf %493, %494 : vector<8x4xf32>
    %496 = arith.mulf %492, %492 : vector<8x4xf32>
    %497 = arith.addf %495, %496 : vector<8x4xf32>
    %cst_65 = arith.constant 0.333333343 : f32
    %498 = vector.broadcast %cst_65 : f32 to vector<8x4xf32>
    %499 = arith.mulf %497, %498 : vector<8x4xf32>
    %cst_66 = arith.constant 9.99999974E-6 : f32
    %500 = vector.broadcast %cst_66 : f32 to vector<8x4xf32>
    %501 = arith.addf %499, %500 : vector<8x4xf32>
    %502 = math.rsqrt %501 : vector<8x4xf32>
    %503 = vector.shape_cast %483 : vector<8x4xf32> to vector<1x8x4xf32>
    %504 = vector.broadcast %503 : vector<1x8x4xf32> to vector<3x8x4xf32>
    %505 = arith.subf %124, %504 : vector<3x8x4xf32>
    %506 = vector.shape_cast %502 : vector<8x4xf32> to vector<1x8x4xf32>
    %507 = vector.broadcast %506 : vector<1x8x4xf32> to vector<3x8x4xf32>
    %508 = arith.mulf %505, %507 : vector<3x8x4xf32>
    %509 = vector.shape_cast %471 : vector<3x1xf32> to vector<3x1x1xf32>
    %510 = vector.broadcast %509 : vector<3x1x1xf32> to vector<3x8x4xf32>
    %511 = arith.mulf %508, %510 : vector<3x8x4xf32>
    %512 = vector.shape_cast %473 : vector<3x1xf32> to vector<3x1x1xf32>
    %513 = vector.broadcast %512 : vector<3x1x1xf32> to vector<3x8x4xf32>
    %514 = arith.addf %511, %513 : vector<3x8x4xf32>
    %c6 = arith.constant 6 : index
    %c0_67 = arith.constant 0 : index
    %c0_68 = arith.constant 0 : index
    %515 = vector.load %arg2[%c6, %c0_67, %c0_68] : memref<7x3x1xf32, #tpu.memory_space<vmem>>, vector<1x3x1xf32>
    %516 = vector.shape_cast %515 : vector<1x3x1xf32> to vector<3x1xf32>
    %c6_69 = arith.constant 6 : index
    %c0_70 = arith.constant 0 : index
    %c0_71 = arith.constant 0 : index
    %517 = vector.load %arg3[%c6_69, %c0_70, %c0_71] : memref<7x3x1xf32, #tpu.memory_space<vmem>>, vector<1x3x1xf32>
    %518 = vector.shape_cast %517 : vector<1x3x1xf32> to vector<3x1xf32>
    %519 = vector.extract_strided_slice %31 {offsets = [0, 0, 0], sizes = [1, 8, 4], strides = [1, 1, 1]} : vector<3x8x4xf32> to vector<1x8x4xf32>
    %520 = vector.shape_cast %519 : vector<1x8x4xf32> to vector<8x4xf32>
    %521 = vector.extract_strided_slice %31 {offsets = [1, 0, 0], sizes = [1, 8, 4], strides = [1, 1, 1]} : vector<3x8x4xf32> to vector<1x8x4xf32>
    %522 = vector.shape_cast %521 : vector<1x8x4xf32> to vector<8x4xf32>
    %523 = arith.addf %520, %522 : vector<8x4xf32>
    %524 = vector.extract_strided_slice %31 {offsets = [2, 0, 0], sizes = [1, 8, 4], strides = [1, 1, 1]} : vector<3x8x4xf32> to vector<1x8x4xf32>
    %525 = vector.shape_cast %524 : vector<1x8x4xf32> to vector<8x4xf32>
    %526 = arith.addf %523, %525 : vector<8x4xf32>
    %cst_72 = arith.constant 0.333333343 : f32
    %527 = vector.broadcast %cst_72 : f32 to vector<8x4xf32>
    %528 = arith.mulf %526, %527 : vector<8x4xf32>
    %529 = vector.extract_strided_slice %31 {offsets = [0, 0, 0], sizes = [1, 8, 4], strides = [1, 1, 1]} : vector<3x8x4xf32> to vector<1x8x4xf32>
    %530 = vector.shape_cast %529 : vector<1x8x4xf32> to vector<8x4xf32>
    %531 = arith.subf %530, %528 : vector<8x4xf32>
    %532 = vector.extract_strided_slice %31 {offsets = [1, 0, 0], sizes = [1, 8, 4], strides = [1, 1, 1]} : vector<3x8x4xf32> to vector<1x8x4xf32>
    %533 = vector.shape_cast %532 : vector<1x8x4xf32> to vector<8x4xf32>
    %534 = arith.subf %533, %528 : vector<8x4xf32>
    %535 = vector.extract_strided_slice %31 {offsets = [2, 0, 0], sizes = [1, 8, 4], strides = [1, 1, 1]} : vector<3x8x4xf32> to vector<1x8x4xf32>
    %536 = vector.shape_cast %535 : vector<1x8x4xf32> to vector<8x4xf32>
    %537 = arith.subf %536, %528 : vector<8x4xf32>
    %538 = arith.mulf %531, %531 : vector<8x4xf32>
    %539 = arith.mulf %534, %534 : vector<8x4xf32>
    %540 = arith.addf %538, %539 : vector<8x4xf32>
    %541 = arith.mulf %537, %537 : vector<8x4xf32>
    %542 = arith.addf %540, %541 : vector<8x4xf32>
    %cst_73 = arith.constant 0.333333343 : f32
    %543 = vector.broadcast %cst_73 : f32 to vector<8x4xf32>
    %544 = arith.mulf %542, %543 : vector<8x4xf32>
    %cst_74 = arith.constant 9.99999974E-6 : f32
    %545 = vector.broadcast %cst_74 : f32 to vector<8x4xf32>
    %546 = arith.addf %544, %545 : vector<8x4xf32>
    %547 = math.rsqrt %546 : vector<8x4xf32>
    %548 = vector.shape_cast %528 : vector<8x4xf32> to vector<1x8x4xf32>
    %549 = vector.broadcast %548 : vector<1x8x4xf32> to vector<3x8x4xf32>
    %550 = arith.subf %31, %549 : vector<3x8x4xf32>
    %551 = vector.shape_cast %547 : vector<8x4xf32> to vector<1x8x4xf32>
    %552 = vector.broadcast %551 : vector<1x8x4xf32> to vector<3x8x4xf32>
    %553 = arith.mulf %550, %552 : vector<3x8x4xf32>
    %554 = vector.shape_cast %516 : vector<3x1xf32> to vector<3x1x1xf32>
    %555 = vector.broadcast %554 : vector<3x1x1xf32> to vector<3x8x4xf32>
    %556 = arith.mulf %553, %555 : vector<3x8x4xf32>
    %557 = vector.shape_cast %518 : vector<3x1xf32> to vector<3x1x1xf32>
    %558 = vector.broadcast %557 : vector<3x1x1xf32> to vector<3x8x4xf32>
    %559 = arith.addf %556, %558 : vector<3x8x4xf32>
    %560 = vector.extract_strided_slice %0 {offsets = [0, 0, 0, 0], sizes = [3, 1, 8, 4], strides = [1, 1, 1, 1]} : vector<3x10x8x4xf32> to vector<3x1x8x4xf32>
    %561 = vector.shape_cast %560 : vector<3x1x8x4xf32> to vector<3x8x4xf32>
    %562 = vector.extract_strided_slice %0 {offsets = [0, 1, 0, 0], sizes = [3, 1, 8, 4], strides = [1, 1, 1, 1]} : vector<3x10x8x4xf32> to vector<3x1x8x4xf32>
    %563 = vector.shape_cast %562 : vector<3x1x8x4xf32> to vector<3x8x4xf32>
    %564 = vector.extract_strided_slice %0 {offsets = [0, 2, 0, 0], sizes = [3, 1, 8, 4], strides = [1, 1, 1, 1]} : vector<3x10x8x4xf32> to vector<3x1x8x4xf32>
    %565 = vector.shape_cast %564 : vector<3x1x8x4xf32> to vector<3x8x4xf32>
    %566 = vector.extract_strided_slice %0 {offsets = [0, 3, 0, 0], sizes = [3, 1, 8, 4], strides = [1, 1, 1, 1]} : vector<3x10x8x4xf32> to vector<3x1x8x4xf32>
    %567 = vector.shape_cast %566 : vector<3x1x8x4xf32> to vector<3x8x4xf32>
    %568 = vector.extract_strided_slice %0 {offsets = [0, 4, 0, 0], sizes = [3, 1, 8, 4], strides = [1, 1, 1, 1]} : vector<3x10x8x4xf32> to vector<3x1x8x4xf32>
    %569 = vector.shape_cast %568 : vector<3x1x8x4xf32> to vector<3x8x4xf32>
    %570 = vector.extract_strided_slice %0 {offsets = [0, 5, 0, 0], sizes = [3, 1, 8, 4], strides = [1, 1, 1, 1]} : vector<3x10x8x4xf32> to vector<3x1x8x4xf32>
    %571 = vector.shape_cast %570 : vector<3x1x8x4xf32> to vector<3x8x4xf32>
    %572 = vector.extract_strided_slice %0 {offsets = [0, 6, 0, 0], sizes = [3, 1, 8, 4], strides = [1, 1, 1, 1]} : vector<3x10x8x4xf32> to vector<3x1x8x4xf32>
    %573 = vector.shape_cast %572 : vector<3x1x8x4xf32> to vector<3x8x4xf32>
    %574 = vector.extract_strided_slice %0 {offsets = [0, 7, 0, 0], sizes = [3, 1, 8, 4], strides = [1, 1, 1, 1]} : vector<3x10x8x4xf32> to vector<3x1x8x4xf32>
    %575 = vector.shape_cast %574 : vector<3x1x8x4xf32> to vector<3x8x4xf32>
    %576 = vector.extract_strided_slice %0 {offsets = [0, 8, 0, 0], sizes = [3, 1, 8, 4], strides = [1, 1, 1, 1]} : vector<3x10x8x4xf32> to vector<3x1x8x4xf32>
    %577 = vector.shape_cast %576 : vector<3x1x8x4xf32> to vector<3x8x4xf32>
    %578 = vector.extract_strided_slice %0 {offsets = [0, 9, 0, 0], sizes = [3, 1, 8, 4], strides = [1, 1, 1, 1]} : vector<3x10x8x4xf32> to vector<3x1x8x4xf32>
    %579 = vector.shape_cast %578 : vector<3x1x8x4xf32> to vector<3x8x4xf32>
    %580 = tpu.concatenate %561, %563, %565, %567, %569, %571, %573, %575, %577, %579 in 2 : vector<3x8x4xf32>, vector<3x8x4xf32>, vector<3x8x4xf32>, vector<3x8x4xf32>, vector<3x8x4xf32>, vector<3x8x4xf32>, vector<3x8x4xf32>, vector<3x8x4xf32>, vector<3x8x4xf32>, vector<3x8x4xf32> -> vector<3x8x40xf32>
    %581 = vector.shape_cast %580 : vector<3x8x40xf32> to vector<24x40xf32>
    %c0_75 = arith.constant 0 : index
    %c0_76 = arith.constant 0 : index
    %582 = vector.load %arg4[%c0_75, %c0_76] : memref<40x28xf32, #tpu.memory_space<vmem>>, vector<40x28xf32>
    %cst_77 = arith.constant dense<0.000000e+00> : vector<24x28xf32>
    %583 = tpu.matmul %581, %582, %cst_77 {dimension_numbers = #tpu.dot_dimension_numbers<[1], [0], [0], [1], [0, 0, 1, 1], [], []>} : vector<24x40xf32>, vector<40x28xf32>, vector<24x28xf32> -> vector<24x28xf32>
    %c0_78 = arith.constant 0 : index
    %c0_79 = arith.constant 0 : index
    %584 = vector.load %arg5[%c0_78, %c0_79] : memref<1x28xf32, #tpu.memory_space<vmem>>, vector<1x28xf32>
    %585 = vector.broadcast %584 : vector<1x28xf32> to vector<24x28xf32>
    %586 = arith.addf %583, %585 : vector<24x28xf32>
    %587 = vector.shape_cast %586 : vector<24x28xf32> to vector<3x8x28xf32>
    %c0_80 = arith.constant 0 : index
    %c0_81 = arith.constant 0 : index
    %c0_82 = arith.constant 0 : index
    %588 = vector.load %arg14[%c0_80, %c0_81, %c0_82] : memref<6x3x1xf32, #tpu.memory_space<vmem>>, vector<1x3x1xf32>
    %589 = vector.shape_cast %588 : vector<1x3x1xf32> to vector<3x1xf32>
    %c0_83 = arith.constant 0 : index
    %c0_84 = arith.constant 0 : index
    %c0_85 = arith.constant 0 : index
    %590 = vector.load %arg15[%c0_83, %c0_84, %c0_85] : memref<6x3x1xf32, #tpu.memory_space<vmem>>, vector<1x3x1xf32>
    %591 = vector.shape_cast %590 : vector<1x3x1xf32> to vector<3x1xf32>
    %592 = vector.extract_strided_slice %587 {offsets = [0, 0, 0], sizes = [1, 8, 28], strides = [1, 1, 1]} : vector<3x8x28xf32> to vector<1x8x28xf32>
    %593 = vector.shape_cast %592 : vector<1x8x28xf32> to vector<8x28xf32>
    %594 = vector.extract_strided_slice %587 {offsets = [1, 0, 0], sizes = [1, 8, 28], strides = [1, 1, 1]} : vector<3x8x28xf32> to vector<1x8x28xf32>
    %595 = vector.shape_cast %594 : vector<1x8x28xf32> to vector<8x28xf32>
    %596 = arith.addf %593, %595 : vector<8x28xf32>
    %597 = vector.extract_strided_slice %587 {offsets = [2, 0, 0], sizes = [1, 8, 28], strides = [1, 1, 1]} : vector<3x8x28xf32> to vector<1x8x28xf32>
    %598 = vector.shape_cast %597 : vector<1x8x28xf32> to vector<8x28xf32>
    %599 = arith.addf %596, %598 : vector<8x28xf32>
    %cst_86 = arith.constant 0.333333343 : f32
    %600 = vector.broadcast %cst_86 : f32 to vector<8x28xf32>
    %601 = arith.mulf %599, %600 : vector<8x28xf32>
    %602 = vector.extract_strided_slice %587 {offsets = [0, 0, 0], sizes = [1, 8, 28], strides = [1, 1, 1]} : vector<3x8x28xf32> to vector<1x8x28xf32>
    %603 = vector.shape_cast %602 : vector<1x8x28xf32> to vector<8x28xf32>
    %604 = arith.subf %603, %601 : vector<8x28xf32>
    %605 = vector.extract_strided_slice %587 {offsets = [1, 0, 0], sizes = [1, 8, 28], strides = [1, 1, 1]} : vector<3x8x28xf32> to vector<1x8x28xf32>
    %606 = vector.shape_cast %605 : vector<1x8x28xf32> to vector<8x28xf32>
    %607 = arith.subf %606, %601 : vector<8x28xf32>
    %608 = vector.extract_strided_slice %587 {offsets = [2, 0, 0], sizes = [1, 8, 28], strides = [1, 1, 1]} : vector<3x8x28xf32> to vector<1x8x28xf32>
    %609 = vector.shape_cast %608 : vector<1x8x28xf32> to vector<8x28xf32>
    %610 = arith.subf %609, %601 : vector<8x28xf32>
    %611 = arith.mulf %604, %604 : vector<8x28xf32>
    %612 = arith.mulf %607, %607 : vector<8x28xf32>
    %613 = arith.addf %611, %612 : vector<8x28xf32>
    %614 = arith.mulf %610, %610 : vector<8x28xf32>
    %615 = arith.addf %613, %614 : vector<8x28xf32>
    %cst_87 = arith.constant 0.333333343 : f32
    %616 = vector.broadcast %cst_87 : f32 to vector<8x28xf32>
    %617 = arith.mulf %615, %616 : vector<8x28xf32>
    %cst_88 = arith.constant 9.99999974E-6 : f32
    %618 = vector.broadcast %cst_88 : f32 to vector<8x28xf32>
    %619 = arith.addf %617, %618 : vector<8x28xf32>
    %620 = math.rsqrt %619 : vector<8x28xf32>
    %621 = vector.shape_cast %601 : vector<8x28xf32> to vector<1x8x28xf32>
    %622 = vector.broadcast %621 : vector<1x8x28xf32> to vector<3x8x28xf32>
    %623 = arith.subf %587, %622 : vector<3x8x28xf32>
    %624 = vector.shape_cast %620 : vector<8x28xf32> to vector<1x8x28xf32>
    %625 = vector.broadcast %624 : vector<1x8x28xf32> to vector<3x8x28xf32>
    %626 = arith.mulf %623, %625 : vector<3x8x28xf32>
    %627 = vector.shape_cast %589 : vector<3x1xf32> to vector<3x1x1xf32>
    %628 = vector.broadcast %627 : vector<3x1x1xf32> to vector<3x8x28xf32>
    %629 = arith.mulf %626, %628 : vector<3x8x28xf32>
    %630 = vector.shape_cast %591 : vector<3x1xf32> to vector<3x1x1xf32>
    %631 = vector.broadcast %630 : vector<3x1x1xf32> to vector<3x8x28xf32>
    %632 = arith.addf %629, %631 : vector<3x8x28xf32>
    %633 = tpu.concatenate %289, %334, %379, %424, %469, %514, %559, %632 in 2 : vector<3x8x6xf32>, vector<3x8x6xf32>, vector<3x8x4xf32>, vector<3x8x4xf32>, vector<3x8x4xf32>, vector<3x8x4xf32>, vector<3x8x4xf32>, vector<3x8x28xf32> -> vector<3x8x60xf32>
    %c1_89 = arith.constant 1 : index
    %c0_90 = arith.constant 0 : index
    %c0_91 = arith.constant 0 : index
    %634 = vector.load %arg14[%c1_89, %c0_90, %c0_91] : memref<6x3x1xf32, #tpu.memory_space<vmem>>, vector<1x3x1xf32>
    %635 = vector.shape_cast %634 : vector<1x3x1xf32> to vector<3x1xf32>
    %c1_92 = arith.constant 1 : index
    %c0_93 = arith.constant 0 : index
    %c0_94 = arith.constant 0 : index
    %636 = vector.load %arg15[%c1_92, %c0_93, %c0_94] : memref<6x3x1xf32, #tpu.memory_space<vmem>>, vector<1x3x1xf32>
    %637 = vector.shape_cast %636 : vector<1x3x1xf32> to vector<3x1xf32>
    %638 = vector.shape_cast %633 : vector<3x8x60xf32> to vector<24x60xf32>
    %c0_95 = arith.constant 0 : index
    %c0_96 = arith.constant 0 : index
    %639 = vector.load %arg6[%c0_95, %c0_96] : memref<60x30xf32, #tpu.memory_space<vmem>>, vector<60x30xf32>
    %cst_97 = arith.constant dense<0.000000e+00> : vector<24x30xf32>
    %640 = tpu.matmul %638, %639, %cst_97 {dimension_numbers = #tpu.dot_dimension_numbers<[1], [0], [0], [1], [0, 0, 1, 1], [], []>} : vector<24x60xf32>, vector<60x30xf32>, vector<24x30xf32> -> vector<24x30xf32>
    %c0_98 = arith.constant 0 : index
    %c0_99 = arith.constant 0 : index
    %641 = vector.load %arg7[%c0_98, %c0_99] : memref<1x30xf32, #tpu.memory_space<vmem>>, vector<1x30xf32>
    %642 = vector.broadcast %641 : vector<1x30xf32> to vector<24x30xf32>
    %643 = arith.addf %640, %642 : vector<24x30xf32>
    %644 = vector.shape_cast %643 : vector<24x30xf32> to vector<3x8x30xf32>
    %645 = vector.extract_strided_slice %644 {offsets = [0, 0, 0], sizes = [1, 8, 30], strides = [1, 1, 1]} : vector<3x8x30xf32> to vector<1x8x30xf32>
    %646 = vector.shape_cast %645 : vector<1x8x30xf32> to vector<8x30xf32>
    %647 = vector.extract_strided_slice %644 {offsets = [1, 0, 0], sizes = [1, 8, 30], strides = [1, 1, 1]} : vector<3x8x30xf32> to vector<1x8x30xf32>
    %648 = vector.shape_cast %647 : vector<1x8x30xf32> to vector<8x30xf32>
    %649 = arith.addf %646, %648 : vector<8x30xf32>
    %650 = vector.extract_strided_slice %644 {offsets = [2, 0, 0], sizes = [1, 8, 30], strides = [1, 1, 1]} : vector<3x8x30xf32> to vector<1x8x30xf32>
    %651 = vector.shape_cast %650 : vector<1x8x30xf32> to vector<8x30xf32>
    %652 = arith.addf %649, %651 : vector<8x30xf32>
    %cst_100 = arith.constant 0.333333343 : f32
    %653 = vector.broadcast %cst_100 : f32 to vector<8x30xf32>
    %654 = arith.mulf %652, %653 : vector<8x30xf32>
    %655 = vector.extract_strided_slice %644 {offsets = [0, 0, 0], sizes = [1, 8, 30], strides = [1, 1, 1]} : vector<3x8x30xf32> to vector<1x8x30xf32>
    %656 = vector.shape_cast %655 : vector<1x8x30xf32> to vector<8x30xf32>
    %657 = arith.subf %656, %654 : vector<8x30xf32>
    %658 = vector.extract_strided_slice %644 {offsets = [1, 0, 0], sizes = [1, 8, 30], strides = [1, 1, 1]} : vector<3x8x30xf32> to vector<1x8x30xf32>
    %659 = vector.shape_cast %658 : vector<1x8x30xf32> to vector<8x30xf32>
    %660 = arith.subf %659, %654 : vector<8x30xf32>
    %661 = vector.extract_strided_slice %644 {offsets = [2, 0, 0], sizes = [1, 8, 30], strides = [1, 1, 1]} : vector<3x8x30xf32> to vector<1x8x30xf32>
    %662 = vector.shape_cast %661 : vector<1x8x30xf32> to vector<8x30xf32>
    %663 = arith.subf %662, %654 : vector<8x30xf32>
    %664 = arith.mulf %657, %657 : vector<8x30xf32>
    %665 = arith.mulf %660, %660 : vector<8x30xf32>
    %666 = arith.addf %664, %665 : vector<8x30xf32>
    %667 = arith.mulf %663, %663 : vector<8x30xf32>
    %668 = arith.addf %666, %667 : vector<8x30xf32>
    %cst_101 = arith.constant 0.333333343 : f32
    %669 = vector.broadcast %cst_101 : f32 to vector<8x30xf32>
    %670 = arith.mulf %668, %669 : vector<8x30xf32>
    %cst_102 = arith.constant 9.99999974E-6 : f32
    %671 = vector.broadcast %cst_102 : f32 to vector<8x30xf32>
    %672 = arith.addf %670, %671 : vector<8x30xf32>
    %673 = math.rsqrt %672 : vector<8x30xf32>
    %674 = vector.shape_cast %654 : vector<8x30xf32> to vector<1x8x30xf32>
    %675 = vector.broadcast %674 : vector<1x8x30xf32> to vector<3x8x30xf32>
    %676 = arith.subf %644, %675 : vector<3x8x30xf32>
    %677 = vector.shape_cast %673 : vector<8x30xf32> to vector<1x8x30xf32>
    %678 = vector.broadcast %677 : vector<1x8x30xf32> to vector<3x8x30xf32>
    %679 = arith.mulf %676, %678 : vector<3x8x30xf32>
    %680 = vector.shape_cast %635 : vector<3x1xf32> to vector<3x1x1xf32>
    %681 = vector.broadcast %680 : vector<3x1x1xf32> to vector<3x8x30xf32>
    %682 = arith.mulf %679, %681 : vector<3x8x30xf32>
    %683 = vector.shape_cast %637 : vector<3x1xf32> to vector<3x1x1xf32>
    %684 = vector.broadcast %683 : vector<3x1x1xf32> to vector<3x8x30xf32>
    %685 = arith.addf %682, %684 : vector<3x8x30xf32>
    %cst_103 = arith.constant 0.000000e+00 : f32
    %686 = vector.broadcast %cst_103 : f32 to vector<3x8x30xf32>
    %687 = arith.maximumf %685, %686 : vector<3x8x30xf32>
    %c2_104 = arith.constant 2 : index
    %c0_105 = arith.constant 0 : index
    %c0_106 = arith.constant 0 : index
    %688 = vector.load %arg14[%c2_104, %c0_105, %c0_106] : memref<6x3x1xf32, #tpu.memory_space<vmem>>, vector<1x3x1xf32>
    %689 = vector.shape_cast %688 : vector<1x3x1xf32> to vector<3x1xf32>
    %c2_107 = arith.constant 2 : index
    %c0_108 = arith.constant 0 : index
    %c0_109 = arith.constant 0 : index
    %690 = vector.load %arg15[%c2_107, %c0_108, %c0_109] : memref<6x3x1xf32, #tpu.memory_space<vmem>>, vector<1x3x1xf32>
    %691 = vector.shape_cast %690 : vector<1x3x1xf32> to vector<3x1xf32>
    %692 = vector.shape_cast %687 : vector<3x8x30xf32> to vector<24x30xf32>
    %c0_110 = arith.constant 0 : index
    %c0_111 = arith.constant 0 : index
    %693 = vector.load %arg8[%c0_110, %c0_111] : memref<30x15xf32, #tpu.memory_space<vmem>>, vector<30x15xf32>
    %cst_112 = arith.constant dense<0.000000e+00> : vector<24x15xf32>
    %694 = tpu.matmul %692, %693, %cst_112 {dimension_numbers = #tpu.dot_dimension_numbers<[1], [0], [0], [1], [0, 0, 1, 1], [], []>} : vector<24x30xf32>, vector<30x15xf32>, vector<24x15xf32> -> vector<24x15xf32>
    %c0_113 = arith.constant 0 : index
    %c0_114 = arith.constant 0 : index
    %695 = vector.load %arg9[%c0_113, %c0_114] : memref<1x15xf32, #tpu.memory_space<vmem>>, vector<1x15xf32>
    %696 = vector.broadcast %695 : vector<1x15xf32> to vector<24x15xf32>
    %697 = arith.addf %694, %696 : vector<24x15xf32>
    %698 = vector.shape_cast %697 : vector<24x15xf32> to vector<3x8x15xf32>
    %699 = vector.extract_strided_slice %698 {offsets = [0, 0, 0], sizes = [1, 8, 15], strides = [1, 1, 1]} : vector<3x8x15xf32> to vector<1x8x15xf32>
    %700 = vector.shape_cast %699 : vector<1x8x15xf32> to vector<8x15xf32>
    %701 = vector.extract_strided_slice %698 {offsets = [1, 0, 0], sizes = [1, 8, 15], strides = [1, 1, 1]} : vector<3x8x15xf32> to vector<1x8x15xf32>
    %702 = vector.shape_cast %701 : vector<1x8x15xf32> to vector<8x15xf32>
    %703 = arith.addf %700, %702 : vector<8x15xf32>
    %704 = vector.extract_strided_slice %698 {offsets = [2, 0, 0], sizes = [1, 8, 15], strides = [1, 1, 1]} : vector<3x8x15xf32> to vector<1x8x15xf32>
    %705 = vector.shape_cast %704 : vector<1x8x15xf32> to vector<8x15xf32>
    %706 = arith.addf %703, %705 : vector<8x15xf32>
    %cst_115 = arith.constant 0.333333343 : f32
    %707 = vector.broadcast %cst_115 : f32 to vector<8x15xf32>
    %708 = arith.mulf %706, %707 : vector<8x15xf32>
    %709 = vector.extract_strided_slice %698 {offsets = [0, 0, 0], sizes = [1, 8, 15], strides = [1, 1, 1]} : vector<3x8x15xf32> to vector<1x8x15xf32>
    %710 = vector.shape_cast %709 : vector<1x8x15xf32> to vector<8x15xf32>
    %711 = arith.subf %710, %708 : vector<8x15xf32>
    %712 = vector.extract_strided_slice %698 {offsets = [1, 0, 0], sizes = [1, 8, 15], strides = [1, 1, 1]} : vector<3x8x15xf32> to vector<1x8x15xf32>
    %713 = vector.shape_cast %712 : vector<1x8x15xf32> to vector<8x15xf32>
    %714 = arith.subf %713, %708 : vector<8x15xf32>
    %715 = vector.extract_strided_slice %698 {offsets = [2, 0, 0], sizes = [1, 8, 15], strides = [1, 1, 1]} : vector<3x8x15xf32> to vector<1x8x15xf32>
    %716 = vector.shape_cast %715 : vector<1x8x15xf32> to vector<8x15xf32>
    %717 = arith.subf %716, %708 : vector<8x15xf32>
    %718 = arith.mulf %711, %711 : vector<8x15xf32>
    %719 = arith.mulf %714, %714 : vector<8x15xf32>
    %720 = arith.addf %718, %719 : vector<8x15xf32>
    %721 = arith.mulf %717, %717 : vector<8x15xf32>
    %722 = arith.addf %720, %721 : vector<8x15xf32>
    %cst_116 = arith.constant 0.333333343 : f32
    %723 = vector.broadcast %cst_116 : f32 to vector<8x15xf32>
    %724 = arith.mulf %722, %723 : vector<8x15xf32>
    %cst_117 = arith.constant 9.99999974E-6 : f32
    %725 = vector.broadcast %cst_117 : f32 to vector<8x15xf32>
    %726 = arith.addf %724, %725 : vector<8x15xf32>
    %727 = math.rsqrt %726 : vector<8x15xf32>
    %728 = vector.shape_cast %708 : vector<8x15xf32> to vector<1x8x15xf32>
    %729 = vector.broadcast %728 : vector<1x8x15xf32> to vector<3x8x15xf32>
    %730 = arith.subf %698, %729 : vector<3x8x15xf32>
    %731 = vector.shape_cast %727 : vector<8x15xf32> to vector<1x8x15xf32>
    %732 = vector.broadcast %731 : vector<1x8x15xf32> to vector<3x8x15xf32>
    %733 = arith.mulf %730, %732 : vector<3x8x15xf32>
    %734 = vector.shape_cast %689 : vector<3x1xf32> to vector<3x1x1xf32>
    %735 = vector.broadcast %734 : vector<3x1x1xf32> to vector<3x8x15xf32>
    %736 = arith.mulf %733, %735 : vector<3x8x15xf32>
    %737 = vector.shape_cast %691 : vector<3x1xf32> to vector<3x1x1xf32>
    %738 = vector.broadcast %737 : vector<3x1x1xf32> to vector<3x8x15xf32>
    %739 = arith.addf %736, %738 : vector<3x8x15xf32>
    %cst_118 = arith.constant 0.000000e+00 : f32
    %740 = vector.broadcast %cst_118 : f32 to vector<3x8x15xf32>
    %741 = arith.maximumf %739, %740 : vector<3x8x15xf32>
    %c3_119 = arith.constant 3 : index
    %c0_120 = arith.constant 0 : index
    %c0_121 = arith.constant 0 : index
    %742 = vector.load %arg14[%c3_119, %c0_120, %c0_121] : memref<6x3x1xf32, #tpu.memory_space<vmem>>, vector<1x3x1xf32>
    %743 = vector.shape_cast %742 : vector<1x3x1xf32> to vector<3x1xf32>
    %c3_122 = arith.constant 3 : index
    %c0_123 = arith.constant 0 : index
    %c0_124 = arith.constant 0 : index
    %744 = vector.load %arg15[%c3_122, %c0_123, %c0_124] : memref<6x3x1xf32, #tpu.memory_space<vmem>>, vector<1x3x1xf32>
    %745 = vector.shape_cast %744 : vector<1x3x1xf32> to vector<3x1xf32>
    %746 = vector.shape_cast %741 : vector<3x8x15xf32> to vector<24x15xf32>
    %c0_125 = arith.constant 0 : index
    %c0_126 = arith.constant 0 : index
    %747 = vector.load %arg10[%c0_125, %c0_126] : memref<15x7xf32, #tpu.memory_space<vmem>>, vector<15x7xf32>
    %cst_127 = arith.constant dense<0.000000e+00> : vector<24x7xf32>
    %748 = tpu.matmul %746, %747, %cst_127 {dimension_numbers = #tpu.dot_dimension_numbers<[1], [0], [0], [1], [0, 0, 1, 1], [], []>} : vector<24x15xf32>, vector<15x7xf32>, vector<24x7xf32> -> vector<24x7xf32>
    %c0_128 = arith.constant 0 : index
    %c0_129 = arith.constant 0 : index
    %749 = vector.load %arg11[%c0_128, %c0_129] : memref<1x7xf32, #tpu.memory_space<vmem>>, vector<1x7xf32>
    %750 = vector.broadcast %749 : vector<1x7xf32> to vector<24x7xf32>
    %751 = arith.addf %748, %750 : vector<24x7xf32>
    %752 = vector.shape_cast %751 : vector<24x7xf32> to vector<3x8x7xf32>
    %753 = vector.extract_strided_slice %752 {offsets = [0, 0, 0], sizes = [1, 8, 7], strides = [1, 1, 1]} : vector<3x8x7xf32> to vector<1x8x7xf32>
    %754 = vector.shape_cast %753 : vector<1x8x7xf32> to vector<8x7xf32>
    %755 = vector.extract_strided_slice %752 {offsets = [1, 0, 0], sizes = [1, 8, 7], strides = [1, 1, 1]} : vector<3x8x7xf32> to vector<1x8x7xf32>
    %756 = vector.shape_cast %755 : vector<1x8x7xf32> to vector<8x7xf32>
    %757 = arith.addf %754, %756 : vector<8x7xf32>
    %758 = vector.extract_strided_slice %752 {offsets = [2, 0, 0], sizes = [1, 8, 7], strides = [1, 1, 1]} : vector<3x8x7xf32> to vector<1x8x7xf32>
    %759 = vector.shape_cast %758 : vector<1x8x7xf32> to vector<8x7xf32>
    %760 = arith.addf %757, %759 : vector<8x7xf32>
    %cst_130 = arith.constant 0.333333343 : f32
    %761 = vector.broadcast %cst_130 : f32 to vector<8x7xf32>
    %762 = arith.mulf %760, %761 : vector<8x7xf32>
    %763 = vector.extract_strided_slice %752 {offsets = [0, 0, 0], sizes = [1, 8, 7], strides = [1, 1, 1]} : vector<3x8x7xf32> to vector<1x8x7xf32>
    %764 = vector.shape_cast %763 : vector<1x8x7xf32> to vector<8x7xf32>
    %765 = arith.subf %764, %762 : vector<8x7xf32>
    %766 = vector.extract_strided_slice %752 {offsets = [1, 0, 0], sizes = [1, 8, 7], strides = [1, 1, 1]} : vector<3x8x7xf32> to vector<1x8x7xf32>
    %767 = vector.shape_cast %766 : vector<1x8x7xf32> to vector<8x7xf32>
    %768 = arith.subf %767, %762 : vector<8x7xf32>
    %769 = vector.extract_strided_slice %752 {offsets = [2, 0, 0], sizes = [1, 8, 7], strides = [1, 1, 1]} : vector<3x8x7xf32> to vector<1x8x7xf32>
    %770 = vector.shape_cast %769 : vector<1x8x7xf32> to vector<8x7xf32>
    %771 = arith.subf %770, %762 : vector<8x7xf32>
    %772 = arith.mulf %765, %765 : vector<8x7xf32>
    %773 = arith.mulf %768, %768 : vector<8x7xf32>
    %774 = arith.addf %772, %773 : vector<8x7xf32>
    %775 = arith.mulf %771, %771 : vector<8x7xf32>
    %776 = arith.addf %774, %775 : vector<8x7xf32>
    %cst_131 = arith.constant 0.333333343 : f32
    %777 = vector.broadcast %cst_131 : f32 to vector<8x7xf32>
    %778 = arith.mulf %776, %777 : vector<8x7xf32>
    %cst_132 = arith.constant 9.99999974E-6 : f32
    %779 = vector.broadcast %cst_132 : f32 to vector<8x7xf32>
    %780 = arith.addf %778, %779 : vector<8x7xf32>
    %781 = math.rsqrt %780 : vector<8x7xf32>
    %782 = vector.shape_cast %762 : vector<8x7xf32> to vector<1x8x7xf32>
    %783 = vector.broadcast %782 : vector<1x8x7xf32> to vector<3x8x7xf32>
    %784 = arith.subf %752, %783 : vector<3x8x7xf32>
    %785 = vector.shape_cast %781 : vector<8x7xf32> to vector<1x8x7xf32>
    %786 = vector.broadcast %785 : vector<1x8x7xf32> to vector<3x8x7xf32>
    %787 = arith.mulf %784, %786 : vector<3x8x7xf32>
    %788 = vector.shape_cast %743 : vector<3x1xf32> to vector<3x1x1xf32>
    %789 = vector.broadcast %788 : vector<3x1x1xf32> to vector<3x8x7xf32>
    %790 = arith.mulf %787, %789 : vector<3x8x7xf32>
    %791 = vector.shape_cast %745 : vector<3x1xf32> to vector<3x1x1xf32>
    %792 = vector.broadcast %791 : vector<3x1x1xf32> to vector<3x8x7xf32>
    %793 = arith.addf %790, %792 : vector<3x8x7xf32>
    %cst_133 = arith.constant 0.000000e+00 : f32
    %794 = vector.broadcast %cst_133 : f32 to vector<3x8x7xf32>
    %795 = arith.maximumf %793, %794 : vector<3x8x7xf32>
    %c4_134 = arith.constant 4 : index
    %c0_135 = arith.constant 0 : index
    %c0_136 = arith.constant 0 : index
    %796 = vector.load %arg14[%c4_134, %c0_135, %c0_136] : memref<6x3x1xf32, #tpu.memory_space<vmem>>, vector<1x3x1xf32>
    %797 = vector.shape_cast %796 : vector<1x3x1xf32> to vector<3x1xf32>
    %c4_137 = arith.constant 4 : index
    %c0_138 = arith.constant 0 : index
    %c0_139 = arith.constant 0 : index
    %798 = vector.load %arg15[%c4_137, %c0_138, %c0_139] : memref<6x3x1xf32, #tpu.memory_space<vmem>>, vector<1x3x1xf32>
    %799 = vector.shape_cast %798 : vector<1x3x1xf32> to vector<3x1xf32>
    %800 = vector.shape_cast %795 : vector<3x8x7xf32> to vector<24x7xf32>
    %c0_140 = arith.constant 0 : index
    %c0_141 = arith.constant 0 : index
    %801 = vector.load %arg12[%c0_140, %c0_141] : memref<7x3xf32, #tpu.memory_space<vmem>>, vector<7x3xf32>
    %cst_142 = arith.constant dense<0.000000e+00> : vector<24x3xf32>
    %802 = tpu.matmul %800, %801, %cst_142 {dimension_numbers = #tpu.dot_dimension_numbers<[1], [0], [0], [1], [0, 0, 1, 1], [], []>} : vector<24x7xf32>, vector<7x3xf32>, vector<24x3xf32> -> vector<24x3xf32>
    %c0_143 = arith.constant 0 : index
    %c0_144 = arith.constant 0 : index
    %803 = vector.load %arg13[%c0_143, %c0_144] : memref<1x3xf32, #tpu.memory_space<vmem>>, vector<1x3xf32>
    %804 = vector.broadcast %803 : vector<1x3xf32> to vector<24x3xf32>
    %805 = arith.addf %802, %804 : vector<24x3xf32>
    %806 = vector.shape_cast %805 : vector<24x3xf32> to vector<3x8x3xf32>
    %807 = vector.extract_strided_slice %806 {offsets = [0, 0, 0], sizes = [1, 8, 3], strides = [1, 1, 1]} : vector<3x8x3xf32> to vector<1x8x3xf32>
    %808 = vector.shape_cast %807 : vector<1x8x3xf32> to vector<8x3xf32>
    %809 = vector.extract_strided_slice %806 {offsets = [1, 0, 0], sizes = [1, 8, 3], strides = [1, 1, 1]} : vector<3x8x3xf32> to vector<1x8x3xf32>
    %810 = vector.shape_cast %809 : vector<1x8x3xf32> to vector<8x3xf32>
    %811 = arith.addf %808, %810 : vector<8x3xf32>
    %812 = vector.extract_strided_slice %806 {offsets = [2, 0, 0], sizes = [1, 8, 3], strides = [1, 1, 1]} : vector<3x8x3xf32> to vector<1x8x3xf32>
    %813 = vector.shape_cast %812 : vector<1x8x3xf32> to vector<8x3xf32>
    %814 = arith.addf %811, %813 : vector<8x3xf32>
    %cst_145 = arith.constant 0.333333343 : f32
    %815 = vector.broadcast %cst_145 : f32 to vector<8x3xf32>
    %816 = arith.mulf %814, %815 : vector<8x3xf32>
    %817 = vector.extract_strided_slice %806 {offsets = [0, 0, 0], sizes = [1, 8, 3], strides = [1, 1, 1]} : vector<3x8x3xf32> to vector<1x8x3xf32>
    %818 = vector.shape_cast %817 : vector<1x8x3xf32> to vector<8x3xf32>
    %819 = arith.subf %818, %816 : vector<8x3xf32>
    %820 = vector.extract_strided_slice %806 {offsets = [1, 0, 0], sizes = [1, 8, 3], strides = [1, 1, 1]} : vector<3x8x3xf32> to vector<1x8x3xf32>
    %821 = vector.shape_cast %820 : vector<1x8x3xf32> to vector<8x3xf32>
    %822 = arith.subf %821, %816 : vector<8x3xf32>
    %823 = vector.extract_strided_slice %806 {offsets = [2, 0, 0], sizes = [1, 8, 3], strides = [1, 1, 1]} : vector<3x8x3xf32> to vector<1x8x3xf32>
    %824 = vector.shape_cast %823 : vector<1x8x3xf32> to vector<8x3xf32>
    %825 = arith.subf %824, %816 : vector<8x3xf32>
    %826 = arith.mulf %819, %819 : vector<8x3xf32>
    %827 = arith.mulf %822, %822 : vector<8x3xf32>
    %828 = arith.addf %826, %827 : vector<8x3xf32>
    %829 = arith.mulf %825, %825 : vector<8x3xf32>
    %830 = arith.addf %828, %829 : vector<8x3xf32>
    %cst_146 = arith.constant 0.333333343 : f32
    %831 = vector.broadcast %cst_146 : f32 to vector<8x3xf32>
    %832 = arith.mulf %830, %831 : vector<8x3xf32>
    %cst_147 = arith.constant 9.99999974E-6 : f32
    %833 = vector.broadcast %cst_147 : f32 to vector<8x3xf32>
    %834 = arith.addf %832, %833 : vector<8x3xf32>
    %835 = math.rsqrt %834 : vector<8x3xf32>
    %836 = vector.shape_cast %816 : vector<8x3xf32> to vector<1x8x3xf32>
    %837 = vector.broadcast %836 : vector<1x8x3xf32> to vector<3x8x3xf32>
    %838 = arith.subf %806, %837 : vector<3x8x3xf32>
    %839 = vector.shape_cast %835 : vector<8x3xf32> to vector<1x8x3xf32>
    %840 = vector.broadcast %839 : vector<1x8x3xf32> to vector<3x8x3xf32>
    %841 = arith.mulf %838, %840 : vector<3x8x3xf32>
    %842 = vector.shape_cast %797 : vector<3x1xf32> to vector<3x1x1xf32>
    %843 = vector.broadcast %842 : vector<3x1x1xf32> to vector<3x8x3xf32>
    %844 = arith.mulf %841, %843 : vector<3x8x3xf32>
    %845 = vector.shape_cast %799 : vector<3x1xf32> to vector<3x1x1xf32>
    %846 = vector.broadcast %845 : vector<3x1x1xf32> to vector<3x8x3xf32>
    %847 = arith.addf %844, %846 : vector<3x8x3xf32>
    %cst_148 = arith.constant 0.000000e+00 : f32
    %848 = vector.broadcast %cst_148 : f32 to vector<3x8x3xf32>
    %849 = arith.maximumf %847, %848 : vector<3x8x3xf32>
    %850 = vector.shape_cast %849 : vector<3x8x3xf32> to vector<24x3xf32>
    %c0_149 = arith.constant 0 : index
    %c0_150 = arith.constant 0 : index
    %851 = vector.load %arg16[%c0_149, %c0_150] : memref<3x120xf32, #tpu.memory_space<vmem>>, vector<3x120xf32>
    %cst_151 = arith.constant dense<0.000000e+00> : vector<24x120xf32>
    %852 = tpu.matmul %850, %851, %cst_151 {dimension_numbers = #tpu.dot_dimension_numbers<[1], [0], [0], [1], [0, 0, 1, 1], [], []>} : vector<24x3xf32>, vector<3x120xf32>, vector<24x120xf32> -> vector<24x120xf32>
    %c0_152 = arith.constant 0 : index
    %c0_153 = arith.constant 0 : index
    %853 = vector.load %arg18[%c0_152, %c0_153] : memref<1x120xf32, #tpu.memory_space<vmem>>, vector<1x120xf32>
    %854 = vector.broadcast %853 : vector<1x120xf32> to vector<24x120xf32>
    %855 = arith.addf %852, %854 : vector<24x120xf32>
    %856 = vector.shape_cast %855 : vector<24x120xf32> to vector<3x8x120xf32>
    %cst_154 = arith.constant 0.000000e+00 : f32
    %857 = vector.broadcast %cst_154 : f32 to vector<8x30xf32>
    %cst_155 = arith.constant 0.000000e+00 : f32
    %858 = vector.broadcast %cst_155 : f32 to vector<8x30xf32>
    %859 = vector.extract_strided_slice %856 {offsets = [0, 0, 0], sizes = [1, 8, 120], strides = [1, 1, 1]} : vector<3x8x120xf32> to vector<1x8x120xf32>
    %860 = vector.shape_cast %859 : vector<1x8x120xf32> to vector<8x120xf32>
    %c0_156 = arith.constant 0 : index
    %c0_157 = arith.constant 0 : index
    %861 = vector.load %arg17[%c0_156, %c0_157] : memref<30x120xf32, #tpu.memory_space<vmem>>, vector<30x120xf32>
    %cst_158 = arith.constant dense<0.000000e+00> : vector<8x120xf32>
    %862 = tpu.matmul %857, %861, %cst_158 {dimension_numbers = #tpu.dot_dimension_numbers<[1], [0], [0], [1], [0, 0, 1, 1], [], []>} : vector<8x30xf32>, vector<30x120xf32>, vector<8x120xf32> -> vector<8x120xf32>
    %863 = arith.addf %860, %862 : vector<8x120xf32>
    %864 = vector.extract_strided_slice %863 {offsets = [0, 0], sizes = [8, 30], strides = [1, 1]} : vector<8x120xf32> to vector<8x30xf32>
    %cst_159 = arith.constant 0.000000e+00 : f32
    %865 = vector.broadcast %cst_159 : f32 to vector<8x30xf32>
    %866 = arith.subf %865, %864 : vector<8x30xf32>
    %867 = math.exp %866 : vector<8x30xf32>
    %cst_160 = arith.constant 1.000000e+00 : f32
    %868 = vector.broadcast %cst_160 : f32 to vector<8x30xf32>
    %869 = arith.addf %868, %867 : vector<8x30xf32>
    %cst_161 = arith.constant 1.000000e+00 : f32
    %870 = vector.broadcast %cst_161 : f32 to vector<8x30xf32>
    %871 = arith.divf %870, %869 : vector<8x30xf32>
    %872 = vector.extract_strided_slice %863 {offsets = [0, 30], sizes = [8, 30], strides = [1, 1]} : vector<8x120xf32> to vector<8x30xf32>
    %cst_162 = arith.constant 0.000000e+00 : f32
    %873 = vector.broadcast %cst_162 : f32 to vector<8x30xf32>
    %874 = arith.subf %873, %872 : vector<8x30xf32>
    %875 = math.exp %874 : vector<8x30xf32>
    %cst_163 = arith.constant 1.000000e+00 : f32
    %876 = vector.broadcast %cst_163 : f32 to vector<8x30xf32>
    %877 = arith.addf %876, %875 : vector<8x30xf32>
    %cst_164 = arith.constant 1.000000e+00 : f32
    %878 = vector.broadcast %cst_164 : f32 to vector<8x30xf32>
    %879 = arith.divf %878, %877 : vector<8x30xf32>
    %880 = vector.extract_strided_slice %863 {offsets = [0, 60], sizes = [8, 30], strides = [1, 1]} : vector<8x120xf32> to vector<8x30xf32>
    %881 = math.tanh %880 : vector<8x30xf32>
    %882 = vector.extract_strided_slice %863 {offsets = [0, 90], sizes = [8, 30], strides = [1, 1]} : vector<8x120xf32> to vector<8x30xf32>
    %cst_165 = arith.constant 0.000000e+00 : f32
    %883 = vector.broadcast %cst_165 : f32 to vector<8x30xf32>
    %884 = arith.subf %883, %882 : vector<8x30xf32>
    %885 = math.exp %884 : vector<8x30xf32>
    %cst_166 = arith.constant 1.000000e+00 : f32
    %886 = vector.broadcast %cst_166 : f32 to vector<8x30xf32>
    %887 = arith.addf %886, %885 : vector<8x30xf32>
    %cst_167 = arith.constant 1.000000e+00 : f32
    %888 = vector.broadcast %cst_167 : f32 to vector<8x30xf32>
    %889 = arith.divf %888, %887 : vector<8x30xf32>
    %890 = arith.mulf %879, %858 : vector<8x30xf32>
    %891 = arith.mulf %871, %881 : vector<8x30xf32>
    %892 = arith.addf %890, %891 : vector<8x30xf32>
    %893 = math.tanh %892 : vector<8x30xf32>
    %894 = arith.mulf %889, %893 : vector<8x30xf32>
    %895 = vector.extract_strided_slice %856 {offsets = [1, 0, 0], sizes = [1, 8, 120], strides = [1, 1, 1]} : vector<3x8x120xf32> to vector<1x8x120xf32>
    %896 = vector.shape_cast %895 : vector<1x8x120xf32> to vector<8x120xf32>
    %c0_168 = arith.constant 0 : index
    %c0_169 = arith.constant 0 : index
    %897 = vector.load %arg17[%c0_168, %c0_169] : memref<30x120xf32, #tpu.memory_space<vmem>>, vector<30x120xf32>
    %cst_170 = arith.constant dense<0.000000e+00> : vector<8x120xf32>
    %898 = tpu.matmul %894, %897, %cst_170 {dimension_numbers = #tpu.dot_dimension_numbers<[1], [0], [0], [1], [0, 0, 1, 1], [], []>} : vector<8x30xf32>, vector<30x120xf32>, vector<8x120xf32> -> vector<8x120xf32>
    %899 = arith.addf %896, %898 : vector<8x120xf32>
    %900 = vector.extract_strided_slice %899 {offsets = [0, 0], sizes = [8, 30], strides = [1, 1]} : vector<8x120xf32> to vector<8x30xf32>
    %cst_171 = arith.constant 0.000000e+00 : f32
    %901 = vector.broadcast %cst_171 : f32 to vector<8x30xf32>
    %902 = arith.subf %901, %900 : vector<8x30xf32>
    %903 = math.exp %902 : vector<8x30xf32>
    %cst_172 = arith.constant 1.000000e+00 : f32
    %904 = vector.broadcast %cst_172 : f32 to vector<8x30xf32>
    %905 = arith.addf %904, %903 : vector<8x30xf32>
    %cst_173 = arith.constant 1.000000e+00 : f32
    %906 = vector.broadcast %cst_173 : f32 to vector<8x30xf32>
    %907 = arith.divf %906, %905 : vector<8x30xf32>
    %908 = vector.extract_strided_slice %899 {offsets = [0, 30], sizes = [8, 30], strides = [1, 1]} : vector<8x120xf32> to vector<8x30xf32>
    %cst_174 = arith.constant 0.000000e+00 : f32
    %909 = vector.broadcast %cst_174 : f32 to vector<8x30xf32>
    %910 = arith.subf %909, %908 : vector<8x30xf32>
    %911 = math.exp %910 : vector<8x30xf32>
    %cst_175 = arith.constant 1.000000e+00 : f32
    %912 = vector.broadcast %cst_175 : f32 to vector<8x30xf32>
    %913 = arith.addf %912, %911 : vector<8x30xf32>
    %cst_176 = arith.constant 1.000000e+00 : f32
    %914 = vector.broadcast %cst_176 : f32 to vector<8x30xf32>
    %915 = arith.divf %914, %913 : vector<8x30xf32>
    %916 = vector.extract_strided_slice %899 {offsets = [0, 60], sizes = [8, 30], strides = [1, 1]} : vector<8x120xf32> to vector<8x30xf32>
    %917 = math.tanh %916 : vector<8x30xf32>
    %918 = vector.extract_strided_slice %899 {offsets = [0, 90], sizes = [8, 30], strides = [1, 1]} : vector<8x120xf32> to vector<8x30xf32>
    %cst_177 = arith.constant 0.000000e+00 : f32
    %919 = vector.broadcast %cst_177 : f32 to vector<8x30xf32>
    %920 = arith.subf %919, %918 : vector<8x30xf32>
    %921 = math.exp %920 : vector<8x30xf32>
    %cst_178 = arith.constant 1.000000e+00 : f32
    %922 = vector.broadcast %cst_178 : f32 to vector<8x30xf32>
    %923 = arith.addf %922, %921 : vector<8x30xf32>
    %cst_179 = arith.constant 1.000000e+00 : f32
    %924 = vector.broadcast %cst_179 : f32 to vector<8x30xf32>
    %925 = arith.divf %924, %923 : vector<8x30xf32>
    %926 = arith.mulf %915, %892 : vector<8x30xf32>
    %927 = arith.mulf %907, %917 : vector<8x30xf32>
    %928 = arith.addf %926, %927 : vector<8x30xf32>
    %929 = math.tanh %928 : vector<8x30xf32>
    %930 = arith.mulf %925, %929 : vector<8x30xf32>
    %931 = vector.extract_strided_slice %856 {offsets = [2, 0, 0], sizes = [1, 8, 120], strides = [1, 1, 1]} : vector<3x8x120xf32> to vector<1x8x120xf32>
    %932 = vector.shape_cast %931 : vector<1x8x120xf32> to vector<8x120xf32>
    %c0_180 = arith.constant 0 : index
    %c0_181 = arith.constant 0 : index
    %933 = vector.load %arg17[%c0_180, %c0_181] : memref<30x120xf32, #tpu.memory_space<vmem>>, vector<30x120xf32>
    %cst_182 = arith.constant dense<0.000000e+00> : vector<8x120xf32>
    %934 = tpu.matmul %930, %933, %cst_182 {dimension_numbers = #tpu.dot_dimension_numbers<[1], [0], [0], [1], [0, 0, 1, 1], [], []>} : vector<8x30xf32>, vector<30x120xf32>, vector<8x120xf32> -> vector<8x120xf32>
    %935 = arith.addf %932, %934 : vector<8x120xf32>
    %936 = vector.extract_strided_slice %935 {offsets = [0, 0], sizes = [8, 30], strides = [1, 1]} : vector<8x120xf32> to vector<8x30xf32>
    %cst_183 = arith.constant 0.000000e+00 : f32
    %937 = vector.broadcast %cst_183 : f32 to vector<8x30xf32>
    %938 = arith.subf %937, %936 : vector<8x30xf32>
    %939 = math.exp %938 : vector<8x30xf32>
    %cst_184 = arith.constant 1.000000e+00 : f32
    %940 = vector.broadcast %cst_184 : f32 to vector<8x30xf32>
    %941 = arith.addf %940, %939 : vector<8x30xf32>
    %cst_185 = arith.constant 1.000000e+00 : f32
    %942 = vector.broadcast %cst_185 : f32 to vector<8x30xf32>
    %943 = arith.divf %942, %941 : vector<8x30xf32>
    %944 = vector.extract_strided_slice %935 {offsets = [0, 30], sizes = [8, 30], strides = [1, 1]} : vector<8x120xf32> to vector<8x30xf32>
    %cst_186 = arith.constant 0.000000e+00 : f32
    %945 = vector.broadcast %cst_186 : f32 to vector<8x30xf32>
    %946 = arith.subf %945, %944 : vector<8x30xf32>
    %947 = math.exp %946 : vector<8x30xf32>
    %cst_187 = arith.constant 1.000000e+00 : f32
    %948 = vector.broadcast %cst_187 : f32 to vector<8x30xf32>
    %949 = arith.addf %948, %947 : vector<8x30xf32>
    %cst_188 = arith.constant 1.000000e+00 : f32
    %950 = vector.broadcast %cst_188 : f32 to vector<8x30xf32>
    %951 = arith.divf %950, %949 : vector<8x30xf32>
    %952 = vector.extract_strided_slice %935 {offsets = [0, 60], sizes = [8, 30], strides = [1, 1]} : vector<8x120xf32> to vector<8x30xf32>
    %953 = math.tanh %952 : vector<8x30xf32>
    %954 = vector.extract_strided_slice %935 {offsets = [0, 90], sizes = [8, 30], strides = [1, 1]} : vector<8x120xf32> to vector<8x30xf32>
    %cst_189 = arith.constant 0.000000e+00 : f32
    %955 = vector.broadcast %cst_189 : f32 to vector<8x30xf32>
    %956 = arith.subf %955, %954 : vector<8x30xf32>
    %957 = math.exp %956 : vector<8x30xf32>
    %cst_190 = arith.constant 1.000000e+00 : f32
    %958 = vector.broadcast %cst_190 : f32 to vector<8x30xf32>
    %959 = arith.addf %958, %957 : vector<8x30xf32>
    %cst_191 = arith.constant 1.000000e+00 : f32
    %960 = vector.broadcast %cst_191 : f32 to vector<8x30xf32>
    %961 = arith.divf %960, %959 : vector<8x30xf32>
    %962 = arith.mulf %951, %928 : vector<8x30xf32>
    %963 = arith.mulf %943, %953 : vector<8x30xf32>
    %964 = arith.addf %962, %963 : vector<8x30xf32>
    %965 = math.tanh %964 : vector<8x30xf32>
    %966 = arith.mulf %961, %965 : vector<8x30xf32>
    %967 = arith.addf %894, %930 : vector<8x30xf32>
    %968 = arith.addf %967, %966 : vector<8x30xf32>
    %cst_192 = arith.constant 0.333333343 : f32
    %969 = vector.broadcast %cst_192 : f32 to vector<8x30xf32>
    %970 = arith.mulf %968, %969 : vector<8x30xf32>
    %971 = arith.subf %894, %970 : vector<8x30xf32>
    %972 = arith.subf %930, %970 : vector<8x30xf32>
    %973 = arith.subf %966, %970 : vector<8x30xf32>
    %974 = arith.mulf %971, %971 : vector<8x30xf32>
    %975 = arith.mulf %972, %972 : vector<8x30xf32>
    %976 = arith.addf %974, %975 : vector<8x30xf32>
    %977 = arith.mulf %973, %973 : vector<8x30xf32>
    %978 = arith.addf %976, %977 : vector<8x30xf32>
    %cst_193 = arith.constant 0.333333343 : f32
    %979 = vector.broadcast %cst_193 : f32 to vector<8x30xf32>
    %980 = arith.mulf %978, %979 : vector<8x30xf32>
    %cst_194 = arith.constant 9.99999974E-6 : f32
    %981 = vector.broadcast %cst_194 : f32 to vector<8x30xf32>
    %982 = arith.addf %980, %981 : vector<8x30xf32>
    %983 = math.rsqrt %982 : vector<8x30xf32>
    %c5_195 = arith.constant 5 : index
    %c0_196 = arith.constant 0 : index
    %c0_197 = arith.constant 0 : index
    %984 = vector.load %arg14[%c5_195, %c0_196, %c0_197] : memref<6x3x1xf32, #tpu.memory_space<vmem>>, vector<1x3x1xf32>
    %985 = vector.shape_cast %984 : vector<1x3x1xf32> to vector<3x1xf32>
    %c5_198 = arith.constant 5 : index
    %c0_199 = arith.constant 0 : index
    %c0_200 = arith.constant 0 : index
    %986 = vector.load %arg15[%c5_198, %c0_199, %c0_200] : memref<6x3x1xf32, #tpu.memory_space<vmem>>, vector<1x3x1xf32>
    %987 = vector.shape_cast %986 : vector<1x3x1xf32> to vector<3x1xf32>
    %cst_201 = arith.constant 0.000000e+00 : f32
    %988 = vector.broadcast %cst_201 : f32 to vector<8x30xf32>
    %989 = arith.mulf %971, %983 : vector<8x30xf32>
    %990 = vector.extract_strided_slice %985 {offsets = [0, 0], sizes = [1, 1], strides = [1, 1]} : vector<3x1xf32> to vector<1x1xf32>
    %991 = vector.broadcast %990 : vector<1x1xf32> to vector<8x30xf32>
    %992 = arith.mulf %989, %991 : vector<8x30xf32>
    %993 = vector.extract_strided_slice %987 {offsets = [0, 0], sizes = [1, 1], strides = [1, 1]} : vector<3x1xf32> to vector<1x1xf32>
    %994 = vector.broadcast %993 : vector<1x1xf32> to vector<8x30xf32>
    %995 = arith.addf %992, %994 : vector<8x30xf32>
    %c0_202 = arith.constant 0 : index
    %c0_203 = arith.constant 0 : index
    %996 = vector.load %arg19[%c0_202, %c0_203] : memref<3x30xf32, #tpu.memory_space<vmem>>, vector<1x30xf32>
    %997 = vector.broadcast %996 : vector<1x30xf32> to vector<8x30xf32>
    %998 = arith.mulf %995, %997 : vector<8x30xf32>
    %999 = arith.addf %988, %998 : vector<8x30xf32>
    %1000 = arith.mulf %972, %983 : vector<8x30xf32>
    %1001 = vector.extract_strided_slice %985 {offsets = [1, 0], sizes = [1, 1], strides = [1, 1]} : vector<3x1xf32> to vector<1x1xf32>
    %1002 = vector.broadcast %1001 : vector<1x1xf32> to vector<8x30xf32>
    %1003 = arith.mulf %1000, %1002 : vector<8x30xf32>
    %1004 = vector.extract_strided_slice %987 {offsets = [1, 0], sizes = [1, 1], strides = [1, 1]} : vector<3x1xf32> to vector<1x1xf32>
    %1005 = vector.broadcast %1004 : vector<1x1xf32> to vector<8x30xf32>
    %1006 = arith.addf %1003, %1005 : vector<8x30xf32>
    %c1_204 = arith.constant 1 : index
    %c0_205 = arith.constant 0 : index
    %1007 = vector.load %arg19[%c1_204, %c0_205] : memref<3x30xf32, #tpu.memory_space<vmem>>, vector<1x30xf32>
    %1008 = vector.broadcast %1007 : vector<1x30xf32> to vector<8x30xf32>
    %1009 = arith.mulf %1006, %1008 : vector<8x30xf32>
    %1010 = arith.addf %999, %1009 : vector<8x30xf32>
    %1011 = arith.mulf %973, %983 : vector<8x30xf32>
    %1012 = vector.extract_strided_slice %985 {offsets = [2, 0], sizes = [1, 1], strides = [1, 1]} : vector<3x1xf32> to vector<1x1xf32>
    %1013 = vector.broadcast %1012 : vector<1x1xf32> to vector<8x30xf32>
    %1014 = arith.mulf %1011, %1013 : vector<8x30xf32>
    %1015 = vector.extract_strided_slice %987 {offsets = [2, 0], sizes = [1, 1], strides = [1, 1]} : vector<3x1xf32> to vector<1x1xf32>
    %1016 = vector.broadcast %1015 : vector<1x1xf32> to vector<8x30xf32>
    %1017 = arith.addf %1014, %1016 : vector<8x30xf32>
    %c2_206 = arith.constant 2 : index
    %c0_207 = arith.constant 0 : index
    %1018 = vector.load %arg19[%c2_206, %c0_207] : memref<3x30xf32, #tpu.memory_space<vmem>>, vector<1x30xf32>
    %1019 = vector.broadcast %1018 : vector<1x30xf32> to vector<8x30xf32>
    %1020 = arith.mulf %1017, %1019 : vector<8x30xf32>
    %1021 = arith.addf %1010, %1020 : vector<8x30xf32>
    %cst_208 = arith.constant dense<0.000000e+00> : vector<8xf32>
    %1022 = vector.multi_reduction <add>, %1021, %cst_208 [1] : vector<8x30xf32> to vector<8xf32>
    %1023 = vector.shape_cast %1022 : vector<8xf32> to vector<8x1xf32>
    %c0_209 = arith.constant 0 : index
    %c0_210 = arith.constant 0 : index
    %1024 = vector.load %arg20[%c0_209, %c0_210] : memref<1x1xf32, #tpu.memory_space<vmem>>, vector<1x1xf32>
    %1025 = vector.broadcast %1024 : vector<1x1xf32> to vector<8x1xf32>
    %1026 = arith.addf %1023, %1025 : vector<8x1xf32>
    %c0_211 = arith.constant 0 : index
    %c0_212 = arith.constant 0 : index
    %1027 = vector.load %arg21[%c0_211, %c0_212] : memref<8x1xf32, #tpu.memory_space<vmem>>, vector<8x1xf32>
    tpu.vector_store %arg21[%c0_211, %c0_212], %1026 {strides = array<i32>} : memref<8x1xf32, #tpu.memory_space<vmem>>, vector<8x1xf32>,
    return
  }
  func.func @transform_0(%arg0: i32) -> (i32, i32, i32, i32) {
    %c0_i32 = arith.constant 0 : i32
    %c0_i32_0 = arith.constant 0 : i32
    %c0_i32_1 = arith.constant 0 : i32
    %c0_i32_2 = arith.constant 0 : i32
    return %c0_i32, %c0_i32_0, %arg0, %c0_i32_1 : i32, i32, i32, i32
  }
  func.func @transform_1(%arg0: i32) -> (i32, i32, i32) {
    %c0_i32 = arith.constant 0 : i32
    %c0_i32_0 = arith.constant 0 : i32
    %c0_i32_1 = arith.constant 0 : i32
    %c0_i32_2 = arith.constant 0 : i32
    return %c0_i32, %c0_i32_0, %c0_i32_1 : i32, i32, i32
  }
  func.func @transform_2(%arg0: i32) -> (i32, i32, i32) {
    %c0_i32 = arith.constant 0 : i32
    %c0_i32_0 = arith.constant 0 : i32
    %c0_i32_1 = arith.constant 0 : i32
    %c0_i32_2 = arith.constant 0 : i32
    return %c0_i32, %c0_i32_0, %c0_i32_1 : i32, i32, i32
  }
  func.func @transform_3(%arg0: i32) -> (i32, i32) {
    %c0_i32 = arith.constant 0 : i32
    %c0_i32_0 = arith.constant 0 : i32
    %c0_i32_1 = arith.constant 0 : i32
    return %c0_i32, %c0_i32_0 : i32, i32
  }
  func.func @transform_4(%arg0: i32) -> (i32, i32) {
    %c0_i32 = arith.constant 0 : i32
    %c0_i32_0 = arith.constant 0 : i32
    %c0_i32_1 = arith.constant 0 : i32
    return %c0_i32, %c0_i32_0 : i32, i32
  }
  func.func @transform_5(%arg0: i32) -> (i32, i32) {
    %c0_i32 = arith.constant 0 : i32
    %c0_i32_0 = arith.constant 0 : i32
    %c0_i32_1 = arith.constant 0 : i32
    return %c0_i32, %c0_i32_0 : i32, i32
  }
  func.func @transform_6(%arg0: i32) -> (i32, i32) {
    %c0_i32 = arith.constant 0 : i32
    %c0_i32_0 = arith.constant 0 : i32
    %c0_i32_1 = arith.constant 0 : i32
    return %c0_i32, %c0_i32_0 : i32, i32
  }
  func.func @transform_7(%arg0: i32) -> (i32, i32) {
    %c0_i32 = arith.constant 0 : i32
    %c0_i32_0 = arith.constant 0 : i32
    %c0_i32_1 = arith.constant 0 : i32
    return %c0_i32, %c0_i32_0 : i32, i32
  }
  func.func @transform_8(%arg0: i32) -> (i32, i32) {
    %c0_i32 = arith.constant 0 : i32
    %c0_i32_0 = arith.constant 0 : i32
    %c0_i32_1 = arith.constant 0 : i32
    return %c0_i32, %c0_i32_0 : i32, i32
  }
  func.func @transform_9(%arg0: i32) -> (i32, i32) {
    %c0_i32 = arith.constant 0 : i32
    %c0_i32_0 = arith.constant 0 : i32
    %c0_i32_1 = arith.constant 0 : i32
    return %c0_i32, %c0_i32_0 : i32, i32
  }
  func.func @transform_10(%arg0: i32) -> (i32, i32) {
    %c0_i32 = arith.constant 0 : i32
    %c0_i32_0 = arith.constant 0 : i32
    %c0_i32_1 = arith.constant 0 : i32
    return %c0_i32, %c0_i32_0 : i32, i32
  }
  func.func @transform_11(%arg0: i32) -> (i32, i32) {
    %c0_i32 = arith.constant 0 : i32
    %c0_i32_0 = arith.constant 0 : i32
    %c0_i32_1 = arith.constant 0 : i32
    return %c0_i32, %c0_i32_0 : i32, i32
  }
  func.func @transform_12(%arg0: i32) -> (i32, i32) {
    %c0_i32 = arith.constant 0 : i32
    %c0_i32_0 = arith.constant 0 : i32
    %c0_i32_1 = arith.constant 0 : i32
    return %c0_i32, %c0_i32_0 : i32, i32
  }
  func.func @transform_13(%arg0: i32) -> (i32, i32, i32) {
    %c0_i32 = arith.constant 0 : i32
    %c0_i32_0 = arith.constant 0 : i32
    %c0_i32_1 = arith.constant 0 : i32
    %c0_i32_2 = arith.constant 0 : i32
    return %c0_i32, %c0_i32_0, %c0_i32_1 : i32, i32, i32
  }
  func.func @transform_14(%arg0: i32) -> (i32, i32, i32) {
    %c0_i32 = arith.constant 0 : i32
    %c0_i32_0 = arith.constant 0 : i32
    %c0_i32_1 = arith.constant 0 : i32
    %c0_i32_2 = arith.constant 0 : i32
    return %c0_i32, %c0_i32_0, %c0_i32_1 : i32, i32, i32
  }
  func.func @transform_15(%arg0: i32) -> (i32, i32) {
    %c0_i32 = arith.constant 0 : i32
    %c0_i32_0 = arith.constant 0 : i32
    %c0_i32_1 = arith.constant 0 : i32
    return %c0_i32, %c0_i32_0 : i32, i32
  }
  func.func @transform_16(%arg0: i32) -> (i32, i32) {
    %c0_i32 = arith.constant 0 : i32
    %c0_i32_0 = arith.constant 0 : i32
    %c0_i32_1 = arith.constant 0 : i32
    return %c0_i32, %c0_i32_0 : i32, i32
  }
  func.func @transform_17(%arg0: i32) -> (i32, i32) {
    %c0_i32 = arith.constant 0 : i32
    %c0_i32_0 = arith.constant 0 : i32
    %c0_i32_1 = arith.constant 0 : i32
    return %c0_i32, %c0_i32_0 : i32, i32
  }
  func.func @transform_18(%arg0: i32) -> (i32, i32) {
    %c0_i32 = arith.constant 0 : i32
    %c0_i32_0 = arith.constant 0 : i32
    %c0_i32_1 = arith.constant 0 : i32
    return %c0_i32, %c0_i32_0 : i32, i32
  }
  func.func @transform_19(%arg0: i32) -> (i32, i32) {
    %c0_i32 = arith.constant 0 : i32
    %c0_i32_0 = arith.constant 0 : i32
    %c0_i32_1 = arith.constant 0 : i32
    return %c0_i32, %c0_i32_0 : i32, i32
  }
  func.func @transform_20(%arg0: i32) -> (i32, i32) {
    %c0_i32 = arith.constant 0 : i32
    %c0_i32_0 = arith.constant 0 : i32
    return %arg0, %c0_i32 : i32, i32
  }
}

</mosaic_0001>

<llo_original>
// kernel: _lambda_.1
$region0: #{_lambda_.1}
  #allocation0 [shape = 'u32[]', space=smem, size = 0x4, offset = 0x4, fixed_abs, tag = 'smem constant byte address 0x4 - core index']
  #allocation1 [shape = 'u32[144,128]{1,0:T(1,128)}', space=vmem, size = 0x12000, scoped, tag = 'internal scratch']
  #allocation2 [shape = 'f32[1,1]{1,0:T(1,128)S(1)}', space=vmem, size = 0x200, scoped, tag = 'scoped memory for _lambda_.1']
  %s0 = inlined_call_operand.hbm [shape: f32[3,10,16,4], index: 0, kind: input, shape index: {}]
  %s1 = inlined_call_operand.hbm [shape: f32[7,3,1], index: 1, kind: input, shape index: {}]
  %s2 = inlined_call_operand.hbm [shape: f32[7,3,1], index: 2, kind: input, shape index: {}]
  %s3 = inlined_call_operand.hbm [shape: f32[40,28], index: 3, kind: input, shape index: {}]
  %s4 = inlined_call_operand.hbm [shape: f32[1,28], index: 4, kind: input, shape index: {}]
  %s5 = inlined_call_operand.hbm [shape: f32[60,30], index: 5, kind: input, shape index: {}]
  %s6 = inlined_call_operand.hbm [shape: f32[1,30], index: 6, kind: input, shape index: {}]
  %s7 = inlined_call_operand.hbm [shape: f32[30,15], index: 7, kind: input, shape index: {}]
  %s8 = inlined_call_operand.hbm [shape: f32[1,15], index: 8, kind: input, shape index: {}]
  %s9 = inlined_call_operand.hbm [shape: f32[15,7], index: 9, kind: input, shape index: {}]
  %s10 = inlined_call_operand.hbm [shape: f32[1,7], index: 10, kind: input, shape index: {}]
  %s11 = inlined_call_operand.hbm [shape: f32[7,3], index: 11, kind: input, shape index: {}]
  %s12 = inlined_call_operand.hbm [shape: f32[1,3], index: 12, kind: input, shape index: {}]
  %s13 = inlined_call_operand.hbm [shape: f32[6,3,1], index: 13, kind: input, shape index: {}]
  %s14 = inlined_call_operand.hbm [shape: f32[6,3,1], index: 14, kind: input, shape index: {}]
  %s15 = inlined_call_operand.hbm [shape: f32[3,120], index: 15, kind: input, shape index: {}]
  %s16 = inlined_call_operand.hbm [shape: f32[30,120], index: 16, kind: input, shape index: {}]
  %s17 = inlined_call_operand.hbm [shape: f32[1,120], index: 17, kind: input, shape index: {}]
  %s18 = inlined_call_operand.hbm [shape: f32[3,30], index: 18, kind: input, shape index: {}]
  %s19 = inlined_call_operand.<no memory space> [shape: f32[1,1], index: 19, kind: input, shape index: {}]
  %s20 = inlined_call_operand.hbm [shape: f32[16,1], index: 20, kind: output, shape index: {}]
  %s21 = sld [smem:[#allocation0]]
  $region189: #{_lambda_.1} parent=0
    _
  %s23 = ssub.s32 1, %s21
  %s24 = scalar_select 0, %s23, %s21
  %v25 = vstv %s19
  %26 = vst [vmem:[#allocation2] sm:$0x1] %v25
  $region1: #{_lambda_.1} parent=0
    #allocation3 [shape = 'u8[245760]{0}', space=vmem, size = 0x3c000, scoped, tag = 'input window, operand 0']
    #allocation4 [shape = 's32[2]{0}', space=sflag, size = 0x8, scoped, tag = 'scoped memory for _lambda_.1']
    #allocation5 [shape = 's32[2]{0}', space=sflag, size = 0x8, scoped, tag = 'scoped memory for _lambda_.1']
    #allocation6 [shape = 'u8[14336]{0}', space=vmem, size = 0x3800, scoped, tag = 'input window, operand 1, single buffered']
    #allocation7 [shape = 's32[1]{0}', space=sflag, size = 0x4, scoped, tag = 'scoped memory for _lambda_.1']
    #allocation8 [shape = 'u8[14336]{0}', space=vmem, size = 0x3800, scoped, tag = 'input window, operand 2, single buffered']
    #allocation9 [shape = 'u8[20480]{0}', space=vmem, size = 0x5000, scoped, tag = 'input window, operand 3, single buffered']
    #allocation10 [shape = 's32[1]{0}', space=sflag, size = 0x4, scoped, tag = 'scoped memory for _lambda_.1']
    #allocation11 [shape = 'u8[512]{0}', space=vmem, size = 0x400, scoped, tag = 'input window, operand 4, single buffered']
    #allocation12 [shape = 'u8[32768]{0}', space=vmem, size = 0x8000, scoped, tag = 'input window, operand 5, single buffered']
    #allocation13 [shape = 's32[1]{0}', space=sflag, size = 0x4, scoped, tag = 'scoped memory for _lambda_.1']
    #allocation14 [shape = 'u8[512]{0}', space=vmem, size = 0x400, scoped, tag = 'input window, operand 6, single buffered']
    #allocation15 [shape = 'u8[16384]{0}', space=vmem, size = 0x4000, scoped, tag = 'input window, operand 7, single buffered']
    #allocation16 [shape = 's32[1]{0}', space=sflag, size = 0x4, scoped, tag = 'scoped memory for _lambda_.1']
    #allocation17 [shape = 'u8[512]{0}', space=vmem, size = 0x400, scoped, tag = 'input window, operand 8, single buffered']
    #allocation18 [shape = 'u8[8192]{0}', space=vmem, size = 0x2000, scoped, tag = 'input window, operand 9, single buffered']
    #allocation19 [shape = 's32[1]{0}', space=sflag, size = 0x4, scoped, tag = 'scoped memory for _lambda_.1']
    #allocation20 [shape = 'u8[512]{0}', space=vmem, size = 0x400, scoped, tag = 'input window, operand 10, single buffered']
    #allocation21 [shape = 'u8[4096]{0}', space=vmem, size = 0x1000, scoped, tag = 'input window, operand 11, single buffered']
    #allocation22 [shape = 's32[1]{0}', space=sflag, size = 0x4, scoped, tag = 'scoped memory for _lambda_.1']
    #allocation23 [shape = 'u8[512]{0}', space=vmem, size = 0x400, scoped, tag = 'input window, operand 12, single buffered']
    #allocation24 [shape = 'u8[12288]{0}', space=vmem, size = 0x3000, scoped, tag = 'input window, operand 13, single buffered']
    #allocation25 [shape = 's32[1]{0}', space=sflag, size = 0x4, scoped, tag = 'scoped memory for _lambda_.1']
    #allocation26 [shape = 'u8[12288]{0}', space=vmem, size = 0x3000, scoped, tag = 'input window, operand 14, single buffered']
    #allocation27 [shape = 'u8[2048]{0}', space=vmem, size = 0x800, scoped, tag = 'input window, operand 15, single buffered']
    #allocation28 [shape = 's32[1]{0}', space=sflag, size = 0x4, scoped, tag = 'scoped memory for _lambda_.1']
    #allocation29 [shape = 'u8[16384]{0}', space=vmem, size = 0x4000, scoped, tag = 'input window, operand 16, single buffered']
    #allocation30 [shape = 'u8[512]{0}', space=vmem, size = 0x400, scoped, tag = 'input window, operand 17, single buffered']
    #allocation31 [shape = 's32[1]{0}', space=sflag, size = 0x4, scoped, tag = 'scoped memory for _lambda_.1']
    #allocation32 [shape = 'u8[2048]{0}', space=vmem, size = 0x800, scoped, tag = 'input window, operand 18, single buffered']
    #allocation33 [shape = 'u8[8192]{0}', space=vmem, size = 0x2000, scoped, tag = 'output window, operand 0']
    %27 = vsyncpa [#allocation4], 0
    %s28 = scalar_lea.sflag [#allocation4], 1
    %29 = vsyncpa %s28, 0
    %30 = vsyncpa [#allocation7], 0
    %31 = vsyncpa [#allocation10], 0
    %32 = vsyncpa [#allocation13], 0
    %33 = vsyncpa [#allocation16], 0
    %34 = vsyncpa [#allocation19], 0
    %35 = vsyncpa [#allocation22], 0
    %36 = vsyncpa [#allocation25], 0
    %37 = vsyncpa [#allocation28], 0
    %38 = vsyncpa [#allocation31], 0
    %39 = vsyncpa [#allocation5], 0
    %s40 = scalar_lea.sflag [#allocation5], 1
    %41 = vsyncpa %s40, 0
    loop: start=0, step=1, limit=4
    $region2: #{_lambda_.1} parent=1 // loop_pre_header
      _
    $region3: #{_lambda_.1} parent=1 // loop_header
      %s43 = sphi 0, %s47
      %p44 = scmp.ge.s32.totalorder %s43, 4
      %s53 = sphi 0, %s55
      %s56 = sphi 0, %s53
      %s57 = sphi 0, %s56
      %s73 = sphi 0, %s57
      %s77 = sphi 0, %s77
      %s79 = sphi 0, %s77
      %s80 = sphi 0, %s79
      %s94 = sphi 0, %s80
      %s98 = sphi 0, %s98
      %s100 = sphi 0, %s98
      %s101 = sphi 0, %s100
      %s115 = sphi 0, %s101
      %s119 = sphi 0, %s119
      %s121 = sphi 0, %s119
      %s122 = sphi 0, %s121
      %s136 = sphi 0, %s122
      %s140 = sphi 0, %s140
      %s142 = sphi 0, %s140
      %s143 = sphi 0, %s142
      %s157 = sphi 0, %s143
      %s161 = sphi 0, %s161
      %s163 = sphi 0, %s161
      %s164 = sphi 0, %s163
      %s178 = sphi 0, %s164
      %s182 = sphi 0, %s182
      %s184 = sphi 0, %s182
      %s185 = sphi 0, %s184
      %s199 = sphi 0, %s185
      %s203 = sphi 0, %s203
      %s205 = sphi 0, %s203
      %s206 = sphi 0, %s205
      %s220 = sphi 0, %s206
      %s224 = sphi 0, %s224
      %s226 = sphi 0, %s224
      %s227 = sphi 0, %s226
      %s241 = sphi 0, %s227
      %s245 = sphi 0, %s245
      %s247 = sphi 0, %s245
      %s248 = sphi 0, %s247
      %s262 = sphi 0, %s248
      %s266 = sphi 0, %s266
      %s268 = sphi 0, %s266
      %s269 = sphi 0, %s268
      %s283 = sphi 0, %s269
      %s287 = sphi 0, %s287
      %s289 = sphi 0, %s287
      %s290 = sphi 0, %s289
      %s304 = sphi 0, %s290
      %s308 = sphi 0, %s308
      %s310 = sphi 0, %s308
      %s311 = sphi 0, %s310
      %s325 = sphi 0, %s311
      %s329 = sphi 0, %s329
      %s331 = sphi 0, %s329
      %s332 = sphi 0, %s331
      %s346 = sphi 0, %s332
      %s350 = sphi 0, %s350
      %s352 = sphi 0, %s350
      %s353 = sphi 0, %s352
      %s367 = sphi 0, %s353
      %s371 = sphi 0, %s371
      %s373 = sphi 0, %s371
      %s374 = sphi 0, %s373
      %s388 = sphi 0, %s374
      %s392 = sphi 0, %s392
      %s394 = sphi 0, %s392
      %s395 = sphi 0, %s394
      %s409 = sphi 0, %s395
      %s413 = sphi 0, %s413
      %s415 = sphi 0, %s413
      %s416 = sphi 0, %s415
      %s430 = sphi 0, %s416
      %s434 = sphi 0, %s434
      %s436 = sphi 0, %s434
      %s437 = sphi 0, %s436
      %s451 = sphi 0, %s437
      %s455 = sphi 0, %s455
      %s457 = sphi 0, %s455
      %s458 = sphi 0, %s457
      %s472 = sphi 0, %s458
      %s478 = sphi 0, %s480
      %s481 = sphi 0, %s478
      %s482 = sphi 0, %s481
      %s498 = sphi 0, %s482
    $region4: #{_lambda_.1} parent=1 // loop_header_branch
      %46 = sbr.rel (%p44) target = $region8
    $region5: #{_lambda_.1} parent=1 // loop_body
      %s48 = ssub.s32 %s43, 1
      %s49 = ssub.s32 %s43, 2
      %s50 = sadd.s32 %s43, 1
      %s51 = ssub.s32 %s43, %s50
      %p52 = scmp.eq.s32.totalorder %s51, 0
      %s54 = sadd.s32 %s53, 1
      %s55 = scalar_select %p52, %s53, %s54
      %p58 = pneg %p52
      %p59 = scmp.eq.s32.totalorder %s43, 1
      %p60 = por %p58, %p59
      %p61 = scmp.ne.s32.totalorder %s53, %s56
      %p62 = scmp.eq.s32.totalorder %s43, 0
      %p63 = por %p61, %p62
      %p64 = scmp.ne.s32.totalorder %s53, %s56
      %p65 = scmp.eq.s32.totalorder %s48, 1
      %p66 = por %p64, %p65
      %p67 = scmp.ne.s32.totalorder %s56, %s57
      %p68 = scmp.eq.s32.totalorder %s48, 0
      %p69 = por %p67, %p68
      %p70 = scmp.ne.s32.totalorder %s56, %s57
      %p71 = scmp.eq.s32.totalorder %s49, 1
      %p72 = por %p70, %p71
      %p74 = scmp.ne.s32.totalorder %s57, %s73
      %p75 = scmp.eq.s32.totalorder %s49, 0
      %p76 = por %p74, %p75
      %s78 = sadd.s32 %s77, 1
      %p81 = scmp.eq.s32.totalorder %s43, 1
      %p82 = scmp.ne.s32.totalorder %s77, %s79
      %p83 = scmp.eq.s32.totalorder %s43, 0
      %p84 = por %p82, %p83
      %p85 = scmp.ne.s32.totalorder %s77, %s79
      %p86 = scmp.eq.s32.totalorder %s48, 1
      %p87 = por %p85, %p86
      %p88 = scmp.ne.s32.totalorder %s79, %s80
      %p89 = scmp.eq.s32.totalorder %s48, 0
      %p90 = por %p88, %p89
      %p91 = scmp.ne.s32.totalorder %s79, %s80
      %p92 = scmp.eq.s32.totalorder %s49, 1
      %p93 = por %p91, %p92
      %p95 = scmp.ne.s32.totalorder %s80, %s94
      %p96 = scmp.eq.s32.totalorder %s49, 0
      %p97 = por %p95, %p96
      %s99 = sadd.s32 %s98, 1
      %p102 = scmp.eq.s32.totalorder %s43, 1
      %p103 = scmp.ne.s32.totalorder %s98, %s100
      %p104 = scmp.eq.s32.totalorder %s43, 0
      %p105 = por %p103, %p104
      %p106 = scmp.ne.s32.totalorder %s98, %s100
      %p107 = scmp.eq.s32.totalorder %s48, 1
      %p108 = por %p106, %p107
      %p109 = scmp.ne.s32.totalorder %s100, %s101
      %p110 = scmp.eq.s32.totalorder %s48, 0
      %p111 = por %p109, %p110
      %p112 = scmp.ne.s32.totalorder %s100, %s101
      %p113 = scmp.eq.s32.totalorder %s49, 1
      %p114 = por %p112, %p113
      %p116 = scmp.ne.s32.totalorder %s101, %s115
      %p117 = scmp.eq.s32.totalorder %s49, 0
      %p118 = por %p116, %p117
      %s120 = sadd.s32 %s119, 1
      %p123 = scmp.eq.s32.totalorder %s43, 1
      %p124 = scmp.ne.s32.totalorder %s119, %s121
      %p125 = scmp.eq.s32.totalorder %s43, 0
      %p126 = por %p124, %p125
      %p127 = scmp.ne.s32.totalorder %s119, %s121
      %p128 = scmp.eq.s32.totalorder %s48, 1
      %p129 = por %p127, %p128
      %p130 = scmp.ne.s32.totalorder %s121, %s122
      %p131 = scmp.eq.s32.totalorder %s48, 0
      %p132 = por %p130, %p131
      %p133 = scmp.ne.s32.totalorder %s121, %s122
      %p134 = scmp.eq.s32.totalorder %s49, 1
      %p135 = por %p133, %p134
      %p137 = scmp.ne.s32.totalorder %s122, %s136
      %p138 = scmp.eq.s32.totalorder %s49, 0
      %p139 = por %p137, %p138
      %s141 = sadd.s32 %s140, 1
      %p144 = scmp.eq.s32.totalorder %s43, 1
      %p145 = scmp.ne.s32.totalorder %s140, %s142
      %p146 = scmp.eq.s32.totalorder %s43, 0
      %p147 = por %p145, %p146
      %p148 = scmp.ne.s32.totalorder %s140, %s142
      %p149 = scmp.eq.s32.totalorder %s48, 1
      %p150 = por %p148, %p149
      %p151 = scmp.ne.s32.totalorder %s142, %s143
      %p152 = scmp.eq.s32.totalorder %s48, 0
      %p153 = por %p151, %p152
      %p154 = scmp.ne.s32.totalorder %s142, %s143
      %p155 = scmp.eq.s32.totalorder %s49, 1
      %p156 = por %p154, %p155
      %p158 = scmp.ne.s32.totalorder %s143, %s157
      %p159 = scmp.eq.s32.totalorder %s49, 0
      %p160 = por %p158, %p159
      %s162 = sadd.s32 %s161, 1
      %p165 = scmp.eq.s32.totalorder %s43, 1
      %p166 = scmp.ne.s32.totalorder %s161, %s163
      %p167 = scmp.eq.s32.totalorder %s43, 0
      %p168 = por %p166, %p167
      %p169 = scmp.ne.s32.totalorder %s161, %s163
      %p170 = scmp.eq.s32.totalorder %s48, 1
      %p171 = por %p169, %p170
      %p172 = scmp.ne.s32.totalorder %s163, %s164
      %p173 = scmp.eq.s32.totalorder %s48, 0
      %p174 = por %p172, %p173
      %p175 = scmp.ne.s32.totalorder %s163, %s164
      %p176 = scmp.eq.s32.totalorder %s49, 1
      %p177 = por %p175, %p176
      %p179 = scmp.ne.s32.totalorder %s164, %s178
      %p180 = scmp.eq.s32.totalorder %s49, 0
      %p181 = por %p179, %p180
      %s183 = sadd.s32 %s182, 1
      %p186 = scmp.eq.s32.totalorder %s43, 1
      %p187 = scmp.ne.s32.totalorder %s182, %s184
      %p188 = scmp.eq.s32.totalorder %s43, 0
      %p189 = por %p187, %p188
      %p190 = scmp.ne.s32.totalorder %s182, %s184
      %p191 = scmp.eq.s32.totalorder %s48, 1
      %p192 = por %p190, %p191
      %p193 = scmp.ne.s32.totalorder %s184, %s185
      %p194 = scmp.eq.s32.totalorder %s48, 0
      %p195 = por %p193, %p194
      %p196 = scmp.ne.s32.totalorder %s184, %s185
      %p197 = scmp.eq.s32.totalorder %s49, 1
      %p198 = por %p196, %p197
      %p200 = scmp.ne.s32.totalorder %s185, %s199
      %p201 = scmp.eq.s32.totalorder %s49, 0
      %p202 = por %p200, %p201
      %s204 = sadd.s32 %s203, 1
      %p207 = scmp.eq.s32.totalorder %s43, 1
      %p208 = scmp.ne.s32.totalorder %s203, %s205
      %p209 = scmp.eq.s32.totalorder %s43, 0
      %p210 = por %p208, %p209
      %p211 = scmp.ne.s32.totalorder %s203, %s205
      %p212 = scmp.eq.s32.totalorder %s48, 1
      %p213 = por %p211, %p212
      %p214 = scmp.ne.s32.totalorder %s205, %s206
      %p215 = scmp.eq.s32.totalorder %s48, 0
      %p216 = por %p214, %p215
      %p217 = scmp.ne.s32.totalorder %s205, %s206
      %p218 = scmp.eq.s32.totalorder %s49, 1
      %p219 = por %p217, %p218
      %p221 = scmp.ne.s32.totalorder %s206, %s220
      %p222 = scmp.eq.s32.totalorder %s49, 0
      %p223 = por %p221, %p222
      %s225 = sadd.s32 %s224, 1
      %p228 = scmp.eq.s32.totalorder %s43, 1
      %p229 = scmp.ne.s32.totalorder %s224, %s226
      %p230 = scmp.eq.s32.totalorder %s43, 0
      %p231 = por %p229, %p230
      %p232 = scmp.ne.s32.totalorder %s224, %s226
      %p233 = scmp.eq.s32.totalorder %s48, 1
      %p234 = por %p232, %p233
      %p235 = scmp.ne.s32.totalorder %s226, %s227
      %p236 = scmp.eq.s32.totalorder %s48, 0
      %p237 = por %p235, %p236
      %p238 = scmp.ne.s32.totalorder %s226, %s227
      %p239 = scmp.eq.s32.totalorder %s49, 1
      %p240 = por %p238, %p239
      %p242 = scmp.ne.s32.totalorder %s227, %s241
      %p243 = scmp.eq.s32.totalorder %s49, 0
      %p244 = por %p242, %p243
      %s246 = sadd.s32 %s245, 1
      %p249 = scmp.eq.s32.totalorder %s43, 1
      %p250 = scmp.ne.s32.totalorder %s245, %s247
      %p251 = scmp.eq.s32.totalorder %s43, 0
      %p252 = por %p250, %p251
      %p253 = scmp.ne.s32.totalorder %s245, %s247
      %p254 = scmp.eq.s32.totalorder %s48, 1
      %p255 = por %p253, %p254
      %p256 = scmp.ne.s32.totalorder %s247, %s248
      %p257 = scmp.eq.s32.totalorder %s48, 0
      %p258 = por %p256, %p257
      %p259 = scmp.ne.s32.totalorder %s247, %s248
      %p260 = scmp.eq.s32.totalorder %s49, 1
      %p261 = por %p259, %p260
      %p263 = scmp.ne.s32.totalorder %s248, %s262
      %p264 = scmp.eq.s32.totalorder %s49, 0
      %p265 = por %p263, %p264
      %s267 = sadd.s32 %s266, 1
      %p270 = scmp.eq.s32.totalorder %s43, 1
      %p271 = scmp.ne.s32.totalorder %s266, %s268
      %p272 = scmp.eq.s32.totalorder %s43, 0
      %p273 = por %p271, %p272
      %p274 = scmp.ne.s32.totalorder %s266, %s268
      %p275 = scmp.eq.s32.totalorder %s48, 1
      %p276 = por %p274, %p275
      %p277 = scmp.ne.s32.totalorder %s268, %s269
      %p278 = scmp.eq.s32.totalorder %s48, 0
      %p279 = por %p277, %p278
      %p280 = scmp.ne.s32.totalorder %s268, %s269
      %p281 = scmp.eq.s32.totalorder %s49, 1
      %p282 = por %p280, %p281
      %p284 = scmp.ne.s32.totalorder %s269, %s283
      %p285 = scmp.eq.s32.totalorder %s49, 0
      %p286 = por %p284, %p285
      %s288 = sadd.s32 %s287, 1
      %p291 = scmp.eq.s32.totalorder %s43, 1
      %p292 = scmp.ne.s32.totalorder %s287, %s289
      %p293 = scmp.eq.s32.totalorder %s43, 0
      %p294 = por %p292, %p293
      %p295 = scmp.ne.s32.totalorder %s287, %s289
      %p296 = scmp.eq.s32.totalorder %s48, 1
      %p297 = por %p295, %p296
      %p298 = scmp.ne.s32.totalorder %s289, %s290
      %p299 = scmp.eq.s32.totalorder %s48, 0
      %p300 = por %p298, %p299
      %p301 = scmp.ne.s32.totalorder %s289, %s290
      %p302 = scmp.eq.s32.totalorder %s49, 1
      %p303 = por %p301, %p302
      %p305 = scmp.ne.s32.totalorder %s290, %s304
      %p306 = scmp.eq.s32.totalorder %s49, 0
      %p307 = por %p305, %p306
      %s309 = sadd.s32 %s308, 1
      %p312 = scmp.eq.s32.totalorder %s43, 1
      %p313 = scmp.ne.s32.totalorder %s308, %s310
      %p314 = scmp.eq.s32.totalorder %s43, 0
      %p315 = por %p313, %p314
      %p316 = scmp.ne.s32.totalorder %s308, %s310
      %p317 = scmp.eq.s32.totalorder %s48, 1
      %p318 = por %p316, %p317
      %p319 = scmp.ne.s32.totalorder %s310, %s311
      %p320 = scmp.eq.s32.totalorder %s48, 0
      %p321 = por %p319, %p320
      %p322 = scmp.ne.s32.totalorder %s310, %s311
      %p323 = scmp.eq.s32.totalorder %s49, 1
      %p324 = por %p322, %p323
      %p326 = scmp.ne.s32.totalorder %s311, %s325
      %p327 = scmp.eq.s32.totalorder %s49, 0
      %p328 = por %p326, %p327
      %s330 = sadd.s32 %s329, 1
      %p333 = scmp.eq.s32.totalorder %s43, 1
      %p334 = scmp.ne.s32.totalorder %s329, %s331
      %p335 = scmp.eq.s32.totalorder %s43, 0
      %p336 = por %p334, %p335
      %p337 = scmp.ne.s32.totalorder %s329, %s331
      %p338 = scmp.eq.s32.totalorder %s48, 1
      %p339 = por %p337, %p338
      %p340 = scmp.ne.s32.totalorder %s331, %s332
      %p341 = scmp.eq.s32.totalorder %s48, 0
      %p342 = por %p340, %p341
      %p343 = scmp.ne.s32.totalorder %s331, %s332
      %p344 = scmp.eq.s32.totalorder %s49, 1
      %p345 = por %p343, %p344
      %p347 = scmp.ne.s32.totalorder %s332, %s346
      %p348 = scmp.eq.s32.totalorder %s49, 0
      %p349 = por %p347, %p348
      %s351 = sadd.s32 %s350, 1
      %p354 = scmp.eq.s32.totalorder %s43, 1
      %p355 = scmp.ne.s32.totalorder %s350, %s352
      %p356 = scmp.eq.s32.totalorder %s43, 0
      %p357 = por %p355, %p356
      %p358 = scmp.ne.s32.totalorder %s350, %s352
      %p359 = scmp.eq.s32.totalorder %s48, 1
      %p360 = por %p358, %p359
      %p361 = scmp.ne.s32.totalorder %s352, %s353
      %p362 = scmp.eq.s32.totalorder %s48, 0
      %p363 = por %p361, %p362
      %p364 = scmp.ne.s32.totalorder %s352, %s353
      %p365 = scmp.eq.s32.totalorder %s49, 1
      %p366 = por %p364, %p365
      %p368 = scmp.ne.s32.totalorder %s353, %s367
      %p369 = scmp.eq.s32.totalorder %s49, 0
      %p370 = por %p368, %p369
      %s372 = sadd.s32 %s371, 1
      %p375 = scmp.eq.s32.totalorder %s43, 1
      %p376 = scmp.ne.s32.totalorder %s371, %s373
      %p377 = scmp.eq.s32.totalorder %s43, 0
      %p378 = por %p376, %p377
      %p379 = scmp.ne.s32.totalorder %s371, %s373
      %p380 = scmp.eq.s32.totalorder %s48, 1
      %p381 = por %p379, %p380
      %p382 = scmp.ne.s32.totalorder %s373, %s374
      %p383 = scmp.eq.s32.totalorder %s48, 0
      %p384 = por %p382, %p383
      %p385 = scmp.ne.s32.totalorder %s373, %s374
      %p386 = scmp.eq.s32.totalorder %s49, 1
      %p387 = por %p385, %p386
      %p389 = scmp.ne.s32.totalorder %s374, %s388
      %p390 = scmp.eq.s32.totalorder %s49, 0
      %p391 = por %p389, %p390
      %s393 = sadd.s32 %s392, 1
      %p396 = scmp.eq.s32.totalorder %s43, 1
      %p397 = scmp.ne.s32.totalorder %s392, %s394
      %p398 = scmp.eq.s32.totalorder %s43, 0
      %p399 = por %p397, %p398
      %p400 = scmp.ne.s32.totalorder %s392, %s394
      %p401 = scmp.eq.s32.totalorder %s48, 1
      %p402 = por %p400, %p401
      %p403 = scmp.ne.s32.totalorder %s394, %s395
      %p404 = scmp.eq.s32.totalorder %s48, 0
      %p405 = por %p403, %p404
      %p406 = scmp.ne.s32.totalorder %s394, %s395
      %p407 = scmp.eq.s32.totalorder %s49, 1
      %p408 = por %p406, %p407
      %p410 = scmp.ne.s32.totalorder %s395, %s409
      %p411 = scmp.eq.s32.totalorder %s49, 0
      %p412 = por %p410, %p411
      %s414 = sadd.s32 %s413, 1
      %p417 = scmp.eq.s32.totalorder %s43, 1
      %p418 = scmp.ne.s32.totalorder %s413, %s415
      %p419 = scmp.eq.s32.totalorder %s43, 0
      %p420 = por %p418, %p419
      %p421 = scmp.ne.s32.totalorder %s413, %s415
      %p422 = scmp.eq.s32.totalorder %s48, 1
      %p423 = por %p421, %p422
      %p424 = scmp.ne.s32.totalorder %s415, %s416
      %p425 = scmp.eq.s32.totalorder %s48, 0
      %p426 = por %p424, %p425
      %p427 = scmp.ne.s32.totalorder %s415, %s416
      %p428 = scmp.eq.s32.totalorder %s49, 1
      %p429 = por %p427, %p428
      %p431 = scmp.ne.s32.totalorder %s416, %s430
      %p432 = scmp.eq.s32.totalorder %s49, 0
      %p433 = por %p431, %p432
      %s435 = sadd.s32 %s434, 1
      %p438 = scmp.eq.s32.totalorder %s43, 1
      %p439 = scmp.ne.s32.totalorder %s434, %s436
      %p440 = scmp.eq.s32.totalorder %s43, 0
      %p441 = por %p439, %p440
      %p442 = scmp.ne.s32.totalorder %s434, %s436
      %p443 = scmp.eq.s32.totalorder %s48, 1
      %p444 = por %p442, %p443
      %p445 = scmp.ne.s32.totalorder %s436, %s437
      %p446 = scmp.eq.s32.totalorder %s48, 0
      %p447 = por %p445, %p446
      %p448 = scmp.ne.s32.totalorder %s436, %s437
      %p449 = scmp.eq.s32.totalorder %s49, 1
      %p450 = por %p448, %p449
      %p452 = scmp.ne.s32.totalorder %s437, %s451
      %p453 = scmp.eq.s32.totalorder %s49, 0
      %p454 = por %p452, %p453
      %s456 = sadd.s32 %s455, 1
      %p459 = scmp.eq.s32.totalorder %s43, 1
      %p460 = scmp.ne.s32.totalorder %s455, %s457
      %p461 = scmp.eq.s32.totalorder %s43, 0
      %p462 = por %p460, %p461
      %p463 = scmp.ne.s32.totalorder %s455, %s457
      %p464 = scmp.eq.s32.totalorder %s48, 1
      %p465 = por %p463, %p464
      %p466 = scmp.ne.s32.totalorder %s457, %s458
      %p467 = scmp.eq.s32.totalorder %s48, 0
      %p468 = por %p466, %p467
      %p469 = scmp.ne.s32.totalorder %s457, %s458
      %p470 = scmp.eq.s32.totalorder %s49, 1
      %p471 = por %p469, %p470
      %p473 = scmp.ne.s32.totalorder %s458, %s472
      %p474 = scmp.eq.s32.totalorder %s49, 0
      %p475 = por %p473, %p474
      %s476 = ssub.s32 %s43, %s50
      %p477 = scmp.eq.s32.totalorder %s476, 0
      %s479 = sadd.s32 %s478, 1
      %s480 = scalar_select %p477, %s478, %s479
      %p483 = pneg %p477
      %p484 = scmp.eq.s32.totalorder %s43, 1
      %p485 = por %p483, %p484
      %p486 = scmp.ne.s32.totalorder %s478, %s481
      %p487 = scmp.eq.s32.totalorder %s43, 0
      %p488 = por %p486, %p487
      %p489 = scmp.ne.s32.totalorder %s478, %s481
      %p490 = scmp.eq.s32.totalorder %s48, 1
      %p491 = por %p489, %p490
      %p492 = scmp.ne.s32.totalorder %s481, %s482
      %p493 = scmp.eq.s32.totalorder %s48, 0
      %p494 = por %p492, %p493
      %p495 = scmp.ne.s32.totalorder %s481, %s482
      %p496 = scmp.eq.s32.totalorder %s49, 1
      %p497 = por %p495, %p496
      %p499 = scmp.ne.s32.totalorder %s482, %s498
      %p500 = scmp.eq.s32.totalorder %s49, 0
      %p501 = por %p499, %p500
      %p502 = scmp.le.s32.totalorder 1, %s43
      %p503 = scmp.lt.s32.totalorder %s43, 3
      %p504 = pnand %p502, %p503
      %p505 = pneg %p504
      // Predicated region
      $region9: #{_lambda_.1} parent=5 // pred_check
        _
      $region10: #{_lambda_.1} parent=5 // pred_check_branch
        %507 = sbr.rel (%p504) target = $region12
      $region11: #{_lambda_.1} parent=5 // pred_region
        %s508 = ssub.s32 %s43, 1
        // Predicated region
        $region13: #{_lambda_.1} parent=11 // pred_check
          %p509 = pneg %p90
        $region14: #{_lambda_.1} parent=11 // pred_check_branch
          %511 = sbr.rel (%p509) target = $region16
        $region15: #{_lambda_.1} parent=11 // pred_region
          %s513 = ssub.s32 448, 448
          %514 = vsyncadd [#allocation7], %s513
          %s515 = sshll.u32 [#allocation6], 4
          %s516 = int_to_ptr.vmem [resolvable:$true] %s515
          %521 = dma.hbm_to_vmem [thread:$0]  %s1, 448, %s516, [#allocation7], 64, 64, 4
        $region16: #{_lambda_.1} parent=11 // pred_fallthru
          _
        // Predicated region
        $region17: #{_lambda_.1} parent=11 // pred_check
          %p522 = pneg %p111
        $region18: #{_lambda_.1} parent=11 // pred_check_branch
          %524 = sbr.rel (%p522) target = $region20
        $region19: #{_lambda_.1} parent=11 // pred_region
          %s526 = ssub.s32 448, 448
          %527 = vsyncadd [#allocation7], %s526
          %s528 = sshll.u32 [#allocation8], 4
          %s529 = int_to_ptr.vmem [resolvable:$true] %s528
          %534 = dma.hbm_to_vmem [thread:$0]  %s2, 448, %s529, [#allocation7], 64, 64, 4
        $region20: #{_lambda_.1} parent=11 // pred_fallthru
          _
        // Predicated region
        $region21: #{_lambda_.1} parent=11 // pred_check
          %p535 = pneg %p132
        $region22: #{_lambda_.1} parent=11 // pred_check_branch
          %537 = sbr.rel (%p535) target = $region24
        $region23: #{_lambda_.1} parent=11 // pred_region
          %s539 = ssub.s32 640, 640
          %540 = vsyncadd [#allocation10], %s539
          %s541 = sshll.u32 [#allocation9], 4
          %s542 = int_to_ptr.vmem [resolvable:$true] %s541
          %547 = dma.hbm_to_vmem [thread:$0]  %s3, 640, %s542, [#allocation10], 128, 128, 8
        $region24: #{_lambda_.1} parent=11 // pred_fallthru
          _
        // Predicated region
        $region25: #{_lambda_.1} parent=11 // pred_check
          %p548 = pneg %p153
        $region26: #{_lambda_.1} parent=11 // pred_check_branch
          %550 = sbr.rel (%p548) target = $region28
        $region27: #{_lambda_.1} parent=11 // pred_region
          %s552 = ssub.s32 16, 16
          %553 = vsyncadd [#allocation10], %s552
          %s555 = sshll.u32 [#allocation11], 4
          %s556 = int_to_ptr.vmem [resolvable:$true] %s555
          %558 = dma.hbm_to_vmem [thread:$0]  %s4, 16, %s556, [#allocation10]
        $region28: #{_lambda_.1} parent=11 // pred_fallthru
          _
        // Predicated region
        $region29: #{_lambda_.1} parent=11 // pred_check
          %p559 = pneg %p174
        $region30: #{_lambda_.1} parent=11 // pred_check_branch
          %561 = sbr.rel (%p559) target = $region32
        $region31: #{_lambda_.1} parent=11 // pred_region
          %s563 = ssub.s32 1024, 1024
          %564 = vsyncadd [#allocation13], %s563
          %s565 = sshll.u32 [#allocation12], 4
          %s566 = int_to_ptr.vmem [resolvable:$true] %s565
          %571 = dma.hbm_to_vmem [thread:$0]  %s5, 1024, %s566, [#allocation13], 128, 128, 8
        $region32: #{_lambda_.1} parent=11 // pred_fallthru
          _
        // Predicated region
        $region33: #{_lambda_.1} parent=11 // pred_check
          %p572 = pneg %p195
        $region34: #{_lambda_.1} parent=11 // pred_check_branch
          %574 = sbr.rel (%p572) target = $region36
        $region35: #{_lambda_.1} parent=11 // pred_region
          %s576 = ssub.s32 16, 16
          %577 = vsyncadd [#allocation13], %s576
          %s579 = sshll.u32 [#allocation14], 4
          %s580 = int_to_ptr.vmem [resolvable:$true] %s579
          %582 = dma.hbm_to_vmem [thread:$0]  %s6, 16, %s580, [#allocation13]
        $region36: #{_lambda_.1} parent=11 // pred_fallthru
          _
        // Predicated region
        $region37: #{_lambda_.1} parent=11 // pred_check
          %p583 = pneg %p216
        $region38: #{_lambda_.1} parent=11 // pred_check_branch
          %585 = sbr.rel (%p583) target = $region40
        $region39: #{_lambda_.1} parent=11 // pred_region
          %s587 = ssub.s32 512, 512
          %588 = vsyncadd [#allocation16], %s587
          %s589 = sshll.u32 [#allocation15], 4
          %s590 = int_to_ptr.vmem [resolvable:$true] %s589
          %595 = dma.hbm_to_vmem [thread:$0]  %s7, 512, %s590, [#allocation16], 128, 128, 8
        $region40: #{_lambda_.1} parent=11 // pred_fallthru
          _
        // Predicated region
        $region41: #{_lambda_.1} parent=11 // pred_check
          %p596 = pneg %p237
        $region42: #{_lambda_.1} parent=11 // pred_check_branch
          %598 = sbr.rel (%p596) target = $region44
        $region43: #{_lambda_.1} parent=11 // pred_region
          %s600 = ssub.s32 16, 16
          %601 = vsyncadd [#allocation16], %s600
          %s603 = sshll.u32 [#allocation17], 4
          %s604 = int_to_ptr.vmem [resolvable:$true] %s603
          %606 = dma.hbm_to_vmem [thread:$0]  %s8, 16, %s604, [#allocation16]
        $region44: #{_lambda_.1} parent=11 // pred_fallthru
          _
        // Predicated region
        $region45: #{_lambda_.1} parent=11 // pred_check
          %p607 = pneg %p258
        $region46: #{_lambda_.1} parent=11 // pred_check_branch
          %609 = sbr.rel (%p607) target = $region48
        $region47: #{_lambda_.1} parent=11 // pred_region
          %s611 = ssub.s32 256, 256
          %612 = vsyncadd [#allocation19], %s611
          %s613 = sshll.u32 [#allocation18], 4
          %s614 = int_to_ptr.vmem [resolvable:$true] %s613
          %619 = dma.hbm_to_vmem [thread:$0]  %s9, 256, %s614, [#allocation19], 128, 128, 8
        $region48: #{_lambda_.1} parent=11 // pred_fallthru
          _
        // Predicated region
        $region49: #{_lambda_.1} parent=11 // pred_check
          %p620 = pneg %p279
        $region50: #{_lambda_.1} parent=11 // pred_check_branch
          %622 = sbr.rel (%p620) target = $region52
        $region51: #{_lambda_.1} parent=11 // pred_region
          %s624 = ssub.s32 16, 16
          %625 = vsyncadd [#allocation19], %s624
          %s627 = sshll.u32 [#allocation20], 4
          %s628 = int_to_ptr.vmem [resolvable:$true] %s627
          %630 = dma.hbm_to_vmem [thread:$0]  %s10, 16, %s628, [#allocation19]
        $region52: #{_lambda_.1} parent=11 // pred_fallthru
          _
        // Predicated region
        $region53: #{_lambda_.1} parent=11 // pred_check
          %p631 = pneg %p300
        $region54: #{_lambda_.1} parent=11 // pred_check_branch
          %633 = sbr.rel (%p631) target = $region56
        $region55: #{_lambda_.1} parent=11 // pred_region
          %s635 = ssub.s32 128, 128
          %636 = vsyncadd [#allocation22], %s635
          %s638 = sshll.u32 [#allocation21], 4
          %s639 = int_to_ptr.vmem [resolvable:$true] %s638
          %641 = dma.hbm_to_vmem [thread:$0]  %s11, 128, %s639, [#allocation22]
        $region56: #{_lambda_.1} parent=11 // pred_fallthru
          _
        // Predicated region
        $region57: #{_lambda_.1} parent=11 // pred_check
          %p642 = pneg %p321
        $region58: #{_lambda_.1} parent=11 // pred_check_branch
          %644 = sbr.rel (%p642) target = $region60
        $region59: #{_lambda_.1} parent=11 // pred_region
          %s646 = ssub.s32 16, 16
          %647 = vsyncadd [#allocation22], %s646
          %s649 = sshll.u32 [#allocation23], 4
          %s650 = int_to_ptr.vmem [resolvable:$true] %s649
          %652 = dma.hbm_to_vmem [thread:$0]  %s12, 16, %s650, [#allocation22]
        $region60: #{_lambda_.1} parent=11 // pred_fallthru
          _
        // Predicated region
        $region61: #{_lambda_.1} parent=11 // pred_check
          %p653 = pneg %p342
        $region62: #{_lambda_.1} parent=11 // pred_check_branch
          %655 = sbr.rel (%p653) target = $region64
        $region63: #{_lambda_.1} parent=11 // pred_region
          %s657 = ssub.s32 384, 384
          %658 = vsyncadd [#allocation25], %s657
          %s659 = sshll.u32 [#allocation24], 4
          %s660 = int_to_ptr.vmem [resolvable:$true] %s659
          %665 = dma.hbm_to_vmem [thread:$0]  %s13, 384, %s660, [#allocation25], 64, 64, 4
        $region64: #{_lambda_.1} parent=11 // pred_fallthru
          _
        // Predicated region
        $region65: #{_lambda_.1} parent=11 // pred_check
          %p666 = pneg %p363
        $region66: #{_lambda_.1} parent=11 // pred_check_branch
          %668 = sbr.rel (%p666) target = $region68
        $region67: #{_lambda_.1} parent=11 // pred_region
          %s670 = ssub.s32 384, 384
          %671 = vsyncadd [#allocation25], %s670
          %s672 = sshll.u32 [#allocation26], 4
          %s673 = int_to_ptr.vmem [resolvable:$true] %s672
          %678 = dma.hbm_to_vmem [thread:$0]  %s14, 384, %s673, [#allocation25], 64, 64, 4
        $region68: #{_lambda_.1} parent=11 // pred_fallthru
          _
        // Predicated region
        $region69: #{_lambda_.1} parent=11 // pred_check
          %p679 = pneg %p384
        $region70: #{_lambda_.1} parent=11 // pred_check_branch
          %681 = sbr.rel (%p679) target = $region72
        $region71: #{_lambda_.1} parent=11 // pred_region
          %s683 = ssub.s32 64, 64
          %684 = vsyncadd [#allocation28], %s683
          %s686 = sshll.u32 [#allocation27], 4
          %s687 = int_to_ptr.vmem [resolvable:$true] %s686
          %689 = dma.hbm_to_vmem [thread:$0]  %s15, 64, %s687, [#allocation28]
        $region72: #{_lambda_.1} parent=11 // pred_fallthru
          _
        // Predicated region
        $region73: #{_lambda_.1} parent=11 // pred_check
          %p690 = pneg %p405
        $region74: #{_lambda_.1} parent=11 // pred_check_branch
          %692 = sbr.rel (%p690) target = $region76
        $region75: #{_lambda_.1} parent=11 // pred_region
          %s694 = ssub.s32 512, 512
          %695 = vsyncadd [#allocation28], %s694
          %s696 = sshll.u32 [#allocation29], 4
          %s697 = int_to_ptr.vmem [resolvable:$true] %s696
          %702 = dma.hbm_to_vmem [thread:$0]  %s16, 512, %s697, [#allocation28], 128, 128, 8
        $region76: #{_lambda_.1} parent=11 // pred_fallthru
          _
        // Predicated region
        $region77: #{_lambda_.1} parent=11 // pred_check
          %p703 = pneg %p426
        $region78: #{_lambda_.1} parent=11 // pred_check_branch
          %705 = sbr.rel (%p703) target = $region80
        $region79: #{_lambda_.1} parent=11 // pred_region
          %s707 = ssub.s32 16, 16
          %708 = vsyncadd [#allocation31], %s707
          %s710 = sshll.u32 [#allocation30], 4
          %s711 = int_to_ptr.vmem [resolvable:$true] %s710
          %713 = dma.hbm_to_vmem [thread:$0]  %s17, 16, %s711, [#allocation31]
        $region80: #{_lambda_.1} parent=11 // pred_fallthru
          _
        // Predicated region
        $region81: #{_lambda_.1} parent=11 // pred_check
          %p714 = pneg %p447
        $region82: #{_lambda_.1} parent=11 // pred_check_branch
          %716 = sbr.rel (%p714) target = $region84
        $region83: #{_lambda_.1} parent=11 // pred_region
          %s718 = ssub.s32 64, 64
          %719 = vsyncadd [#allocation31], %s718
          %s721 = sshll.u32 [#allocation32], 4
          %s722 = int_to_ptr.vmem [resolvable:$true] %s721
          %724 = dma.hbm_to_vmem [thread:$0]  %s18, 64, %s722, [#allocation31]
        $region84: #{_lambda_.1} parent=11 // pred_fallthru
          _
        // Predicated region
        $region85: #{_lambda_.1} parent=11 // pred_check
          %p725 = pneg %p468
        $region86: #{_lambda_.1} parent=11 // pred_check_branch
          %727 = sbr.rel (%p725) target = $region88
        $region87: #{_lambda_.1} parent=11 // pred_region
          _
        $region88: #{_lambda_.1} parent=11 // pred_fallthru
          _
      $region12: #{_lambda_.1} parent=5 // pred_fallthru
        _
      %p728 = scmp.lt.s32.totalorder %s43, 2
      // Predicated region
      $region89: #{_lambda_.1} parent=5 // pred_check
        %p729 = pneg %p728
      $region90: #{_lambda_.1} parent=5 // pred_check_branch
        %731 = sbr.rel (%p729) target = $region92
      $region91: #{_lambda_.1} parent=5 // pred_region
        // Predicated region
        $region93: #{_lambda_.1} parent=91 // pred_check
          %p732 = pneg %p63
        $region94: #{_lambda_.1} parent=91 // pred_check_branch
          %734 = sbr.rel (%p732) target = $region96
        $region95: #{_lambda_.1} parent=91 // pred_region
          %s735 = sand.u32 %s53, 1
          %s736 = scalar_lea.sflag [#allocation4], %s735
          %s737 = sand.u32 %s53, 1
          %s738 = smul.addr %s737, 240
          %s739 = scalar_lea.vmem [#allocation3], %s738
          %s741 = ssub.s32 3840, 3840
          %742 = vsyncadd %s736, %s741
          %s743 = smul.addr %s43, 128
          %s744 = scalar_lea.hbm %s0, %s743
          %s745 = sshll.u32 %s739, 4
          %s746 = int_to_ptr.vmem [resolvable:$true] %s745
          %751 = dma.hbm_to_vmem [thread:$0]  %s744, 3840, %s746, %s736, 256, 128, 8
        $region96: #{_lambda_.1} parent=91 // pred_fallthru
          _
      $region92: #{_lambda_.1} parent=5 // pred_fallthru
        _
      %p752 = scmp.le.s32.totalorder 1, %s43
      %p753 = scmp.lt.s32.totalorder %s43, 3
      %p754 = pnand %p752, %p753
      %p755 = pneg %p754
      // Predicated region
      $region97: #{_lambda_.1} parent=5 // pred_check
        _
      $region98: #{_lambda_.1} parent=5 // pred_check_branch
        %757 = sbr.rel (%p754) target = $region100
      $region99: #{_lambda_.1} parent=5 // pred_region
        %s758 = ssub.s32 %s43, 1
        %s759 = sand.u32 %s56, 1
        %s760 = scalar_lea.sflag [#allocation4], %s759
        %s761 = sand.u32 %s56, 1
        %s762 = smul.addr %s761, 240
        %s763 = scalar_lea.vmem [#allocation3], %s762
        // Predicated region
        $region101: #{_lambda_.1} parent=99 // pred_check
          %p764 = pneg %p69
        $region102: #{_lambda_.1} parent=99 // pred_check_branch
          %766 = sbr.rel (%p764) target = $region104
        $region103: #{_lambda_.1} parent=99 // pred_region
          %767 = dma.done %s760, 3840
        $region104: #{_lambda_.1} parent=99 // pred_fallthru
          _
        // Predicated region
        $region105: #{_lambda_.1} parent=99 // pred_check
          %p768 = pneg %p90
        $region106: #{_lambda_.1} parent=99 // pred_check_branch
          %770 = sbr.rel (%p768) target = $region108
        $region107: #{_lambda_.1} parent=99 // pred_region
          %771 = dma.done [#allocation7], 448
        $region108: #{_lambda_.1} parent=99 // pred_fallthru
          _
        // Predicated region
        $region109: #{_lambda_.1} parent=99 // pred_check
          %p772 = pneg %p111
        $region110: #{_lambda_.1} parent=99 // pred_check_branch
          %774 = sbr.rel (%p772) target = $region112
        $region111: #{_lambda_.1} parent=99 // pred_region
          %775 = dma.done [#allocation7], 448
        $region112: #{_lambda_.1} parent=99 // pred_fallthru
          _
        // Predicated region
        $region113: #{_lambda_.1} parent=99 // pred_check
          %p776 = pneg %p132
        $region114: #{_lambda_.1} parent=99 // pred_check_branch
          %778 = sbr.rel (%p776) target = $region116
        $region115: #{_lambda_.1} parent=99 // pred_region
          %779 = dma.done [#allocation10], 640
        $region116: #{_lambda_.1} parent=99 // pred_fallthru
          _
        // Predicated region
        $region117: #{_lambda_.1} parent=99 // pred_check
          %p780 = pneg %p153
        $region118: #{_lambda_.1} parent=99 // pred_check_branch
          %782 = sbr.rel (%p780) target = $region120
        $region119: #{_lambda_.1} parent=99 // pred_region
          %783 = dma.done [#allocation10], 16
        $region120: #{_lambda_.1} parent=99 // pred_fallthru
          _
        // Predicated region
        $region121: #{_lambda_.1} parent=99 // pred_check
          %p784 = pneg %p174
        $region122: #{_lambda_.1} parent=99 // pred_check_branch
          %786 = sbr.rel (%p784) target = $region124
        $region123: #{_lambda_.1} parent=99 // pred_region
          %787 = dma.done [#allocation13], 1024
        $region124: #{_lambda_.1} parent=99 // pred_fallthru
          _
        // Predicated region
        $region125: #{_lambda_.1} parent=99 // pred_check
          %p788 = pneg %p195
        $region126: #{_lambda_.1} parent=99 // pred_check_branch
          %790 = sbr.rel (%p788) target = $region128
        $region127: #{_lambda_.1} parent=99 // pred_region
          %791 = dma.done [#allocation13], 16
        $region128: #{_lambda_.1} parent=99 // pred_fallthru
          _
        // Predicated region
        $region129: #{_lambda_.1} parent=99 // pred_check
          %p792 = pneg %p216
        $region130: #{_lambda_.1} parent=99 // pred_check_branch
          %794 = sbr.rel (%p792) target = $region132
        $region131: #{_lambda_.1} parent=99 // pred_region
          %795 = dma.done [#allocation16], 512
        $region132: #{_lambda_.1} parent=99 // pred_fallthru
          _
        // Predicated region
        $region133: #{_lambda_.1} parent=99 // pred_check
          %p796 = pneg %p237
        $region134: #{_lambda_.1} parent=99 // pred_check_branch
          %798 = sbr.rel (%p796) target = $region136
        $region135: #{_lambda_.1} parent=99 // pred_region
          %799 = dma.done [#allocation16], 16
        $region136: #{_lambda_.1} parent=99 // pred_fallthru
          _
        // Predicated region
        $region137: #{_lambda_.1} parent=99 // pred_check
          %p800 = pneg %p258
        $region138: #{_lambda_.1} parent=99 // pred_check_branch
          %802 = sbr.rel (%p800) target = $region140
        $region139: #{_lambda_.1} parent=99 // pred_region
          %803 = dma.done [#allocation19], 256
        $region140: #{_lambda_.1} parent=99 // pred_fallthru
          _
        // Predicated region
        $region141: #{_lambda_.1} parent=99 // pred_check
          %p804 = pneg %p279
        $region142: #{_lambda_.1} parent=99 // pred_check_branch
          %806 = sbr.rel (%p804) target = $region144
        $region143: #{_lambda_.1} parent=99 // pred_region
          %807 = dma.done [#allocation19], 16
        $region144: #{_lambda_.1} parent=99 // pred_fallthru
          _
        // Predicated region
        $region145: #{_lambda_.1} parent=99 // pred_check
          %p808 = pneg %p300
        $region146: #{_lambda_.1} parent=99 // pred_check_branch
          %810 = sbr.rel (%p808) target = $region148
        $region147: #{_lambda_.1} parent=99 // pred_region
          %811 = dma.done [#allocation22], 128
        $region148: #{_lambda_.1} parent=99 // pred_fallthru
          _
        // Predicated region
        $region149: #{_lambda_.1} parent=99 // pred_check
          %p812 = pneg %p321
        $region150: #{_lambda_.1} parent=99 // pred_check_branch
          %814 = sbr.rel (%p812) target = $region152
        $region151: #{_lambda_.1} parent=99 // pred_region
          %815 = dma.done [#allocation22], 16
        $region152: #{_lambda_.1} parent=99 // pred_fallthru
          _
        // Predicated region
        $region153: #{_lambda_.1} parent=99 // pred_check
          %p816 = pneg %p342
        $region154: #{_lambda_.1} parent=99 // pred_check_branch
          %818 = sbr.rel (%p816) target = $region156
        $region155: #{_lambda_.1} parent=99 // pred_region
          %819 = dma.done [#allocation25], 384
        $region156: #{_lambda_.1} parent=99 // pred_fallthru
          _
        // Predicated region
        $region157: #{_lambda_.1} parent=99 // pred_check
          %p820 = pneg %p363
        $region158: #{_lambda_.1} parent=99 // pred_check_branch
          %822 = sbr.rel (%p820) target = $region160
        $region159: #{_lambda_.1} parent=99 // pred_region
          %823 = dma.done [#allocation25], 384
        $region160: #{_lambda_.1} parent=99 // pred_fallthru
          _
        // Predicated region
        $region161: #{_lambda_.1} parent=99 // pred_check
          %p824 = pneg %p384
        $region162: #{_lambda_.1} parent=99 // pred_check_branch
          %826 = sbr.rel (%p824) target = $region164
        $region163: #{_lambda_.1} parent=99 // pred_region
          %827 = dma.done [#allocation28], 64
        $region164: #{_lambda_.1} parent=99 // pred_fallthru
          _
        // Predicated region
        $region165: #{_lambda_.1} parent=99 // pred_check
          %p828 = pneg %p405
        $region166: #{_lambda_.1} parent=99 // pred_check_branch
          %830 = sbr.rel (%p828) target = $region168
        $region167: #{_lambda_.1} parent=99 // pred_region
          %831 = dma.done [#allocation28], 512
        $region168: #{_lambda_.1} parent=99 // pred_fallthru
          _
        // Predicated region
        $region169: #{_lambda_.1} parent=99 // pred_check
          %p832 = pneg %p426
        $region170: #{_lambda_.1} parent=99 // pred_check_branch
          %834 = sbr.rel (%p832) target = $region172
        $region171: #{_lambda_.1} parent=99 // pred_region
          %835 = dma.done [#allocation31], 16
        $region172: #{_lambda_.1} parent=99 // pred_fallthru
          _
        // Predicated region
        $region173: #{_lambda_.1} parent=99 // pred_check
          %p836 = pneg %p447
        $region174: #{_lambda_.1} parent=99 // pred_check_branch
          %838 = sbr.rel (%p836) target = $region176
        $region175: #{_lambda_.1} parent=99 // pred_region
          %839 = dma.done [#allocation31], 64
        $region176: #{_lambda_.1} parent=99 // pred_fallthru
          _
        %s840 = sand.u32 %s56, 1
        %s841 = scalar_lea.sflag [#allocation4], %s840
        %s842 = sand.u32 %s56, 1
        %s843 = smul.addr %s842, 240
        %s844 = scalar_lea.vmem [#allocation3], %s843
        %p845 = pneg %p69
        %p846 = pneg %p66
        %p847 = pneg %p90
        %p848 = pneg %p87
        %p849 = pneg %p111
        %p850 = pneg %p108
        %p851 = pneg %p132
        %p852 = pneg %p129
        %p853 = pneg %p153
        %p854 = pneg %p150
        %p855 = pneg %p174
        %p856 = pneg %p171
        %p857 = pneg %p195
        %p858 = pneg %p192
        %p859 = pneg %p216
        %p860 = pneg %p213
        %p861 = pneg %p237
        %p862 = pneg %p234
        %p863 = pneg %p258
        %p864 = pneg %p255
        %p865 = pneg %p279
        %p866 = pneg %p276
        %p867 = pneg %p300
        %p868 = pneg %p297
        %p869 = pneg %p321
        %p870 = pneg %p318
        %p871 = pneg %p342
        %p872 = pneg %p339
        %p873 = pneg %p363
        %p874 = pneg %p360
        %p875 = pneg %p384
        %p876 = pneg %p381
        %p877 = pneg %p405
        %p878 = pneg %p402
        %p879 = pneg %p426
        %p880 = pneg %p423
        %p881 = pneg %p447
        %p882 = pneg %p444
        %p883 = pneg %p468
        %p884 = pneg %p465
        %p885 = pneg %p494
        %p886 = pneg %p491
        %s887 = sand.u32 %s481, 1
        %s888 = scalar_lea.sflag [#allocation5], %s887
        %s889 = sand.u32 %s481, 1
        %s890 = smul.addr %s889, 8
        %s891 = scalar_lea.vmem [#allocation33], %s890
        %v892 = vld [vmem:[%s763] sm:$0xff]
        %v893 = vld [vmem:[%s763 + $0x8] sm:$0xff]
        %v894 = vld [vmem:[%s763 + $0x10] sm:$0xff]
        %v895 = vld [vmem:[%s763 + $0x18] sm:$0xff]
        %v896 = vld [vmem:[%s763 + $0x20] sm:$0xff]
        %v897 = vld [vmem:[%s763 + $0x28] sm:$0xff]
        %v898 = vld [vmem:[%s763 + $0x30] sm:$0xff]
        %v899 = vld [vmem:[%s763 + $0x38] sm:$0xff]
        %v900 = vld [vmem:[%s763 + $0x40] sm:$0xff]
        %v901 = vld [vmem:[%s763 + $0x48] sm:$0xff]
        %v902 = vld [vmem:[%s763 + $0x50] sm:$0xff]
        %v903 = vld [vmem:[%s763 + $0x58] sm:$0xff]
        %v904 = vld [vmem:[%s763 + $0x60] sm:$0xff]
        %v905 = vld [vmem:[%s763 + $0x68] sm:$0xff]
        %v906 = vld [vmem:[%s763 + $0x70] sm:$0xff]
        %v907 = vld [vmem:[%s763 + $0x78] sm:$0xff]
        %v908 = vld [vmem:[%s763 + $0x80] sm:$0xff]
        %v909 = vld [vmem:[%s763 + $0x88] sm:$0xff]
        %v910 = vld [vmem:[%s763 + $0x90] sm:$0xff]
        %v911 = vld [vmem:[%s763 + $0x98] sm:$0xff]
        %v912 = vld [vmem:[%s763 + $0xa0] sm:$0xff]
        %v913 = vld [vmem:[%s763 + $0xa8] sm:$0xff]
        %v914 = vld [vmem:[%s763 + $0xb0] sm:$0xff]
        %v915 = vld [vmem:[%s763 + $0xb8] sm:$0xff]
        %v916 = vld [vmem:[%s763 + $0xc0] sm:$0xff]
        %v917 = vld [vmem:[%s763 + $0xc8] sm:$0xff]
        %v918 = vld [vmem:[%s763 + $0xd0] sm:$0xff]
        %v919 = vld [vmem:[%s763 + $0xd8] sm:$0xff]
        %v920 = vld [vmem:[%s763 + $0xe0] sm:$0xff]
        %v921 = vld [vmem:[%s763 + $0xe8] sm:$0xff]
        %v922 = vadd.f32 %v892, %v893
        %v923 = vadd.f32 %v902, %v903
        %v924 = vadd.f32 %v912, %v913
        %v925 = vadd.f32 %v922, %v894
        %v926 = vadd.f32 %v923, %v904
        %v927 = vadd.f32 %v924, %v914
        %v928 = vadd.f32 %v925, %v895
        %v929 = vadd.f32 %v926, %v905
        %v930 = vadd.f32 %v927, %v915
        %v931 = vadd.f32 %v928, %v896
        %v932 = vadd.f32 %v929, %v906
        %v933 = vadd.f32 %v930, %v916
        %v934 = vadd.f32 %v931, %v897
        %v935 = vadd.f32 %v932, %v907
        %v936 = vadd.f32 %v933, %v917
        %v937 = vadd.f32 %v934, %v898
        %v938 = vadd.f32 %v935, %v908
        %v939 = vadd.f32 %v936, %v918
        %v940 = vadd.f32 %v937, %v899
        %v941 = vadd.f32 %v938, %v909
        %v942 = vadd.f32 %v939, %v919
        %v943 = vadd.f32 %v940, %v900
        %v944 = vadd.f32 %v941, %v910
        %v945 = vadd.f32 %v942, %v920
        %v946 = vadd.f32 %v943, %v901
        %v947 = vadd.f32 %v944, %v911
        %v948 = vadd.f32 %v945, %v921
        %v949 = vmul.f32 %v946, 0.1
        %v950 = vmul.f32 %v947, 0.1
        %v951 = vmul.f32 %v948, 0.1
        %v952 = vsub.f32 %v892, %v949
        %v953 = vsub.f32 %v893, %v949
        %v954 = vsub.f32 %v894, %v949
        %v955 = vsub.f32 %v895, %v949
        %v956 = vsub.f32 %v896, %v949
        %v957 = vsub.f32 %v897, %v949
        %v958 = vsub.f32 %v898, %v949
        %v959 = vsub.f32 %v899, %v949
        %v960 = vsub.f32 %v900, %v949
        %v961 = vsub.f32 %v901, %v949
        %v962 = vsub.f32 %v902, %v950
        %v963 = vsub.f32 %v903, %v950
        %v964 = vsub.f32 %v904, %v950
        %v965 = vsub.f32 %v905, %v950
        %v966 = vsub.f32 %v906, %v950
        %v967 = vsub.f32 %v907, %v950
        %v968 = vsub.f32 %v908, %v950
        %v969 = vsub.f32 %v909, %v950
        %v970 = vsub.f32 %v910, %v950
        %v971 = vsub.f32 %v911, %v950
        %v972 = vsub.f32 %v912, %v951
        %v973 = vsub.f32 %v913, %v951
        %v974 = vsub.f32 %v914, %v951
        %v975 = vsub.f32 %v915, %v951
        %v976 = vsub.f32 %v916, %v951
        %v977 = vsub.f32 %v917, %v951
        %v978 = vsub.f32 %v918, %v951
        %v979 = vsub.f32 %v919, %v951
        %v980 = vsub.f32 %v920, %v951
        %v981 = vsub.f32 %v921, %v951
        %v982 = vmul.f32 %v952, %v952
        %v983 = vmul.f32 %v953, %v953
        %v984 = vmul.f32 %v954, %v954
        %v985 = vmul.f32 %v955, %v955
        %v986 = vmul.f32 %v956, %v956
        %v987 = vmul.f32 %v957, %v957
        %v988 = vmul.f32 %v958, %v958
        %v989 = vmul.f32 %v959, %v959
        %v990 = vmul.f32 %v960, %v960
        %v991 = vmul.f32 %v961, %v961
        %v992 = vmul.f32 %v962, %v962
        %v993 = vmul.f32 %v963, %v963
        %v994 = vmul.f32 %v964, %v964
        %v995 = vmul.f32 %v965, %v965
        %v996 = vmul.f32 %v966, %v966
        %v997 = vmul.f32 %v967, %v967
        %v998 = vmul.f32 %v968, %v968
        %v999 = vmul.f32 %v969, %v969
        %v1000 = vmul.f32 %v970, %v970
        %v1001 = vmul.f32 %v971, %v971
        %v1002 = vmul.f32 %v972, %v972
        %v1003 = vmul.f32 %v973, %v973
        %v1004 = vmul.f32 %v974, %v974
        %v1005 = vmul.f32 %v975, %v975
        %v1006 = vmul.f32 %v976, %v976
        %v1007 = vmul.f32 %v977, %v977
        %v1008 = vmul.f32 %v978, %v978
        %v1009 = vmul.f32 %v979, %v979
        %v1010 = vmul.f32 %v980, %v980
        %v1011 = vmul.f32 %v981, %v981
        %v1012 = vadd.f32 %v982, %v983
        %v1013 = vadd.f32 %v992, %v993
        %v1014 = vadd.f32 %v1002, %v1003
        %v1015 = vadd.f32 %v1012, %v984
        %v1016 = vadd.f32 %v1013, %v994
        %v1017 = vadd.f32 %v1014, %v1004
        %v1018 = vadd.f32 %v1015, %v985
        %v1019 = vadd.f32 %v1016, %v995
        %v1020 = vadd.f32 %v1017, %v1005
        %v1021 = vadd.f32 %v1018, %v986
        %v1022 = vadd.f32 %v1019, %v996
        %v1023 = vadd.f32 %v1020, %v1006
        %v1024 = vadd.f32 %v1021, %v987
        %v1025 = vadd.f32 %v1022, %v997
        %v1026 = vadd.f32 %v1023, %v1007
        %v1027 = vadd.f32 %v1024, %v988
        %v1028 = vadd.f32 %v1025, %v998
        %v1029 = vadd.f32 %v1026, %v1008
        %v1030 = vadd.f32 %v1027, %v989
        %v1031 = vadd.f32 %v1028, %v999
        %v1032 = vadd.f32 %v1029, %v1009
        %v1033 = vadd.f32 %v1030, %v990
        %v1034 = vadd.f32 %v1031, %v1000
        %v1035 = vadd.f32 %v1032, %v1010
        %v1036 = vadd.f32 %v1033, %v991
        %v1037 = vadd.f32 %v1034, %v1001
        %v1038 = vadd.f32 %v1035, %v1011
        %v1039 = vmul.f32 %v1036, 0.11111111
        %v1040 = vmul.f32 %v1037, 0.11111111
        %v1041 = vmul.f32 %v1038, 0.11111111
        %v1042 = vrsqrt.pop %v1039
        %v1043 = vmul.f32 %v1039, %v1042
        %vm1044 = vcmp.eq.f32.partialorder %v1039, inf
        %v1045 = vsel %vm1044, %v1039, %v1043
        %vm1046 = vcmp.eq.f32.partialorder %v1039, 0.0
        %v1047 = vand.u32 %v1039, 2147483648
        %v1048 = vsel %vm1046, %v1047, %v1045
        %v1049 = vrsqrt.pop %v1040
        %v1050 = vmul.f32 %v1040, %v1049
        %vm1051 = vcmp.eq.f32.partialorder %v1040, inf
        %v1052 = vsel %vm1051, %v1040, %v1050
        %vm1053 = vcmp.eq.f32.partialorder %v1040, 0.0
        %v1054 = vand.u32 %v1040, 2147483648
        %v1055 = vsel %vm1053, %v1054, %v1052
        %v1056 = vrsqrt.pop %v1041
        %v1057 = vmul.f32 %v1041, %v1056
        %vm1058 = vcmp.eq.f32.partialorder %v1041, inf
        %v1059 = vsel %vm1058, %v1041, %v1057
        %vm1060 = vcmp.eq.f32.partialorder %v1041, 0.0
        %v1061 = vand.u32 %v1041, 2147483648
        %v1062 = vsel %vm1060, %v1061, %v1059
        %v1063 = vrcp.pop %v1048
        %v1064 = vmul.f32 %v949, %v1063
        %v1065 = vrcp.pop %v1055
        %v1066 = vmul.f32 %v950, %v1065
        %v1067 = vrcp.pop %v1062
        %v1068 = vmul.f32 %v951, %v1067
        %v1069 = vrcp.pop %v892
        %v1070 = vmul.f32 %v901, %v1069
        %v1071 = vrcp.pop %v902
        %v1072 = vmul.f32 %v911, %v1071
        %v1073 = vrcp.pop %v912
        %v1074 = vmul.f32 %v921, %v1073
        %v1075 = vsub.f32 %v1070, 1.0
        %v1076 = vsub.f32 %v1072, 1.0
        %v1077 = vsub.f32 %v1074, 1.0
        %v1078 = vmul.f32 %v892, 0.018181818
        %v1079 = vmul.f32 %v902, 0.018181818
        %v1080 = vmul.f32 %v912, 0.018181818
        %v1081 = vmul.f32 %v893, 0.036363635
        %v1082 = vmul.f32 %v903, 0.036363635
        %v1083 = vmul.f32 %v913, 0.036363635
        %v1084 = vadd.f32 %v1078, %v1081
        %v1085 = vadd.f32 %v1079, %v1082
        %v1086 = vadd.f32 %v1080, %v1083
        %v1087 = vmul.f32 %v894, 0.054545455
        %v1088 = vmul.f32 %v904, 0.054545455
        %v1089 = vmul.f32 %v914, 0.054545455
        %v1090 = vadd.f32 %v1084, %v1087
        %v1091 = vadd.f32 %v1085, %v1088
        %v1092 = vadd.f32 %v1086, %v1089
        %v1093 = vmul.f32 %v895, 0.07272727
        %v1094 = vmul.f32 %v905, 0.07272727
        %v1095 = vmul.f32 %v915, 0.07272727
        %v1096 = vadd.f32 %v1090, %v1093
        %v1097 = vadd.f32 %v1091, %v1094
        %v1098 = vadd.f32 %v1092, %v1095
        %v1099 = vmul.f32 %v896, 0.09090909
        %v1100 = vmul.f32 %v906, 0.09090909
        %v1101 = vmul.f32 %v916, 0.09090909
        %v1102 = vadd.f32 %v1096, %v1099
        %v1103 = vadd.f32 %v1097, %v1100
        %v1104 = vadd.f32 %v1098, %v1101
        %v1105 = vmul.f32 %v897, 0.10909091
        %v1106 = vmul.f32 %v907, 0.10909091
        %v1107 = vmul.f32 %v917, 0.10909091
        %v1108 = vadd.f32 %v1102, %v1105
        %v1109 = vadd.f32 %v1103, %v1106
        %v1110 = vadd.f32 %v1104, %v1107
        %v1111 = vmul.f32 %v898, 0.12727273
        %v1112 = vmul.f32 %v908, 0.12727273
        %v1113 = vmul.f32 %v918, 0.12727273
        %v1114 = vadd.f32 %v1108, %v1111
        %v1115 = vadd.f32 %v1109, %v1112
        %v1116 = vadd.f32 %v1110, %v1113
        %v1117 = vmul.f32 %v899, 0.14545454
        %v1118 = vmul.f32 %v909, 0.14545454
        %v1119 = vmul.f32 %v919, 0.14545454
        %v1120 = vadd.f32 %v1114, %v1117
        %v1121 = vadd.f32 %v1115, %v1118
        %v1122 = vadd.f32 %v1116, %v1119
        %v1123 = vmul.f32 %v900, 0.16363636
        %v1124 = vmul.f32 %v910, 0.16363636
        %v1125 = vmul.f32 %v920, 0.16363636
        %v1126 = vadd.f32 %v1120, %v1123
        %v1127 = vadd.f32 %v1121, %v1124
        %v1128 = vadd.f32 %v1122, %v1125
        %v1129 = vmul.f32 %v901, 0.18181819
        %v1130 = vmul.f32 %v911, 0.18181819
        %v1131 = vmul.f32 %v921, 0.18181819
        %v1132 = vadd.f32 %v1126, %v1129
        %v1133 = vadd.f32 %v1127, %v1130
        %v1134 = vadd.f32 %v1128, %v1131
        %1136 = vset.pattern.permute.xlu0 0
        %1137 = vperm.xlu0 %1136, %v952
        %v1138 = vpop.permute.xlu0 %1137
        %1141 = vset.pattern.permute.xlu0 0
        %1142 = vperm.xlu0 %1141, %v953
        %v1143 = vpop.permute.xlu0 %1142
        %1146 = vset.pattern.permute.xlu0 0
        %1147 = vperm.xlu0 %1146, %v954
        %v1148 = vpop.permute.xlu0 %1147
        %1151 = vset.pattern.permute.xlu0 0
        %1152 = vperm.xlu0 %1151, %v955
        %v1153 = vpop.permute.xlu0 %1152
        %1156 = vset.pattern.permute.xlu0 0
        %1157 = vperm.xlu0 %1156, %v956
        %v1158 = vpop.permute.xlu0 %1157
        %1161 = vset.pattern.permute.xlu0 0
        %1162 = vperm.xlu0 %1161, %v957
        %v1163 = vpop.permute.xlu0 %1162
        %1166 = vset.pattern.permute.xlu0 0
        %1167 = vperm.xlu0 %1166, %v958
        %v1168 = vpop.permute.xlu0 %1167
        %1171 = vset.pattern.permute.xlu0 0
        %1172 = vperm.xlu0 %1171, %v959
        %v1173 = vpop.permute.xlu0 %1172
        %1176 = vset.pattern.permute.xlu0 0
        %1177 = vperm.xlu0 %1176, %v960
        %v1178 = vpop.permute.xlu0 %1177
        %1181 = vset.pattern.permute.xlu0 0
        %1182 = vperm.xlu0 %1181, %v961
        %v1183 = vpop.permute.xlu0 %1182
        %1186 = vset.pattern.permute.xlu0 0
        %1187 = vperm.xlu0 %1186, %v962
        %v1188 = vpop.permute.xlu0 %1187
        %1191 = vset.pattern.permute.xlu0 0
        %1192 = vperm.xlu0 %1191, %v963
        %v1193 = vpop.permute.xlu0 %1192
        %1196 = vset.pattern.permute.xlu0 0
        %1197 = vperm.xlu0 %1196, %v964
        %v1198 = vpop.permute.xlu0 %1197
        %1201 = vset.pattern.permute.xlu0 0
        %1202 = vperm.xlu0 %1201, %v965
        %v1203 = vpop.permute.xlu0 %1202
        %1206 = vset.pattern.permute.xlu0 0
        %1207 = vperm.xlu0 %1206, %v966
        %v1208 = vpop.permute.xlu0 %1207
        %1211 = vset.pattern.permute.xlu0 0
        %1212 = vperm.xlu0 %1211, %v967
        %v1213 = vpop.permute.xlu0 %1212
        %1216 = vset.pattern.permute.xlu0 0
        %1217 = vperm.xlu0 %1216, %v968
        %v1218 = vpop.permute.xlu0 %1217
        %1221 = vset.pattern.permute.xlu0 0
        %1222 = vperm.xlu0 %1221, %v969
        %v1223 = vpop.permute.xlu0 %1222
        %1226 = vset.pattern.permute.xlu0 0
        %1227 = vperm.xlu0 %1226, %v970
        %v1228 = vpop.permute.xlu0 %1227
        %1231 = vset.pattern.permute.xlu0 0
        %1232 = vperm.xlu0 %1231, %v971
        %v1233 = vpop.permute.xlu0 %1232
        %1236 = vset.pattern.permute.xlu0 0
        %1237 = vperm.xlu0 %1236, %v972
        %v1238 = vpop.permute.xlu0 %1237
        %1241 = vset.pattern.permute.xlu0 0
        %1242 = vperm.xlu0 %1241, %v973
        %v1243 = vpop.permute.xlu0 %1242
        %1246 = vset.pattern.permute.xlu0 0
        %1247 = vperm.xlu0 %1246, %v974
        %v1248 = vpop.permute.xlu0 %1247
        %1251 = vset.pattern.permute.xlu0 0
        %1252 = vperm.xlu0 %1251, %v975
        %v1253 = vpop.permute.xlu0 %1252
        %1256 = vset.pattern.permute.xlu0 0
        %1257 = vperm.xlu0 %1256, %v976
        %v1258 = vpop.permute.xlu0 %1257
        %1261 = vset.pattern.permute.xlu0 0
        %1262 = vperm.xlu0 %1261, %v977
        %v1263 = vpop.permute.xlu0 %1262
        %1266 = vset.pattern.permute.xlu0 0
        %1267 = vperm.xlu0 %1266, %v978
        %v1268 = vpop.permute.xlu0 %1267
        %1271 = vset.pattern.permute.xlu0 0
        %1272 = vperm.xlu0 %1271, %v979
        %v1273 = vpop.permute.xlu0 %1272
        %1276 = vset.pattern.permute.xlu0 0
        %1277 = vperm.xlu0 %1276, %v980
        %v1278 = vpop.permute.xlu0 %1277
        %1281 = vset.pattern.permute.xlu0 0
        %1282 = vperm.xlu0 %1281, %v981
        %v1283 = vpop.permute.xlu0 %1282
        %v1285 = vmul.f32 %v1138, %v952
        %v1286 = vmul.f32 %v1143, %v953
        %v1287 = vmul.f32 %v1148, %v954
        %v1288 = vmul.f32 %v1153, %v955
        %v1289 = vmul.f32 %v1158, %v956
        %v1290 = vmul.f32 %v1163, %v957
        %v1291 = vmul.f32 %v1168, %v958
        %v1292 = vmul.f32 %v1173, %v959
        %v1293 = vmul.f32 %v1178, %v960
        %v1294 = vmul.f32 %v1183, %v961
        %v1295 = vmul.f32 %v1188, %v962
        %v1296 = vmul.f32 %v1193, %v963
        %v1297 = vmul.f32 %v1198, %v964
        %v1298 = vmul.f32 %v1203, %v965
        %v1299 = vmul.f32 %v1208, %v966
        %v1300 = vmul.f32 %v1213, %v967
        %v1301 = vmul.f32 %v1218, %v968
        %v1302 = vmul.f32 %v1223, %v969
        %v1303 = vmul.f32 %v1228, %v970
        %v1304 = vmul.f32 %v1233, %v971
        %v1305 = vmul.f32 %v1238, %v972
        %v1306 = vmul.f32 %v1243, %v973
        %v1307 = vmul.f32 %v1248, %v974
        %v1308 = vmul.f32 %v1253, %v975
        %v1309 = vmul.f32 %v1258, %v976
        %v1310 = vmul.f32 %v1263, %v977
        %v1311 = vmul.f32 %v1268, %v978
        %v1312 = vmul.f32 %v1273, %v979
        %v1313 = vmul.f32 %v1278, %v980
        %v1314 = vmul.f32 %v1283, %v981
        %v1315 = vadd.f32 %v1285, %v1286
        %v1316 = vadd.f32 %v1295, %v1296
        %v1317 = vadd.f32 %v1305, %v1306
        %v1318 = vadd.f32 %v1315, %v1287
        %v1319 = vadd.f32 %v1316, %v1297
        %v1320 = vadd.f32 %v1317, %v1307
        %v1321 = vadd.f32 %v1318, %v1288
        %v1322 = vadd.f32 %v1319, %v1298
        %v1323 = vadd.f32 %v1320, %v1308
        %v1324 = vadd.f32 %v1321, %v1289
        %v1325 = vadd.f32 %v1322, %v1299
        %v1326 = vadd.f32 %v1323, %v1309
        %v1327 = vadd.f32 %v1324, %v1290
        %v1328 = vadd.f32 %v1325, %v1300
        %v1329 = vadd.f32 %v1326, %v1310
        %v1330 = vadd.f32 %v1327, %v1291
        %v1331 = vadd.f32 %v1328, %v1301
        %v1332 = vadd.f32 %v1329, %v1311
        %v1333 = vadd.f32 %v1330, %v1292
        %v1334 = vadd.f32 %v1331, %v1302
        %v1335 = vadd.f32 %v1332, %v1312
        %v1336 = vadd.f32 %v1333, %v1293
        %v1337 = vadd.f32 %v1334, %v1303
        %v1338 = vadd.f32 %v1335, %v1313
        %v1339 = vadd.f32 %v1336, %v1294
        %v1340 = vadd.f32 %v1337, %v1304
        %v1341 = vadd.f32 %v1338, %v1314
        %v1342 = vmul.f32 %v1339, 0.11111111
        %v1343 = vmul.f32 %v1340, 0.11111111
        %v1344 = vmul.f32 %v1341, 0.11111111
        %1346 = vset.pattern.permute.xlu0 0
        %1347 = vperm.xlu0 %1346, %v1048
        %v1348 = vpop.permute.xlu0 %1347
        %1351 = vset.pattern.permute.xlu0 0
        %1352 = vperm.xlu0 %1351, %v1055
        %v1353 = vpop.permute.xlu0 %1352
        %1356 = vset.pattern.permute.xlu0 0
        %1357 = vperm.xlu0 %1356, %v1062
        %v1358 = vpop.permute.xlu0 %1357
        %v1360 = vmul.f32 %v1348, %v1048
        %v1361 = vmul.f32 %v1353, %v1055
        %v1362 = vmul.f32 %v1358, %v1062
        %v1363 = vrcp.pop %v1360
        %v1364 = vmul.f32 %v1342, %v1363
        %v1365 = vrcp.pop %v1361
        %v1366 = vmul.f32 %v1343, %v1365
        %v1367 = vrcp.pop %v1362
        %v1368 = vmul.f32 %v1344, %v1367
        %1369 = vset.pattern.permute.xlu0 1
        %1370 = vperm.xlu0 %1369, %v952
        %v1371 = vpop.permute.xlu0 %1370
        %1373 = vset.pattern.permute.xlu0 1
        %1374 = vperm.xlu0 %1373, %v953
        %v1375 = vpop.permute.xlu0 %1374
        %1377 = vset.pattern.permute.xlu0 1
        %1378 = vperm.xlu0 %1377, %v954
        %v1379 = vpop.permute.xlu0 %1378
        %1381 = vset.pattern.permute.xlu0 1
        %1382 = vperm.xlu0 %1381, %v955
        %v1383 = vpop.permute.xlu0 %1382
        %1385 = vset.pattern.permute.xlu0 1
        %1386 = vperm.xlu0 %1385, %v956
        %v1387 = vpop.permute.xlu0 %1386
        %1389 = vset.pattern.permute.xlu0 1
        %1390 = vperm.xlu0 %1389, %v957
        %v1391 = vpop.permute.xlu0 %1390
        %1393 = vset.pattern.permute.xlu0 1
        %1394 = vperm.xlu0 %1393, %v958
        %v1395 = vpop.permute.xlu0 %1394
        %1397 = vset.pattern.permute.xlu0 1
        %1398 = vperm.xlu0 %1397, %v959
        %v1399 = vpop.permute.xlu0 %1398
        %1401 = vset.pattern.permute.xlu0 1
        %1402 = vperm.xlu0 %1401, %v960
        %v1403 = vpop.permute.xlu0 %1402
        %1405 = vset.pattern.permute.xlu0 1
        %1406 = vperm.xlu0 %1405, %v961
        %v1407 = vpop.permute.xlu0 %1406
        %1409 = vset.pattern.permute.xlu0 1
        %1410 = vperm.xlu0 %1409, %v962
        %v1411 = vpop.permute.xlu0 %1410
        %1413 = vset.pattern.permute.xlu0 1
        %1414 = vperm.xlu0 %1413, %v963
        %v1415 = vpop.permute.xlu0 %1414
        %1417 = vset.pattern.permute.xlu0 1
        %1418 = vperm.xlu0 %1417, %v964
        %v1419 = vpop.permute.xlu0 %1418
        %1421 = vset.pattern.permute.xlu0 1
        %1422 = vperm.xlu0 %1421, %v965
        %v1423 = vpop.permute.xlu0 %1422
        %1425 = vset.pattern.permute.xlu0 1
        %1426 = vperm.xlu0 %1425, %v966
        %v1427 = vpop.permute.xlu0 %1426
        %1429 = vset.pattern.permute.xlu0 1
        %1430 = vperm.xlu0 %1429, %v967
        %v1431 = vpop.permute.xlu0 %1430
        %1433 = vset.pattern.permute.xlu0 1
        %1434 = vperm.xlu0 %1433, %v968
        %v1435 = vpop.permute.xlu0 %1434
        %1437 = vset.pattern.permute.xlu0 1
        %1438 = vperm.xlu0 %1437, %v969
        %v1439 = vpop.permute.xlu0 %1438
        %1441 = vset.pattern.permute.xlu0 1
        %1442 = vperm.xlu0 %1441, %v970
        %v1443 = vpop.permute.xlu0 %1442
        %1445 = vset.pattern.permute.xlu0 1
        %1446 = vperm.xlu0 %1445, %v971
        %v1447 = vpop.permute.xlu0 %1446
        %1449 = vset.pattern.permute.xlu0 1
        %1450 = vperm.xlu0 %1449, %v972
        %v1451 = vpop.permute.xlu0 %1450
        %1453 = vset.pattern.permute.xlu0 1
        %1454 = vperm.xlu0 %1453, %v973
        %v1455 = vpop.permute.xlu0 %1454
        %1457 = vset.pattern.permute.xlu0 1
        %1458 = vperm.xlu0 %1457, %v974
        %v1459 = vpop.permute.xlu0 %1458
        %1461 = vset.pattern.permute.xlu0 1
        %1462 = vperm.xlu0 %1461, %v975
        %v1463 = vpop.permute.xlu0 %1462
        %1465 = vset.pattern.permute.xlu0 1
        %1466 = vperm.xlu0 %1465, %v976
        %v1467 = vpop.permute.xlu0 %1466
        %1469 = vset.pattern.permute.xlu0 1
        %1470 = vperm.xlu0 %1469, %v977
        %v1471 = vpop.permute.xlu0 %1470
        %1473 = vset.pattern.permute.xlu0 1
        %1474 = vperm.xlu0 %1473, %v978
        %v1475 = vpop.permute.xlu0 %1474
        %1477 = vset.pattern.permute.xlu0 1
        %1478 = vperm.xlu0 %1477, %v979
        %v1479 = vpop.permute.xlu0 %1478
        %1481 = vset.pattern.permute.xlu0 1
        %1482 = vperm.xlu0 %1481, %v980
        %v1483 = vpop.permute.xlu0 %1482
        %1485 = vset.pattern.permute.xlu0 1
        %1486 = vperm.xlu0 %1485, %v981
        %v1487 = vpop.permute.xlu0 %1486
        %v1489 = vmul.f32 %v1371, %v952
        %v1490 = vmul.f32 %v1375, %v953
        %v1491 = vmul.f32 %v1379, %v954
        %v1492 = vmul.f32 %v1383, %v955
        %v1493 = vmul.f32 %v1387, %v956
        %v1494 = vmul.f32 %v1391, %v957
        %v1495 = vmul.f32 %v1395, %v958
        %v1496 = vmul.f32 %v1399, %v959
        %v1497 = vmul.f32 %v1403, %v960
        %v1498 = vmul.f32 %v1407, %v961
        %v1499 = vmul.f32 %v1411, %v962
        %v1500 = vmul.f32 %v1415, %v963
        %v1501 = vmul.f32 %v1419, %v964
        %v1502 = vmul.f32 %v1423, %v965
        %v1503 = vmul.f32 %v1427, %v966
        %v1504 = vmul.f32 %v1431, %v967
        %v1505 = vmul.f32 %v1435, %v968
        %v1506 = vmul.f32 %v1439, %v969
        %v1507 = vmul.f32 %v1443, %v970
        %v1508 = vmul.f32 %v1447, %v971
        %v1509 = vmul.f32 %v1451, %v972
        %v1510 = vmul.f32 %v1455, %v973
        %v1511 = vmul.f32 %v1459, %v974
        %v1512 = vmul.f32 %v1463, %v975
        %v1513 = vmul.f32 %v1467, %v976
        %v1514 = vmul.f32 %v1471, %v977
        %v1515 = vmul.f32 %v1475, %v978
        %v1516 = vmul.f32 %v1479, %v979
        %v1517 = vmul.f32 %v1483, %v980
        %v1518 = vmul.f32 %v1487, %v981
        %v1519 = vadd.f32 %v1489, %v1490
        %v1520 = vadd.f32 %v1499, %v1500
        %v1521 = vadd.f32 %v1509, %v1510
        %v1522 = vadd.f32 %v1519, %v1491
        %v1523 = vadd.f32 %v1520, %v1501
        %v1524 = vadd.f32 %v1521, %v1511
        %v1525 = vadd.f32 %v1522, %v1492
        %v1526 = vadd.f32 %v1523, %v1502
        %v1527 = vadd.f32 %v1524, %v1512
        %v1528 = vadd.f32 %v1525, %v1493
        %v1529 = vadd.f32 %v1526, %v1503
        %v1530 = vadd.f32 %v1527, %v1513
        %v1531 = vadd.f32 %v1528, %v1494
        %v1532 = vadd.f32 %v1529, %v1504
        %v1533 = vadd.f32 %v1530, %v1514
        %v1534 = vadd.f32 %v1531, %v1495
        %v1535 = vadd.f32 %v1532, %v1505
        %v1536 = vadd.f32 %v1533, %v1515
        %v1537 = vadd.f32 %v1534, %v1496
        %v1538 = vadd.f32 %v1535, %v1506
        %v1539 = vadd.f32 %v1536, %v1516
        %v1540 = vadd.f32 %v1537, %v1497
        %v1541 = vadd.f32 %v1538, %v1507
        %v1542 = vadd.f32 %v1539, %v1517
        %v1543 = vadd.f32 %v1540, %v1498
        %v1544 = vadd.f32 %v1541, %v1508
        %v1545 = vadd.f32 %v1542, %v1518
        %v1546 = vmul.f32 %v1543, 0.11111111
        %v1547 = vmul.f32 %v1544, 0.11111111
        %v1548 = vmul.f32 %v1545, 0.11111111
        %1549 = vset.pattern.permute.xlu0 1
        %1550 = vperm.xlu0 %1549, %v1048
        %v1551 = vpop.permute.xlu0 %1550
        %1553 = vset.pattern.permute.xlu0 1
        %1554 = vperm.xlu0 %1553, %v1055
        %v1555 = vpop.permute.xlu0 %1554
        %1557 = vset.pattern.permute.xlu0 1
        %1558 = vperm.xlu0 %1557, %v1062
        %v1559 = vpop.permute.xlu0 %1558
        %v1561 = vmul.f32 %v1551, %v1048
        %v1562 = vmul.f32 %v1555, %v1055
        %v1563 = vmul.f32 %v1559, %v1062
        %v1564 = vrcp.pop %v1561
        %v1565 = vmul.f32 %v1546, %v1564
        %v1566 = vrcp.pop %v1562
        %v1567 = vmul.f32 %v1547, %v1566
        %v1568 = vrcp.pop %v1563
        %v1569 = vmul.f32 %v1548, %v1568
        %1570 = vrot.lane.b32.xlu0 %v952, 127
        %v1571 = vpop.permute.xlu0 %1570
        %1572 = vrot.lane.b32.xlu0 %v953, 127
        %v1573 = vpop.permute.xlu0 %1572
        %1574 = vrot.lane.b32.xlu0 %v954, 127
        %v1575 = vpop.permute.xlu0 %1574
        %1576 = vrot.lane.b32.xlu0 %v955, 127
        %v1577 = vpop.permute.xlu0 %1576
        %1578 = vrot.lane.b32.xlu0 %v956, 127
        %v1579 = vpop.permute.xlu0 %1578
        %1580 = vrot.lane.b32.xlu0 %v957, 127
        %v1581 = vpop.permute.xlu0 %1580
        %1582 = vrot.lane.b32.xlu0 %v958, 127
        %v1583 = vpop.permute.xlu0 %1582
        %1584 = vrot.lane.b32.xlu0 %v959, 127
        %v1585 = vpop.permute.xlu0 %1584
        %1586 = vrot.lane.b32.xlu0 %v960, 127
        %v1587 = vpop.permute.xlu0 %1586
        %1588 = vrot.lane.b32.xlu0 %v961, 127
        %v1589 = vpop.permute.xlu0 %1588
        %1590 = vrot.lane.b32.xlu0 %v962, 127
        %v1591 = vpop.permute.xlu0 %1590
        %1592 = vrot.lane.b32.xlu0 %v963, 127
        %v1593 = vpop.permute.xlu0 %1592
        %1594 = vrot.lane.b32.xlu0 %v964, 127
        %v1595 = vpop.permute.xlu0 %1594
        %1596 = vrot.lane.b32.xlu0 %v965, 127
        %v1597 = vpop.permute.xlu0 %1596
        %1598 = vrot.lane.b32.xlu0 %v966, 127
        %v1599 = vpop.permute.xlu0 %1598
        %1600 = vrot.lane.b32.xlu0 %v967, 127
        %v1601 = vpop.permute.xlu0 %1600
        %1602 = vrot.lane.b32.xlu0 %v968, 127
        %v1603 = vpop.permute.xlu0 %1602
        %1604 = vrot.lane.b32.xlu0 %v969, 127
        %v1605 = vpop.permute.xlu0 %1604
        %1606 = vrot.lane.b32.xlu0 %v970, 127
        %v1607 = vpop.permute.xlu0 %1606
        %1608 = vrot.lane.b32.xlu0 %v971, 127
        %v1609 = vpop.permute.xlu0 %1608
        %1610 = vrot.lane.b32.xlu0 %v972, 127
        %v1611 = vpop.permute.xlu0 %1610
        %1612 = vrot.lane.b32.xlu0 %v973, 127
        %v1613 = vpop.permute.xlu0 %1612
        %1614 = vrot.lane.b32.xlu0 %v974, 127
        %v1615 = vpop.permute.xlu0 %1614
        %1616 = vrot.lane.b32.xlu0 %v975, 127
        %v1617 = vpop.permute.xlu0 %1616
        %1618 = vrot.lane.b32.xlu0 %v976, 127
        %v1619 = vpop.permute.xlu0 %1618
        %1620 = vrot.lane.b32.xlu0 %v977, 127
        %v1621 = vpop.permute.xlu0 %1620
        %1622 = vrot.lane.b32.xlu0 %v978, 127
        %v1623 = vpop.permute.xlu0 %1622
        %1624 = vrot.lane.b32.xlu0 %v979, 127
        %v1625 = vpop.permute.xlu0 %1624
        %1626 = vrot.lane.b32.xlu0 %v980, 127
        %v1627 = vpop.permute.xlu0 %1626
        %1628 = vrot.lane.b32.xlu0 %v981, 127
        %v1629 = vpop.permute.xlu0 %1628
        %v1660 = vmul.f32 %v952, %v1571
        %v1661 = vmul.f32 %v953, %v1573
        %v1662 = vmul.f32 %v954, %v1575
        %v1663 = vmul.f32 %v955, %v1577
        %v1664 = vmul.f32 %v956, %v1579
        %v1665 = vmul.f32 %v957, %v1581
        %v1666 = vmul.f32 %v958, %v1583
        %v1667 = vmul.f32 %v959, %v1585
        %v1668 = vmul.f32 %v960, %v1587
        %v1669 = vmul.f32 %v961, %v1589
        %v1670 = vmul.f32 %v962, %v1591
        %v1671 = vmul.f32 %v963, %v1593
        %v1672 = vmul.f32 %v964, %v1595
        %v1673 = vmul.f32 %v965, %v1597
        %v1674 = vmul.f32 %v966, %v1599
        %v1675 = vmul.f32 %v967, %v1601
        %v1676 = vmul.f32 %v968, %v1603
        %v1677 = vmul.f32 %v969, %v1605
        %v1678 = vmul.f32 %v970, %v1607
        %v1679 = vmul.f32 %v971, %v1609
        %v1680 = vmul.f32 %v972, %v1611
        %v1681 = vmul.f32 %v973, %v1613
        %v1682 = vmul.f32 %v974, %v1615
        %v1683 = vmul.f32 %v975, %v1617
        %v1684 = vmul.f32 %v976, %v1619
        %v1685 = vmul.f32 %v977, %v1621
        %v1686 = vmul.f32 %v978, %v1623
        %v1687 = vmul.f32 %v979, %v1625
        %v1688 = vmul.f32 %v980, %v1627
        %v1689 = vmul.f32 %v981, %v1629
        %v1690 = vadd.f32 %v1660, %v1661
        %v1691 = vadd.f32 %v1670, %v1671
        %v1692 = vadd.f32 %v1680, %v1681
        %v1693 = vadd.f32 %v1690, %v1662
        %v1694 = vadd.f32 %v1691, %v1672
        %v1695 = vadd.f32 %v1692, %v1682
        %v1696 = vadd.f32 %v1693, %v1663
        %v1697 = vadd.f32 %v1694, %v1673
        %v1698 = vadd.f32 %v1695, %v1683
        %v1699 = vadd.f32 %v1696, %v1664
        %v1700 = vadd.f32 %v1697, %v1674
        %v1701 = vadd.f32 %v1698, %v1684
        %v1702 = vadd.f32 %v1699, %v1665
        %v1703 = vadd.f32 %v1700, %v1675
        %v1704 = vadd.f32 %v1701, %v1685
        %v1705 = vadd.f32 %v1702, %v1666
        %v1706 = vadd.f32 %v1703, %v1676
        %v1707 = vadd.f32 %v1704, %v1686
        %v1708 = vadd.f32 %v1705, %v1667
        %v1709 = vadd.f32 %v1706, %v1677
        %v1710 = vadd.f32 %v1707, %v1687
        %v1711 = vadd.f32 %v1708, %v1668
        %v1712 = vadd.f32 %v1709, %v1678
        %v1713 = vadd.f32 %v1710, %v1688
        %v1714 = vadd.f32 %v1711, %v1669
        %v1715 = vadd.f32 %v1712, %v1679
        %v1716 = vadd.f32 %v1713, %v1689
        %v1717 = vmul.f32 %v1714, 0.11111111
        %v1718 = vmul.f32 %v1715, 0.11111111
        %v1719 = vmul.f32 %v1716, 0.11111111
        %1720 = vrot.lane.b32.xlu0 %v1048, 127
        %v1721 = vpop.permute.xlu0 %1720
        %1722 = vrot.lane.b32.xlu0 %v1055, 127
        %v1723 = vpop.permute.xlu0 %1722
        %1724 = vrot.lane.b32.xlu0 %v1062, 127
        %v1725 = vpop.permute.xlu0 %1724
        %v1729 = vmul.f32 %v1048, %v1721
        %v1730 = vmul.f32 %v1055, %v1723
        %v1731 = vmul.f32 %v1062, %v1725
        %v1732 = vrcp.pop %v1729
        %v1733 = vmul.f32 %v1717, %v1732
        %v1734 = vrcp.pop %v1730
        %v1735 = vmul.f32 %v1718, %v1734
        %v1736 = vrcp.pop %v1731
        %v1737 = vmul.f32 %v1719, %v1736
        %1741 = vrot.lane.b32.xlu0 %v1342, 127
        %v1742 = vpop.permute.xlu0 %1741
        %1743 = vrot.lane.b32.xlu0 %v1343, 127
        %v1744 = vpop.permute.xlu0 %1743
        %1745 = vrot.lane.b32.xlu0 %v1344, 127
        %v1746 = vpop.permute.xlu0 %1745
        %1753 = vrot.lane.b32.xlu0 %v1546, 1
        %v1754 = vpop.permute.xlu0 %1753
        %1755 = vrot.lane.b32.xlu0 %v1547, 1
        %v1756 = vpop.permute.xlu0 %1755
        %1757 = vrot.lane.b32.xlu0 %v1548, 1
        %v1758 = vpop.permute.xlu0 %1757
        %1765 = vrot.lane.b32.xlu0 %v1717, 3
        %v1766 = vpop.permute.xlu0 %1765
        %1767 = vrot.lane.b32.xlu0 %v1718, 3
        %v1768 = vpop.permute.xlu0 %1767
        %1769 = vrot.lane.b32.xlu0 %v1719, 3
        %v1770 = vpop.permute.xlu0 %1769
        %vm1774 = vcmask 23552
        %v1775 = vsel %vm1774, %v1742, %v1754
        %v1776 = vsel %vm1774, %v1744, %v1756
        %v1777 = vsel %vm1774, %v1746, %v1758
        %vm1778 = vcmask 39936
        %v1779 = vsel %vm1778, %v1775, %v1766
        %v1780 = vsel %vm1778, %v1776, %v1768
        %v1781 = vsel %vm1778, %v1777, %v1770
        %1785 = vrot.lane.b32.xlu0 %v1364, 127
        %v1786 = vpop.permute.xlu0 %1785
        %1787 = vrot.lane.b32.xlu0 %v1366, 127
        %v1788 = vpop.permute.xlu0 %1787
        %1789 = vrot.lane.b32.xlu0 %v1368, 127
        %v1790 = vpop.permute.xlu0 %1789
        %1797 = vrot.lane.b32.xlu0 %v1565, 1
        %v1798 = vpop.permute.xlu0 %1797
        %1799 = vrot.lane.b32.xlu0 %v1567, 1
        %v1800 = vpop.permute.xlu0 %1799
        %1801 = vrot.lane.b32.xlu0 %v1569, 1
        %v1802 = vpop.permute.xlu0 %1801
        %1809 = vrot.lane.b32.xlu0 %v1733, 3
        %v1810 = vpop.permute.xlu0 %1809
        %1811 = vrot.lane.b32.xlu0 %v1735, 3
        %v1812 = vpop.permute.xlu0 %1811
        %1813 = vrot.lane.b32.xlu0 %v1737, 3
        %v1814 = vpop.permute.xlu0 %1813
        %v1818 = vsel %vm1774, %v1786, %v1798
        %v1819 = vsel %vm1774, %v1788, %v1800
        %v1820 = vsel %vm1774, %v1790, %v1802
        %v1821 = vsel %vm1778, %v1818, %v1810
        %v1822 = vsel %vm1778, %v1819, %v1812
        %v1823 = vsel %vm1778, %v1820, %v1814
        %v1824 = vld [vmem:[#allocation6] sm:$0x7]
        %v1825 = vld [vmem:[#allocation8] sm:$0x7]
        %v1826 = vadd.f32 %v1821, %v1822
        %v1827 = vadd.f32 %v1826, %v1823
        %v1828 = vmul.f32 %v1827, 0.33333334
        %v1829 = vsub.f32 %v1821, %v1828
        %v1830 = vsub.f32 %v1822, %v1828
        %v1831 = vsub.f32 %v1823, %v1828
        %v1832 = vmul.f32 %v1829, %v1829
        %v1833 = vmul.f32 %v1830, %v1830
        %v1834 = vadd.f32 %v1832, %v1833
        %v1835 = vmul.f32 %v1831, %v1831
        %v1836 = vadd.f32 %v1834, %v1835
        %v1837 = vmul.f32 %v1836, 0.33333334
        %v1838 = vadd.f32 %v1837, 1e-05
        %v1839 = vrsqrt.pop %v1838
        %v1840 = vmul.f32 %v1829, %v1839
        %v1841 = vmul.f32 %v1830, %v1839
        %v1842 = vmul.f32 %v1831, %v1839
        %v1845 = vunpack.c.l.s4 1966171168
        %v1846 = vunpack.c.0.s8 %v1845
        %v1847 = vlaneseq
        %v1848 = vshrl.u32 %v1847, 7
        %v1849 = vsub.s32 %v1846, %v1848
        %v1850 = vrot.slane %v1824, %v1849
        %v1851 = vcombine.high %v1850, %v1850
        %v1853 = vunpack.c.l.s4 1966171168
        %v1854 = vunpack.c.0.s8 %v1853
        %v1855 = vlaneseq
        %v1856 = vshrl.u32 %v1855, 7
        %v1857 = vsub.s32 %v1854, %v1856
        %v1858 = vrot.slane %v1850, %v1857
        %v1860 = vunpack.c.l.s4 1966171168
        %v1861 = vunpack.c.0.s8 %v1860
        %v1862 = vlaneseq
        %v1863 = vshrl.u32 %v1862, 7
        %v1864 = vsub.s32 %v1861, %v1863
        %v1865 = vrot.slane %v1851, %v1864
        %v1866 = vcombine.high %v1858, %v1858
        %v1867 = vlaneseq
        %v1868 = vshrl.u32 %v1867, 7
        %v1869 = vsub.s32 0, %v1868
        %v1870 = vrot.slane %v1858, %v1869
        %v1871 = vlaneseq
        %v1872 = vshrl.u32 %v1871, 7
        %v1873 = vsub.s32 0, %v1872
        %v1874 = vrot.slane %v1865, %v1873
        %v1875 = vlaneseq
        %v1876 = vshrl.u32 %v1875, 7
        %v1877 = vsub.s32 0, %v1876
        %v1878 = vrot.slane %v1866, %v1877
        %1879 = vset.pattern.permute.xlu0 0
        %1880 = vperm.xlu0 %1879, %v1870
        %v1881 = vpop.permute.xlu0 %1880
        %1883 = vset.pattern.permute.xlu0 0
        %1884 = vperm.xlu0 %1883, %v1874
        %v1885 = vpop.permute.xlu0 %1884
        %1887 = vset.pattern.permute.xlu0 0
        %1888 = vperm.xlu0 %1887, %v1878
        %v1889 = vpop.permute.xlu0 %1888
        %v1891 = vmul.f32 %v1840, %v1881
        %v1892 = vmul.f32 %v1841, %v1885
        %v1893 = vmul.f32 %v1842, %v1889
        %v1896 = vunpack.c.l.s4 1966171168
        %v1897 = vunpack.c.0.s8 %v1896
        %v1898 = vlaneseq
        %v1899 = vshrl.u32 %v1898, 7
        %v1900 = vsub.s32 %v1897, %v1899
        %v1901 = vrot.slane %v1825, %v1900
        %v1902 = vcombine.high %v1901, %v1901
        %v1904 = vunpack.c.l.s4 1966171168
        %v1905 = vunpack.c.0.s8 %v1904
        %v1906 = vlaneseq
        %v1907 = vshrl.u32 %v1906, 7
        %v1908 = vsub.s32 %v1905, %v1907
        %v1909 = vrot.slane %v1901, %v1908
        %v1911 = vunpack.c.l.s4 1966171168
        %v1912 = vunpack.c.0.s8 %v1911
        %v1913 = vlaneseq
        %v1914 = vshrl.u32 %v1913, 7
        %v1915 = vsub.s32 %v1912, %v1914
        %v1916 = vrot.slane %v1902, %v1915
        %v1917 = vcombine.high %v1909, %v1909
        %v1918 = vlaneseq
        %v1919 = vshrl.u32 %v1918, 7
        %v1920 = vsub.s32 0, %v1919
        %v1921 = vrot.slane %v1909, %v1920
        %v1922 = vlaneseq
        %v1923 = vshrl.u32 %v1922, 7
        %v1924 = vsub.s32 0, %v1923
        %v1925 = vrot.slane %v1916, %v1924
        %v1926 = vlaneseq
        %v1927 = vshrl.u32 %v1926, 7
        %v1928 = vsub.s32 0, %v1927
        %v1929 = vrot.slane %v1917, %v1928
        %1930 = vset.pattern.permute.xlu0 0
        %1931 = vperm.xlu0 %1930, %v1921
        %v1932 = vpop.permute.xlu0 %1931
        %1934 = vset.pattern.permute.xlu0 0
        %1935 = vperm.xlu0 %1934, %v1925
        %v1936 = vpop.permute.xlu0 %1935
        %1938 = vset.pattern.permute.xlu0 0
        %1939 = vperm.xlu0 %1938, %v1929
        %v1940 = vpop.permute.xlu0 %1939
        %v1942 = vadd.f32 %v1891, %v1932
        %v1943 = vadd.f32 %v1892, %v1936
        %v1944 = vadd.f32 %v1893, %v1940
        %s1945 = scalar_lea.vmem [#allocation6], 4
        %v1946 = vld [vmem:[%s1945] sm:$0x7]
        %s1947 = scalar_lea.vmem [#allocation8], 4
        %v1948 = vld [vmem:[%s1947] sm:$0x7]
        %v1949 = vadd.f32 %v1779, %v1780
        %v1950 = vadd.f32 %v1949, %v1781
        %v1951 = vmul.f32 %v1950, 0.33333334
        %v1952 = vsub.f32 %v1779, %v1951
        %v1953 = vsub.f32 %v1780, %v1951
        %v1954 = vsub.f32 %v1781, %v1951
        %v1955 = vmul.f32 %v1952, %v1952
        %v1956 = vmul.f32 %v1953, %v1953
        %v1957 = vadd.f32 %v1955, %v1956
        %v1958 = vmul.f32 %v1954, %v1954
        %v1959 = vadd.f32 %v1957, %v1958
        %v1960 = vmul.f32 %v1959, 0.33333334
        %v1961 = vadd.f32 %v1960, 1e-05
        %v1962 = vrsqrt.pop %v1961
        %v1963 = vmul.f32 %v1952, %v1962
        %v1964 = vmul.f32 %v1953, %v1962
        %v1965 = vmul.f32 %v1954, %v1962
        %v1968 = vunpack.c.l.s4 1966171168
        %v1969 = vunpack.c.0.s8 %v1968
        %v1970 = vlaneseq
        %v1971 = vshrl.u32 %v1970, 7
        %v1972 = vsub.s32 %v1969, %v1971
        %v1973 = vrot.slane %v1946, %v1972
        %v1974 = vcombine.high %v1973, %v1973
        %v1976 = vunpack.c.l.s4 1966171168
        %v1977 = vunpack.c.0.s8 %v1976
        %v1978 = vlaneseq
        %v1979 = vshrl.u32 %v1978, 7
        %v1980 = vsub.s32 %v1977, %v1979
        %v1981 = vrot.slane %v1973, %v1980
        %v1983 = vunpack.c.l.s4 1966171168
        %v1984 = vunpack.c.0.s8 %v1983
        %v1985 = vlaneseq
        %v1986 = vshrl.u32 %v1985, 7
        %v1987 = vsub.s32 %v1984, %v1986
        %v1988 = vrot.slane %v1974, %v1987
        %v1989 = vcombine.high %v1981, %v1981
        %v1990 = vlaneseq
        %v1991 = vshrl.u32 %v1990, 7
        %v1992 = vsub.s32 0, %v1991
        %v1993 = vrot.slane %v1981, %v1992
        %v1994 = vlaneseq
        %v1995 = vshrl.u32 %v1994, 7
        %v1996 = vsub.s32 0, %v1995
        %v1997 = vrot.slane %v1988, %v1996
        %v1998 = vlaneseq
        %v1999 = vshrl.u32 %v1998, 7
        %v2000 = vsub.s32 0, %v1999
        %v2001 = vrot.slane %v1989, %v2000
        %2002 = vset.pattern.permute.xlu0 0
        %2003 = vperm.xlu0 %2002, %v1993
        %v2004 = vpop.permute.xlu0 %2003
        %2006 = vset.pattern.permute.xlu0 0
        %2007 = vperm.xlu0 %2006, %v1997
        %v2008 = vpop.permute.xlu0 %2007
        %2010 = vset.pattern.permute.xlu0 0
        %2011 = vperm.xlu0 %2010, %v2001
        %v2012 = vpop.permute.xlu0 %2011
        %v2014 = vmul.f32 %v1963, %v2004
        %v2015 = vmul.f32 %v1964, %v2008
        %v2016 = vmul.f32 %v1965, %v2012
        %v2019 = vunpack.c.l.s4 1966171168
        %v2020 = vunpack.c.0.s8 %v2019
        %v2021 = vlaneseq
        %v2022 = vshrl.u32 %v2021, 7
        %v2023 = vsub.s32 %v2020, %v2022
        %v2024 = vrot.slane %v1948, %v2023
        %v2025 = vcombine.high %v2024, %v2024
        %v2027 = vunpack.c.l.s4 1966171168
        %v2028 = vunpack.c.0.s8 %v2027
        %v2029 = vlaneseq
        %v2030 = vshrl.u32 %v2029, 7
        %v2031 = vsub.s32 %v2028, %v2030
        %v2032 = vrot.slane %v2024, %v2031
        %v2034 = vunpack.c.l.s4 1966171168
        %v2035 = vunpack.c.0.s8 %v2034
        %v2036 = vlaneseq
        %v2037 = vshrl.u32 %v2036, 7
        %v2038 = vsub.s32 %v2035, %v2037
        %v2039 = vrot.slane %v2025, %v2038
        %v2040 = vcombine.high %v2032, %v2032
        %v2041 = vlaneseq
        %v2042 = vshrl.u32 %v2041, 7
        %v2043 = vsub.s32 0, %v2042
        %v2044 = vrot.slane %v2032, %v2043
        %v2045 = vlaneseq
        %v2046 = vshrl.u32 %v2045, 7
        %v2047 = vsub.s32 0, %v2046
        %v2048 = vrot.slane %v2039, %v2047
        %v2049 = vlaneseq
        %v2050 = vshrl.u32 %v2049, 7
        %v2051 = vsub.s32 0, %v2050
        %v2052 = vrot.slane %v2040, %v2051
        %2053 = vset.pattern.permute.xlu0 0
        %2054 = vperm.xlu0 %2053, %v2044
        %v2055 = vpop.permute.xlu0 %2054
        %2057 = vset.pattern.permute.xlu0 0
        %2058 = vperm.xlu0 %2057, %v2048
        %v2059 = vpop.permute.xlu0 %2058
        %2061 = vset.pattern.permute.xlu0 0
        %2062 = vperm.xlu0 %2061, %v2052
        %v2063 = vpop.permute.xlu0 %2062
        %v2065 = vadd.f32 %v2014, %v2055
        %v2066 = vadd.f32 %v2015, %v2059
        %v2067 = vadd.f32 %v2016, %v2063
        %s2068 = scalar_lea.vmem [#allocation6], 8
        %v2069 = vld [vmem:[%s2068] sm:$0x7]
        %s2070 = scalar_lea.vmem [#allocation8], 8
        %v2071 = vld [vmem:[%s2070] sm:$0x7]
        %v2072 = vadd.f32 %v1048, %v1055
        %v2073 = vadd.f32 %v2072, %v1062
        %v2074 = vmul.f32 %v2073, 0.33333334
        %v2075 = vsub.f32 %v1048, %v2074
        %v2076 = vsub.f32 %v1055, %v2074
        %v2077 = vsub.f32 %v1062, %v2074
        %v2078 = vmul.f32 %v2075, %v2075
        %v2079 = vmul.f32 %v2076, %v2076
        %v2080 = vadd.f32 %v2078, %v2079
        %v2081 = vmul.f32 %v2077, %v2077
        %v2082 = vadd.f32 %v2080, %v2081
        %v2083 = vmul.f32 %v2082, 0.33333334
        %v2084 = vadd.f32 %v2083, 1e-05
        %v2085 = vrsqrt.pop %v2084
        %v2086 = vmul.f32 %v2075, %v2085
        %v2087 = vmul.f32 %v2076, %v2085
        %v2088 = vmul.f32 %v2077, %v2085
        %v2091 = vunpack.c.l.s4 1966171168
        %v2092 = vunpack.c.0.s8 %v2091
        %v2093 = vlaneseq
        %v2094 = vshrl.u32 %v2093, 7
        %v2095 = vsub.s32 %v2092, %v2094
        %v2096 = vrot.slane %v2069, %v2095
        %v2097 = vcombine.high %v2096, %v2096
        %v2099 = vunpack.c.l.s4 1966171168
        %v2100 = vunpack.c.0.s8 %v2099
        %v2101 = vlaneseq
        %v2102 = vshrl.u32 %v2101, 7
        %v2103 = vsub.s32 %v2100, %v2102
        %v2104 = vrot.slane %v2096, %v2103
        %v2106 = vunpack.c.l.s4 1966171168
        %v2107 = vunpack.c.0.s8 %v2106
        %v2108 = vlaneseq
        %v2109 = vshrl.u32 %v2108, 7
        %v2110 = vsub.s32 %v2107, %v2109
        %v2111 = vrot.slane %v2097, %v2110
        %v2112 = vcombine.high %v2104, %v2104
        %v2113 = vlaneseq
        %v2114 = vshrl.u32 %v2113, 7
        %v2115 = vsub.s32 0, %v2114
        %v2116 = vrot.slane %v2104, %v2115
        %v2117 = vlaneseq
        %v2118 = vshrl.u32 %v2117, 7
        %v2119 = vsub.s32 0, %v2118
        %v2120 = vrot.slane %v2111, %v2119
        %v2121 = vlaneseq
        %v2122 = vshrl.u32 %v2121, 7
        %v2123 = vsub.s32 0, %v2122
        %v2124 = vrot.slane %v2112, %v2123
        %2125 = vset.pattern.permute.xlu0 0
        %2126 = vperm.xlu0 %2125, %v2116
        %v2127 = vpop.permute.xlu0 %2126
        %2129 = vset.pattern.permute.xlu0 0
        %2130 = vperm.xlu0 %2129, %v2120
        %v2131 = vpop.permute.xlu0 %2130
        %2133 = vset.pattern.permute.xlu0 0
        %2134 = vperm.xlu0 %2133, %v2124
        %v2135 = vpop.permute.xlu0 %2134
        %v2137 = vmul.f32 %v2086, %v2127
        %v2138 = vmul.f32 %v2087, %v2131
        %v2139 = vmul.f32 %v2088, %v2135
        %v2142 = vunpack.c.l.s4 1966171168
        %v2143 = vunpack.c.0.s8 %v2142
        %v2144 = vlaneseq
        %v2145 = vshrl.u32 %v2144, 7
        %v2146 = vsub.s32 %v2143, %v2145
        %v2147 = vrot.slane %v2071, %v2146
        %v2148 = vcombine.high %v2147, %v2147
        %v2150 = vunpack.c.l.s4 1966171168
        %v2151 = vunpack.c.0.s8 %v2150
        %v2152 = vlaneseq
        %v2153 = vshrl.u32 %v2152, 7
        %v2154 = vsub.s32 %v2151, %v2153
        %v2155 = vrot.slane %v2147, %v2154
        %v2157 = vunpack.c.l.s4 1966171168
        %v2158 = vunpack.c.0.s8 %v2157
        %v2159 = vlaneseq
        %v2160 = vshrl.u32 %v2159, 7
        %v2161 = vsub.s32 %v2158, %v2160
        %v2162 = vrot.slane %v2148, %v2161
        %v2163 = vcombine.high %v2155, %v2155
        %v2164 = vlaneseq
        %v2165 = vshrl.u32 %v2164, 7
        %v2166 = vsub.s32 0, %v2165
        %v2167 = vrot.slane %v2155, %v2166
        %v2168 = vlaneseq
        %v2169 = vshrl.u32 %v2168, 7
        %v2170 = vsub.s32 0, %v2169
        %v2171 = vrot.slane %v2162, %v2170
        %v2172 = vlaneseq
        %v2173 = vshrl.u32 %v2172, 7
        %v2174 = vsub.s32 0, %v2173
        %v2175 = vrot.slane %v2163, %v2174
        %2176 = vset.pattern.permute.xlu0 0
        %2177 = vperm.xlu0 %2176, %v2167
        %v2178 = vpop.permute.xlu0 %2177
        %2180 = vset.pattern.permute.xlu0 0
        %2181 = vperm.xlu0 %2180, %v2171
        %v2182 = vpop.permute.xlu0 %2181
        %2184 = vset.pattern.permute.xlu0 0
        %2185 = vperm.xlu0 %2184, %v2175
        %v2186 = vpop.permute.xlu0 %2185
        %v2188 = vadd.f32 %v2137, %v2178
        %v2189 = vadd.f32 %v2138, %v2182
        %v2190 = vadd.f32 %v2139, %v2186
        %s2191 = scalar_lea.vmem [#allocation6], 12
        %v2192 = vld [vmem:[%s2191] sm:$0x7]
        %s2193 = scalar_lea.vmem [#allocation8], 12
        %v2194 = vld [vmem:[%s2193] sm:$0x7]
        %v2195 = vadd.f32 %v1064, %v1066
        %v2196 = vadd.f32 %v2195, %v1068
        %v2197 = vmul.f32 %v2196, 0.33333334
        %v2198 = vsub.f32 %v1064, %v2197
        %v2199 = vsub.f32 %v1066, %v2197
        %v2200 = vsub.f32 %v1068, %v2197
        %v2201 = vmul.f32 %v2198, %v2198
        %v2202 = vmul.f32 %v2199, %v2199
        %v2203 = vadd.f32 %v2201, %v2202
        %v2204 = vmul.f32 %v2200, %v2200
        %v2205 = vadd.f32 %v2203, %v2204
        %v2206 = vmul.f32 %v2205, 0.33333334
        %v2207 = vadd.f32 %v2206, 1e-05
        %v2208 = vrsqrt.pop %v2207
        %v2209 = vmul.f32 %v2198, %v2208
        %v2210 = vmul.f32 %v2199, %v2208
        %v2211 = vmul.f32 %v2200, %v2208
        %v2214 = vunpack.c.l.s4 1966171168
        %v2215 = vunpack.c.0.s8 %v2214
        %v2216 = vlaneseq
        %v2217 = vshrl.u32 %v2216, 7
        %v2218 = vsub.s32 %v2215, %v2217
        %v2219 = vrot.slane %v2192, %v2218
        %v2220 = vcombine.high %v2219, %v2219
        %v2222 = vunpack.c.l.s4 1966171168
        %v2223 = vunpack.c.0.s8 %v2222
        %v2224 = vlaneseq
        %v2225 = vshrl.u32 %v2224, 7
        %v2226 = vsub.s32 %v2223, %v2225
        %v2227 = vrot.slane %v2219, %v2226
        %v2229 = vunpack.c.l.s4 1966171168
        %v2230 = vunpack.c.0.s8 %v2229
        %v2231 = vlaneseq
        %v2232 = vshrl.u32 %v2231, 7
        %v2233 = vsub.s32 %v2230, %v2232
        %v2234 = vrot.slane %v2220, %v2233
        %v2235 = vcombine.high %v2227, %v2227
        %v2236 = vlaneseq
        %v2237 = vshrl.u32 %v2236, 7
        %v2238 = vsub.s32 0, %v2237
        %v2239 = vrot.slane %v2227, %v2238
        %v2240 = vlaneseq
        %v2241 = vshrl.u32 %v2240, 7
        %v2242 = vsub.s32 0, %v2241
        %v2243 = vrot.slane %v2234, %v2242
        %v2244 = vlaneseq
        %v2245 = vshrl.u32 %v2244, 7
        %v2246 = vsub.s32 0, %v2245
        %v2247 = vrot.slane %v2235, %v2246
        %2248 = vset.pattern.permute.xlu0 0
        %2249 = vperm.xlu0 %2248, %v2239
        %v2250 = vpop.permute.xlu0 %2249
        %2252 = vset.pattern.permute.xlu0 0
        %2253 = vperm.xlu0 %2252, %v2243
        %v2254 = vpop.permute.xlu0 %2253
        %2256 = vset.pattern.permute.xlu0 0
        %2257 = vperm.xlu0 %2256, %v2247
        %v2258 = vpop.permute.xlu0 %2257
        %v2260 = vmul.f32 %v2209, %v2250
        %v2261 = vmul.f32 %v2210, %v2254
        %v2262 = vmul.f32 %v2211, %v2258
        %v2265 = vunpack.c.l.s4 1966171168
        %v2266 = vunpack.c.0.s8 %v2265
        %v2267 = vlaneseq
        %v2268 = vshrl.u32 %v2267, 7
        %v2269 = vsub.s32 %v2266, %v2268
        %v2270 = vrot.slane %v2194, %v2269
        %v2271 = vcombine.high %v2270, %v2270
        %v2273 = vunpack.c.l.s4 1966171168
        %v2274 = vunpack.c.0.s8 %v2273
        %v2275 = vlaneseq
        %v2276 = vshrl.u32 %v2275, 7
        %v2277 = vsub.s32 %v2274, %v2276
        %v2278 = vrot.slane %v2270, %v2277
        %v2280 = vunpack.c.l.s4 1966171168
        %v2281 = vunpack.c.0.s8 %v2280
        %v2282 = vlaneseq
        %v2283 = vshrl.u32 %v2282, 7
        %v2284 = vsub.s32 %v2281, %v2283
        %v2285 = vrot.slane %v2271, %v2284
        %v2286 = vcombine.high %v2278, %v2278
        %v2287 = vlaneseq
        %v2288 = vshrl.u32 %v2287, 7
        %v2289 = vsub.s32 0, %v2288
        %v2290 = vrot.slane %v2278, %v2289
        %v2291 = vlaneseq
        %v2292 = vshrl.u32 %v2291, 7
        %v2293 = vsub.s32 0, %v2292
        %v2294 = vrot.slane %v2285, %v2293
        %v2295 = vlaneseq
        %v2296 = vshrl.u32 %v2295, 7
        %v2297 = vsub.s32 0, %v2296
        %v2298 = vrot.slane %v2286, %v2297
        %2299 = vset.pattern.permute.xlu0 0
        %2300 = vperm.xlu0 %2299, %v2290
        %v2301 = vpop.permute.xlu0 %2300
        %2303 = vset.pattern.permute.xlu0 0
        %2304 = vperm.xlu0 %2303, %v2294
        %v2305 = vpop.permute.xlu0 %2304
        %2307 = vset.pattern.permute.xlu0 0
        %2308 = vperm.xlu0 %2307, %v2298
        %v2309 = vpop.permute.xlu0 %2308
        %v2311 = vadd.f32 %v2260, %v2301
        %v2312 = vadd.f32 %v2261, %v2305
        %v2313 = vadd.f32 %v2262, %v2309
        %s2314 = scalar_lea.vmem [#allocation6], 16
        %v2315 = vld [vmem:[%s2314] sm:$0x7]
        %s2316 = scalar_lea.vmem [#allocation8], 16
        %v2317 = vld [vmem:[%s2316] sm:$0x7]
        %v2318 = vadd.f32 %v1075, %v1076
        %v2319 = vadd.f32 %v2318, %v1077
        %v2320 = vmul.f32 %v2319, 0.33333334
        %v2321 = vsub.f32 %v1075, %v2320
        %v2322 = vsub.f32 %v1076, %v2320
        %v2323 = vsub.f32 %v1077, %v2320
        %v2324 = vmul.f32 %v2321, %v2321
        %v2325 = vmul.f32 %v2322, %v2322
        %v2326 = vadd.f32 %v2324, %v2325
        %v2327 = vmul.f32 %v2323, %v2323
        %v2328 = vadd.f32 %v2326, %v2327
        %v2329 = vmul.f32 %v2328, 0.33333334
        %v2330 = vadd.f32 %v2329, 1e-05
        %v2331 = vrsqrt.pop %v2330
        %v2332 = vmul.f32 %v2321, %v2331
        %v2333 = vmul.f32 %v2322, %v2331
        %v2334 = vmul.f32 %v2323, %v2331
        %v2337 = vunpack.c.l.s4 1966171168
        %v2338 = vunpack.c.0.s8 %v2337
        %v2339 = vlaneseq
        %v2340 = vshrl.u32 %v2339, 7
        %v2341 = vsub.s32 %v2338, %v2340
        %v2342 = vrot.slane %v2315, %v2341
        %v2343 = vcombine.high %v2342, %v2342
        %v2345 = vunpack.c.l.s4 1966171168
        %v2346 = vunpack.c.0.s8 %v2345
        %v2347 = vlaneseq
        %v2348 = vshrl.u32 %v2347, 7
        %v2349 = vsub.s32 %v2346, %v2348
        %v2350 = vrot.slane %v2342, %v2349
        %v2352 = vunpack.c.l.s4 1966171168
        %v2353 = vunpack.c.0.s8 %v2352
        %v2354 = vlaneseq
        %v2355 = vshrl.u32 %v2354, 7
        %v2356 = vsub.s32 %v2353, %v2355
        %v2357 = vrot.slane %v2343, %v2356
        %v2358 = vcombine.high %v2350, %v2350
        %v2359 = vlaneseq
        %v2360 = vshrl.u32 %v2359, 7
        %v2361 = vsub.s32 0, %v2360
        %v2362 = vrot.slane %v2350, %v2361
        %v2363 = vlaneseq
        %v2364 = vshrl.u32 %v2363, 7
        %v2365 = vsub.s32 0, %v2364
        %v2366 = vrot.slane %v2357, %v2365
        %v2367 = vlaneseq
        %v2368 = vshrl.u32 %v2367, 7
        %v2369 = vsub.s32 0, %v2368
        %v2370 = vrot.slane %v2358, %v2369
        %2371 = vset.pattern.permute.xlu0 0
        %2372 = vperm.xlu0 %2371, %v2362
        %v2373 = vpop.permute.xlu0 %2372
        %2375 = vset.pattern.permute.xlu0 0
        %2376 = vperm.xlu0 %2375, %v2366
        %v2377 = vpop.permute.xlu0 %2376
        %2379 = vset.pattern.permute.xlu0 0
        %2380 = vperm.xlu0 %2379, %v2370
        %v2381 = vpop.permute.xlu0 %2380
        %v2383 = vmul.f32 %v2332, %v2373
        %v2384 = vmul.f32 %v2333, %v2377
        %v2385 = vmul.f32 %v2334, %v2381
        %v2388 = vunpack.c.l.s4 1966171168
        %v2389 = vunpack.c.0.s8 %v2388
        %v2390 = vlaneseq
        %v2391 = vshrl.u32 %v2390, 7
        %v2392 = vsub.s32 %v2389, %v2391
        %v2393 = vrot.slane %v2317, %v2392
        %v2394 = vcombine.high %v2393, %v2393
        %v2396 = vunpack.c.l.s4 1966171168
        %v2397 = vunpack.c.0.s8 %v2396
        %v2398 = vlaneseq
        %v2399 = vshrl.u32 %v2398, 7
        %v2400 = vsub.s32 %v2397, %v2399
        %v2401 = vrot.slane %v2393, %v2400
        %v2403 = vunpack.c.l.s4 1966171168
        %v2404 = vunpack.c.0.s8 %v2403
        %v2405 = vlaneseq
        %v2406 = vshrl.u32 %v2405, 7
        %v2407 = vsub.s32 %v2404, %v2406
        %v2408 = vrot.slane %v2394, %v2407
        %v2409 = vcombine.high %v2401, %v2401
        %v2410 = vlaneseq
        %v2411 = vshrl.u32 %v2410, 7
        %v2412 = vsub.s32 0, %v2411
        %v2413 = vrot.slane %v2401, %v2412
        %v2414 = vlaneseq
        %v2415 = vshrl.u32 %v2414, 7
        %v2416 = vsub.s32 0, %v2415
        %v2417 = vrot.slane %v2408, %v2416
        %v2418 = vlaneseq
        %v2419 = vshrl.u32 %v2418, 7
        %v2420 = vsub.s32 0, %v2419
        %v2421 = vrot.slane %v2409, %v2420
        %2422 = vset.pattern.permute.xlu0 0
        %2423 = vperm.xlu0 %2422, %v2413
        %v2424 = vpop.permute.xlu0 %2423
        %2426 = vset.pattern.permute.xlu0 0
        %2427 = vperm.xlu0 %2426, %v2417
        %v2428 = vpop.permute.xlu0 %2427
        %2430 = vset.pattern.permute.xlu0 0
        %2431 = vperm.xlu0 %2430, %v2421
        %v2432 = vpop.permute.xlu0 %2431
        %v2434 = vadd.f32 %v2383, %v2424
        %v2435 = vadd.f32 %v2384, %v2428
        %v2436 = vadd.f32 %v2385, %v2432
        %s2437 = scalar_lea.vmem [#allocation6], 20
        %v2438 = vld [vmem:[%s2437] sm:$0x7]
        %s2439 = scalar_lea.vmem [#allocation8], 20
        %v2440 = vld [vmem:[%s2439] sm:$0x7]
        %v2441 = vadd.f32 %v1132, %v1133
        %v2442 = vadd.f32 %v2441, %v1134
        %v2443 = vmul.f32 %v2442, 0.33333334
        %v2444 = vsub.f32 %v1132, %v2443
        %v2445 = vsub.f32 %v1133, %v2443
        %v2446 = vsub.f32 %v1134, %v2443
        %v2447 = vmul.f32 %v2444, %v2444
        %v2448 = vmul.f32 %v2445, %v2445
        %v2449 = vadd.f32 %v2447, %v2448
        %v2450 = vmul.f32 %v2446, %v2446
        %v2451 = vadd.f32 %v2449, %v2450
        %v2452 = vmul.f32 %v2451, 0.33333334
        %v2453 = vadd.f32 %v2452, 1e-05
        %v2454 = vrsqrt.pop %v2453
        %v2455 = vmul.f32 %v2444, %v2454
        %v2456 = vmul.f32 %v2445, %v2454
        %v2457 = vmul.f32 %v2446, %v2454
        %v2460 = vunpack.c.l.s4 1966171168
        %v2461 = vunpack.c.0.s8 %v2460
        %v2462 = vlaneseq
        %v2463 = vshrl.u32 %v2462, 7
        %v2464 = vsub.s32 %v2461, %v2463
        %v2465 = vrot.slane %v2438, %v2464
        %v2466 = vcombine.high %v2465, %v2465
        %v2468 = vunpack.c.l.s4 1966171168
        %v2469 = vunpack.c.0.s8 %v2468
        %v2470 = vlaneseq
        %v2471 = vshrl.u32 %v2470, 7
        %v2472 = vsub.s32 %v2469, %v2471
        %v2473 = vrot.slane %v2465, %v2472
        %v2475 = vunpack.c.l.s4 1966171168
        %v2476 = vunpack.c.0.s8 %v2475
        %v2477 = vlaneseq
        %v2478 = vshrl.u32 %v2477, 7
        %v2479 = vsub.s32 %v2476, %v2478
        %v2480 = vrot.slane %v2466, %v2479
        %v2481 = vcombine.high %v2473, %v2473
        %v2482 = vlaneseq
        %v2483 = vshrl.u32 %v2482, 7
        %v2484 = vsub.s32 0, %v2483
        %v2485 = vrot.slane %v2473, %v2484
        %v2486 = vlaneseq
        %v2487 = vshrl.u32 %v2486, 7
        %v2488 = vsub.s32 0, %v2487
        %v2489 = vrot.slane %v2480, %v2488
        %v2490 = vlaneseq
        %v2491 = vshrl.u32 %v2490, 7
        %v2492 = vsub.s32 0, %v2491
        %v2493 = vrot.slane %v2481, %v2492
        %2494 = vset.pattern.permute.xlu0 0
        %2495 = vperm.xlu0 %2494, %v2485
        %v2496 = vpop.permute.xlu0 %2495
        %2498 = vset.pattern.permute.xlu0 0
        %2499 = vperm.xlu0 %2498, %v2489
        %v2500 = vpop.permute.xlu0 %2499
        %2502 = vset.pattern.permute.xlu0 0
        %2503 = vperm.xlu0 %2502, %v2493
        %v2504 = vpop.permute.xlu0 %2503
        %v2506 = vmul.f32 %v2455, %v2496
        %v2507 = vmul.f32 %v2456, %v2500
        %v2508 = vmul.f32 %v2457, %v2504
        %v2511 = vunpack.c.l.s4 1966171168
        %v2512 = vunpack.c.0.s8 %v2511
        %v2513 = vlaneseq
        %v2514 = vshrl.u32 %v2513, 7
        %v2515 = vsub.s32 %v2512, %v2514
        %v2516 = vrot.slane %v2440, %v2515
        %v2517 = vcombine.high %v2516, %v2516
        %v2519 = vunpack.c.l.s4 1966171168
        %v2520 = vunpack.c.0.s8 %v2519
        %v2521 = vlaneseq
        %v2522 = vshrl.u32 %v2521, 7
        %v2523 = vsub.s32 %v2520, %v2522
        %v2524 = vrot.slane %v2516, %v2523
        %v2526 = vunpack.c.l.s4 1966171168
        %v2527 = vunpack.c.0.s8 %v2526
        %v2528 = vlaneseq
        %v2529 = vshrl.u32 %v2528, 7
        %v2530 = vsub.s32 %v2527, %v2529
        %v2531 = vrot.slane %v2517, %v2530
        %v2532 = vcombine.high %v2524, %v2524
        %v2533 = vlaneseq
        %v2534 = vshrl.u32 %v2533, 7
        %v2535 = vsub.s32 0, %v2534
        %v2536 = vrot.slane %v2524, %v2535
        %v2537 = vlaneseq
        %v2538 = vshrl.u32 %v2537, 7
        %v2539 = vsub.s32 0, %v2538
        %v2540 = vrot.slane %v2531, %v2539
        %v2541 = vlaneseq
        %v2542 = vshrl.u32 %v2541, 7
        %v2543 = vsub.s32 0, %v2542
        %v2544 = vrot.slane %v2532, %v2543
        %2545 = vset.pattern.permute.xlu0 0
        %2546 = vperm.xlu0 %2545, %v2536
        %v2547 = vpop.permute.xlu0 %2546
        %2549 = vset.pattern.permute.xlu0 0
        %2550 = vperm.xlu0 %2549, %v2540
        %v2551 = vpop.permute.xlu0 %2550
        %2553 = vset.pattern.permute.xlu0 0
        %2554 = vperm.xlu0 %2553, %v2544
        %v2555 = vpop.permute.xlu0 %2554
        %v2557 = vadd.f32 %v2506, %v2547
        %v2558 = vadd.f32 %v2507, %v2551
        %v2559 = vadd.f32 %v2508, %v2555
        %s2560 = scalar_lea.vmem [#allocation6], 24
        %v2561 = vld [vmem:[%s2560] sm:$0x7]
        %s2562 = scalar_lea.vmem [#allocation8], 24
        %v2563 = vld [vmem:[%s2562] sm:$0x7]
        %v2564 = vadd.f32 %v949, %v950
        %v2565 = vadd.f32 %v2564, %v951
        %v2566 = vmul.f32 %v2565, 0.33333334
        %v2567 = vsub.f32 %v949, %v2566
        %v2568 = vsub.f32 %v950, %v2566
        %v2569 = vsub.f32 %v951, %v2566
        %v2570 = vmul.f32 %v2567, %v2567
        %v2571 = vmul.f32 %v2568, %v2568
        %v2572 = vadd.f32 %v2570, %v2571
        %v2573 = vmul.f32 %v2569, %v2569
        %v2574 = vadd.f32 %v2572, %v2573
        %v2575 = vmul.f32 %v2574, 0.33333334
        %v2576 = vadd.f32 %v2575, 1e-05
        %v2577 = vrsqrt.pop %v2576
        %v2578 = vmul.f32 %v2567, %v2577
        %v2579 = vmul.f32 %v2568, %v2577
        %v2580 = vmul.f32 %v2569, %v2577
        %v2583 = vunpack.c.l.s4 1966171168
        %v2584 = vunpack.c.0.s8 %v2583
        %v2585 = vlaneseq
        %v2586 = vshrl.u32 %v2585, 7
        %v2587 = vsub.s32 %v2584, %v2586
        %v2588 = vrot.slane %v2561, %v2587
        %v2589 = vcombine.high %v2588, %v2588
        %v2591 = vunpack.c.l.s4 1966171168
        %v2592 = vunpack.c.0.s8 %v2591
        %v2593 = vlaneseq
        %v2594 = vshrl.u32 %v2593, 7
        %v2595 = vsub.s32 %v2592, %v2594
        %v2596 = vrot.slane %v2588, %v2595
        %v2598 = vunpack.c.l.s4 1966171168
        %v2599 = vunpack.c.0.s8 %v2598
        %v2600 = vlaneseq
        %v2601 = vshrl.u32 %v2600, 7
        %v2602 = vsub.s32 %v2599, %v2601
        %v2603 = vrot.slane %v2589, %v2602
        %v2604 = vcombine.high %v2596, %v2596
        %v2605 = vlaneseq
        %v2606 = vshrl.u32 %v2605, 7
        %v2607 = vsub.s32 0, %v2606
        %v2608 = vrot.slane %v2596, %v2607
        %v2609 = vlaneseq
        %v2610 = vshrl.u32 %v2609, 7
        %v2611 = vsub.s32 0, %v2610
        %v2612 = vrot.slane %v2603, %v2611
        %v2613 = vlaneseq
        %v2614 = vshrl.u32 %v2613, 7
        %v2615 = vsub.s32 0, %v2614
        %v2616 = vrot.slane %v2604, %v2615
        %2617 = vset.pattern.permute.xlu0 0
        %2618 = vperm.xlu0 %2617, %v2608
        %v2619 = vpop.permute.xlu0 %2618
        %2621 = vset.pattern.permute.xlu0 0
        %2622 = vperm.xlu0 %2621, %v2612
        %v2623 = vpop.permute.xlu0 %2622
        %2625 = vset.pattern.permute.xlu0 0
        %2626 = vperm.xlu0 %2625, %v2616
        %v2627 = vpop.permute.xlu0 %2626
        %v2629 = vmul.f32 %v2578, %v2619
        %v2630 = vmul.f32 %v2579, %v2623
        %v2631 = vmul.f32 %v2580, %v2627
        %v2634 = vunpack.c.l.s4 1966171168
        %v2635 = vunpack.c.0.s8 %v2634
        %v2636 = vlaneseq
        %v2637 = vshrl.u32 %v2636, 7
        %v2638 = vsub.s32 %v2635, %v2637
        %v2639 = vrot.slane %v2563, %v2638
        %v2640 = vcombine.high %v2639, %v2639
        %v2642 = vunpack.c.l.s4 1966171168
        %v2643 = vunpack.c.0.s8 %v2642
        %v2644 = vlaneseq
        %v2645 = vshrl.u32 %v2644, 7
        %v2646 = vsub.s32 %v2643, %v2645
        %v2647 = vrot.slane %v2639, %v2646
        %v2649 = vunpack.c.l.s4 1966171168
        %v2650 = vunpack.c.0.s8 %v2649
        %v2651 = vlaneseq
        %v2652 = vshrl.u32 %v2651, 7
        %v2653 = vsub.s32 %v2650, %v2652
        %v2654 = vrot.slane %v2640, %v2653
        %v2655 = vcombine.high %v2647, %v2647
        %v2656 = vlaneseq
        %v2657 = vshrl.u32 %v2656, 7
        %v2658 = vsub.s32 0, %v2657
        %v2659 = vrot.slane %v2647, %v2658
        %v2660 = vlaneseq
        %v2661 = vshrl.u32 %v2660, 7
        %v2662 = vsub.s32 0, %v2661
        %v2663 = vrot.slane %v2654, %v2662
        %v2664 = vlaneseq
        %v2665 = vshrl.u32 %v2664, 7
        %v2666 = vsub.s32 0, %v2665
        %v2667 = vrot.slane %v2655, %v2666
        %2668 = vset.pattern.permute.xlu0 0
        %2669 = vperm.xlu0 %2668, %v2659
        %v2670 = vpop.permute.xlu0 %2669
        %2672 = vset.pattern.permute.xlu0 0
        %2673 = vperm.xlu0 %2672, %v2663
        %v2674 = vpop.permute.xlu0 %2673
        %2676 = vset.pattern.permute.xlu0 0
        %2677 = vperm.xlu0 %2676, %v2667
        %v2678 = vpop.permute.xlu0 %2677
        %v2680 = vadd.f32 %v2629, %v2670
        %v2681 = vadd.f32 %v2630, %v2674
        %v2682 = vadd.f32 %v2631, %v2678
        %2686 = vrot.lane.b32.xlu0 %v893, 4
        %v2687 = vpop.permute.xlu0 %2686
        %2688 = vrot.lane.b32.xlu0 %v903, 4
        %v2689 = vpop.permute.xlu0 %2688
        %2690 = vrot.lane.b32.xlu0 %v913, 4
        %v2691 = vpop.permute.xlu0 %2690
        %2698 = vrot.lane.b32.xlu0 %v894, 8
        %v2699 = vpop.permute.xlu0 %2698
        %2700 = vrot.lane.b32.xlu0 %v904, 8
        %v2701 = vpop.permute.xlu0 %2700
        %2702 = vrot.lane.b32.xlu0 %v914, 8
        %v2703 = vpop.permute.xlu0 %2702
        %2710 = vrot.lane.b32.xlu0 %v895, 12
        %v2711 = vpop.permute.xlu0 %2710
        %2712 = vrot.lane.b32.xlu0 %v905, 12
        %v2713 = vpop.permute.xlu0 %2712
        %2714 = vrot.lane.b32.xlu0 %v915, 12
        %v2715 = vpop.permute.xlu0 %2714
        %2722 = vrot.lane.b32.xlu0 %v896, 16
        %v2723 = vpop.permute.xlu0 %2722
        %2724 = vrot.lane.b32.xlu0 %v906, 16
        %v2725 = vpop.permute.xlu0 %2724
        %2726 = vrot.lane.b32.xlu0 %v916, 16
        %v2727 = vpop.permute.xlu0 %2726
        %2734 = vrot.lane.b32.xlu0 %v897, 20
        %v2735 = vpop.permute.xlu0 %2734
        %2736 = vrot.lane.b32.xlu0 %v907, 20
        %v2737 = vpop.permute.xlu0 %2736
        %2738 = vrot.lane.b32.xlu0 %v917, 20
        %v2739 = vpop.permute.xlu0 %2738
        %2746 = vrot.lane.b32.xlu0 %v898, 24
        %v2747 = vpop.permute.xlu0 %2746
        %2748 = vrot.lane.b32.xlu0 %v908, 24
        %v2749 = vpop.permute.xlu0 %2748
        %2750 = vrot.lane.b32.xlu0 %v918, 24
        %v2751 = vpop.permute.xlu0 %2750
        %2758 = vrot.lane.b32.xlu0 %v899, 28
        %v2759 = vpop.permute.xlu0 %2758
        %2760 = vrot.lane.b32.xlu0 %v909, 28
        %v2761 = vpop.permute.xlu0 %2760
        %2762 = vrot.lane.b32.xlu0 %v919, 28
        %v2763 = vpop.permute.xlu0 %2762
        %2770 = vrot.lane.b32.xlu0 %v900, 32
        %v2771 = vpop.permute.xlu0 %2770
        %2772 = vrot.lane.b32.xlu0 %v910, 32
        %v2773 = vpop.permute.xlu0 %2772
        %2774 = vrot.lane.b32.xlu0 %v920, 32
        %v2775 = vpop.permute.xlu0 %2774
        %2782 = vrot.lane.b32.xlu0 %v901, 36
        %v2783 = vpop.permute.xlu0 %2782
        %2784 = vrot.lane.b32.xlu0 %v911, 36
        %v2785 = vpop.permute.xlu0 %2784
        %2786 = vrot.lane.b32.xlu0 %v921, 36
        %v2787 = vpop.permute.xlu0 %2786
        %vm2791 = vcmask 31744
        %v2792 = vsel %vm2791, %v892, %v2687
        %v2793 = vsel %vm2791, %v902, %v2689
        %v2794 = vsel %vm2791, %v912, %v2691
        %vm2795 = vcmask 64512
        %v2796 = vsel %vm2795, %v2792, %v2699
        %v2797 = vsel %vm2795, %v2793, %v2701
        %v2798 = vsel %vm2795, %v2794, %v2703
        %vm2799 = vcmask 97280
        %v2800 = vsel %vm2799, %v2796, %v2711
        %v2801 = vsel %vm2799, %v2797, %v2713
        %v2802 = vsel %vm2799, %v2798, %v2715
        %vm2803 = vcmask 130048
        %v2804 = vsel %vm2803, %v2800, %v2723
        %v2805 = vsel %vm2803, %v2801, %v2725
        %v2806 = vsel %vm2803, %v2802, %v2727
        %vm2807 = vcmask 162816
        %v2808 = vsel %vm2807, %v2804, %v2735
        %v2809 = vsel %vm2807, %v2805, %v2737
        %v2810 = vsel %vm2807, %v2806, %v2739
        %vm2811 = vcmask 195584
        %v2812 = vsel %vm2811, %v2808, %v2747
        %v2813 = vsel %vm2811, %v2809, %v2749
        %v2814 = vsel %vm2811, %v2810, %v2751
        %vm2815 = vcmask 228352
        %v2816 = vsel %vm2815, %v2812, %v2759
        %v2817 = vsel %vm2815, %v2813, %v2761
        %v2818 = vsel %vm2815, %v2814, %v2763
        %vm2819 = vcmask 261120
        %v2820 = vsel %vm2819, %v2816, %v2771
        %v2821 = vsel %vm2819, %v2817, %v2773
        %v2822 = vsel %vm2819, %v2818, %v2775
        %vm2823 = vcmask 293888
        %v2824 = vsel %vm2823, %v2820, %v2783
        %v2825 = vsel %vm2823, %v2821, %v2785
        %v2826 = vsel %vm2823, %v2822, %v2787
        %v2827 = vld [vmem:[#allocation9] sm:$0xff]
        %v2828 = vld [vmem:[#allocation9 + $0x8] sm:$0xff]
        %v2829 = vld [vmem:[#allocation9 + $0x10] sm:$0xff]
        %v2830 = vld [vmem:[#allocation9 + $0x18] sm:$0xff]
        %v2831 = vld [vmem:[#allocation9 + $0x20] sm:$0xff]
        %v2832 = vld [vmem:[#allocation11] sm:$0x1]
        %v2834 = vlaneseq
        %v2835 = vshrl.u32 %v2834, 7
        %v2836 = vsub.s32 0, %v2835
        %v2837 = vrot.slane %v2832, %v2836
        %vm2839 = vcmask 326656
        %v2841 = vsel %vm2839, %v2824, 0
        %v2844 = vsel %vm2839, %v2825, 0
        %v2847 = vsel %vm2839, %v2826, 0
        %2849 = vmatprep.subr.mxu0 0.0
        %2850 = vmatpush1.msra.mxu0 %v2827
        %2851 = vmatprep.subr.mxu0 0.0
        %2852 = vmatpush1.msra.mxu0 %v2828
        %2853 = vmatprep.subr.mxu0 0.0
        %2854 = vmatpush1.msra.mxu0 %v2829
        %2855 = vmatprep.subr.mxu0 0.0
        %2856 = vmatpush1.msra.mxu0 %v2830
        %2857 = vmatprep.subr.mxu0 0.0
        %2858 = vmatpush1.msra.mxu0 %v2831
        %2859 = vmatprep.subr.mxu0 0.0
        %2860 = vmatpush1.msra.mxu0 0.0
        %2861 = vmatprep.subr.mxu0 0.0
        %2862 = vmatpush1.msra.mxu0 0.0
        %2863 = vmatprep.subr.mxu0 0.0
        %2864 = vmatpush1.msra.mxu0 0.0
        %2865 = vmatprep.subr.mxu0 0.0
        %2866 = vmatpush1.msra.mxu0 0.0
        %2867 = vmatprep.subr.mxu0 0.0
        %2868 = vmatpush1.msra.mxu0 0.0
        %2869 = vmatprep.subr.mxu0 0.0
        %2870 = vmatpush1.msra.mxu0 0.0
        %2871 = vmatprep.subr.mxu0 0.0
        %2872 = vmatpush1.msra.mxu0 0.0
        %2873 = vmatprep.subr.mxu0 0.0
        %2874 = vmatpush1.msra.mxu0 0.0
        %2875 = vmatprep.subr.mxu0 0.0
        %2876 = vmatpush1.msra.mxu0 0.0
        %2877 = vmatprep.subr.mxu0 0.0
        %2878 = vmatpush1.msra.mxu0 0.0
        %2879 = vmatprep.subr.mxu0 0.0
        %2880 = vmatpush1.msra.mxu0 0.0
        %2881 = vmatprep.subr.mxu0 0.0
        %2882 = vmatpush1.msra.mxu0 0.0
        %2883 = vmatprep.subr.mxu0 0.0
        %2884 = vmatpush1.msra.mxu0 0.0
        %2885 = vmatprep.subr.mxu0 0.0
        %2886 = vmatpush1.msra.mxu0 0.0
        %2887 = vmatprep.subr.mxu0 0.0
        %2888 = vmatpush1.msra.mxu0 0.0
        %2889 = vmatprep.subr.mxu0 0.0
        %2890 = vmatpush1.msra.mxu0 0.0
        %2891 = vmatprep.subr.mxu0 0.0
        %2892 = vmatpush1.msra.mxu0 0.0
        %2893 = vmatprep.subr.mxu0 0.0
        %2894 = vmatpush1.msra.mxu0 0.0
        %2895 = vmatprep.subr.mxu0 0.0
        %2896 = vmatpush1.msra.mxu0 0.0
        %2897 = vmatprep.subr.mxu0 0.0
        %2898 = vmatpush1.msra.mxu0 0.0
        %2899 = vmatprep.subr.mxu0 0.0
        %2900 = vmatpush1.msra.mxu0 0.0
        %2901 = vmatprep.subr.mxu0 0.0
        %2902 = vmatpush1.msra.mxu0 0.0
        %2903 = vmatprep.subr.mxu0 0.0
        %2904 = vmatpush1.msra.mxu0 0.0
        %2905 = vmatprep.subr.mxu0 0.0
        %2906 = vmatpush1.msra.mxu0 0.0
        %2907 = vmatprep.subr.mxu0 0.0
        %2908 = vmatpush1.msra.mxu0 0.0
        %2909 = vmatprep.subr.mxu0 0.0
        %2910 = vmatpush1.msra.mxu0 0.0
        %2911 = vmatprep.subr.mxu0 0.0
        %2912 = vmatpush1.msra.mxu0 0.0
        %2913 = vmatprep.mubr.f32.mxu0 0.0
        %2914 = vmatmul.mubr.f32.gmra.mrb[0].mxu0 %v2841
        %v2915 = vpop.f32.mrb[0].mxu0
        %v2916 = vadd.f32 %v2837, %v2915
        %v2917 = vpop.f32.mrb[0].mxu0
        %2918 = vmatprep.mubr.f32.mxu0 0.0
        %2919 = vmatmul.mubr.f32.gmra.mrb[0].mxu0 %v2844
        %v2920 = vpop.f32.mrb[0].mxu0
        %v2921 = vadd.f32 %v2837, %v2920
        %v2922 = vpop.f32.mrb[0].mxu0
        %2923 = vmatprep.mubr.f32.mxu0 0.0
        %2924 = vmatmul.mubr.f32.gmra.mrb[0].mxu0 %v2847
        %v2925 = vpop.f32.mrb[0].mxu0
        %v2926 = vadd.f32 %v2837, %v2925
        %v2927 = vpop.f32.mrb[0].mxu0
        %2928 = vdwg.mxu0
        %v2929 = vld [vmem:[#allocation24] sm:$0x7]
        %v2930 = vld [vmem:[#allocation26] sm:$0x7]
        %v2931 = vadd.f32 %v2916, %v2921
        %v2932 = vadd.f32 %v2931, %v2926
        %v2933 = vmul.f32 %v2932, 0.33333334
        %v2934 = vsub.f32 %v2916, %v2933
        %v2935 = vsub.f32 %v2921, %v2933
        %v2936 = vsub.f32 %v2926, %v2933
        %v2937 = vmul.f32 %v2934, %v2934
        %v2938 = vmul.f32 %v2935, %v2935
        %v2939 = vadd.f32 %v2937, %v2938
        %v2940 = vmul.f32 %v2936, %v2936
        %v2941 = vadd.f32 %v2939, %v2940
        %v2942 = vmul.f32 %v2941, 0.33333334
        %v2943 = vadd.f32 %v2942, 1e-05
        %v2944 = vrsqrt.pop %v2943
        %v2945 = vmul.f32 %v2934, %v2944
        %v2946 = vmul.f32 %v2935, %v2944
        %v2947 = vmul.f32 %v2936, %v2944
        %v2950 = vunpack.c.l.s4 1966171168
        %v2951 = vunpack.c.0.s8 %v2950
        %v2952 = vlaneseq
        %v2953 = vshrl.u32 %v2952, 7
        %v2954 = vsub.s32 %v2951, %v2953
        %v2955 = vrot.slane %v2929, %v2954
        %v2956 = vcombine.high %v2955, %v2955
        %v2958 = vunpack.c.l.s4 1966171168
        %v2959 = vunpack.c.0.s8 %v2958
        %v2960 = vlaneseq
        %v2961 = vshrl.u32 %v2960, 7
        %v2962 = vsub.s32 %v2959, %v2961
        %v2963 = vrot.slane %v2955, %v2962
        %v2965 = vunpack.c.l.s4 1966171168
        %v2966 = vunpack.c.0.s8 %v2965
        %v2967 = vlaneseq
        %v2968 = vshrl.u32 %v2967, 7
        %v2969 = vsub.s32 %v2966, %v2968
        %v2970 = vrot.slane %v2956, %v2969
        %v2971 = vcombine.high %v2963, %v2963
        %v2972 = vlaneseq
        %v2973 = vshrl.u32 %v2972, 7
        %v2974 = vsub.s32 0, %v2973
        %v2975 = vrot.slane %v2963, %v2974
        %v2976 = vlaneseq
        %v2977 = vshrl.u32 %v2976, 7
        %v2978 = vsub.s32 0, %v2977
        %v2979 = vrot.slane %v2970, %v2978
        %v2980 = vlaneseq
        %v2981 = vshrl.u32 %v2980, 7
        %v2982 = vsub.s32 0, %v2981
        %v2983 = vrot.slane %v2971, %v2982
        %2984 = vset.pattern.permute.xlu0 0
        %2985 = vperm.xlu0 %2984, %v2975
        %v2986 = vpop.permute.xlu0 %2985
        %2988 = vset.pattern.permute.xlu0 0
        %2989 = vperm.xlu0 %2988, %v2979
        %v2990 = vpop.permute.xlu0 %2989
        %2992 = vset.pattern.permute.xlu0 0
        %2993 = vperm.xlu0 %2992, %v2983
        %v2994 = vpop.permute.xlu0 %2993
        %v2996 = vmul.f32 %v2945, %v2986
        %v2997 = vmul.f32 %v2946, %v2990
        %v2998 = vmul.f32 %v2947, %v2994
        %v3001 = vunpack.c.l.s4 1966171168
        %v3002 = vunpack.c.0.s8 %v3001
        %v3003 = vlaneseq
        %v3004 = vshrl.u32 %v3003, 7
        %v3005 = vsub.s32 %v3002, %v3004
        %v3006 = vrot.slane %v2930, %v3005
        %v3007 = vcombine.high %v3006, %v3006
        %v3009 = vunpack.c.l.s4 1966171168
        %v3010 = vunpack.c.0.s8 %v3009
        %v3011 = vlaneseq
        %v3012 = vshrl.u32 %v3011, 7
        %v3013 = vsub.s32 %v3010, %v3012
        %v3014 = vrot.slane %v3006, %v3013
        %v3016 = vunpack.c.l.s4 1966171168
        %v3017 = vunpack.c.0.s8 %v3016
        %v3018 = vlaneseq
        %v3019 = vshrl.u32 %v3018, 7
        %v3020 = vsub.s32 %v3017, %v3019
        %v3021 = vrot.slane %v3007, %v3020
        %v3022 = vcombine.high %v3014, %v3014
        %v3023 = vlaneseq
        %v3024 = vshrl.u32 %v3023, 7
        %v3025 = vsub.s32 0, %v3024
        %v3026 = vrot.slane %v3014, %v3025
        %v3027 = vlaneseq
        %v3028 = vshrl.u32 %v3027, 7
        %v3029 = vsub.s32 0, %v3028
        %v3030 = vrot.slane %v3021, %v3029
        %v3031 = vlaneseq
        %v3032 = vshrl.u32 %v3031, 7
        %v3033 = vsub.s32 0, %v3032
        %v3034 = vrot.slane %v3022, %v3033
        %3035 = vset.pattern.permute.xlu0 0
        %3036 = vperm.xlu0 %3035, %v3026
        %v3037 = vpop.permute.xlu0 %3036
        %3039 = vset.pattern.permute.xlu0 0
        %3040 = vperm.xlu0 %3039, %v3030
        %v3041 = vpop.permute.xlu0 %3040
        %3043 = vset.pattern.permute.xlu0 0
        %3044 = vperm.xlu0 %3043, %v3034
        %v3045 = vpop.permute.xlu0 %3044
        %v3047 = vadd.f32 %v2996, %v3037
        %v3048 = vadd.f32 %v2997, %v3041
        %v3049 = vadd.f32 %v2998, %v3045
        %3053 = vrot.lane.b32.xlu0 %v2065, 6
        %v3054 = vpop.permute.xlu0 %3053
        %3055 = vrot.lane.b32.xlu0 %v2066, 6
        %v3056 = vpop.permute.xlu0 %3055
        %3057 = vrot.lane.b32.xlu0 %v2067, 6
        %v3058 = vpop.permute.xlu0 %3057
        %3065 = vrot.lane.b32.xlu0 %v2188, 12
        %v3066 = vpop.permute.xlu0 %3065
        %3067 = vrot.lane.b32.xlu0 %v2189, 12
        %v3068 = vpop.permute.xlu0 %3067
        %3069 = vrot.lane.b32.xlu0 %v2190, 12
        %v3070 = vpop.permute.xlu0 %3069
        %3077 = vrot.lane.b32.xlu0 %v2311, 16
        %v3078 = vpop.permute.xlu0 %3077
        %3079 = vrot.lane.b32.xlu0 %v2312, 16
        %v3080 = vpop.permute.xlu0 %3079
        %3081 = vrot.lane.b32.xlu0 %v2313, 16
        %v3082 = vpop.permute.xlu0 %3081
        %3089 = vrot.lane.b32.xlu0 %v2434, 20
        %v3090 = vpop.permute.xlu0 %3089
        %3091 = vrot.lane.b32.xlu0 %v2435, 20
        %v3092 = vpop.permute.xlu0 %3091
        %3093 = vrot.lane.b32.xlu0 %v2436, 20
        %v3094 = vpop.permute.xlu0 %3093
        %3101 = vrot.lane.b32.xlu0 %v2557, 24
        %v3102 = vpop.permute.xlu0 %3101
        %3103 = vrot.lane.b32.xlu0 %v2558, 24
        %v3104 = vpop.permute.xlu0 %3103
        %3105 = vrot.lane.b32.xlu0 %v2559, 24
        %v3106 = vpop.permute.xlu0 %3105
        %3113 = vrot.lane.b32.xlu0 %v2680, 28
        %v3114 = vpop.permute.xlu0 %3113
        %3115 = vrot.lane.b32.xlu0 %v2681, 28
        %v3116 = vpop.permute.xlu0 %3115
        %3117 = vrot.lane.b32.xlu0 %v2682, 28
        %v3118 = vpop.permute.xlu0 %3117
        %3125 = vrot.lane.b32.xlu0 %v3047, 32
        %v3126 = vpop.permute.xlu0 %3125
        %3127 = vrot.lane.b32.xlu0 %v3048, 32
        %v3128 = vpop.permute.xlu0 %3127
        %3129 = vrot.lane.b32.xlu0 %v3049, 32
        %v3130 = vpop.permute.xlu0 %3129
        %vm3134 = vcmask 48128
        %v3135 = vsel %vm3134, %v1942, %v3054
        %v3136 = vsel %vm3134, %v1943, %v3056
        %v3137 = vsel %vm3134, %v1944, %v3058
        %v3138 = vsel %vm2799, %v3135, %v3066
        %v3139 = vsel %vm2799, %v3136, %v3068
        %v3140 = vsel %vm2799, %v3137, %v3070
        %v3141 = vsel %vm2803, %v3138, %v3078
        %v3142 = vsel %vm2803, %v3139, %v3080
        %v3143 = vsel %vm2803, %v3140, %v3082
        %v3144 = vsel %vm2807, %v3141, %v3090
        %v3145 = vsel %vm2807, %v3142, %v3092
        %v3146 = vsel %vm2807, %v3143, %v3094
        %v3147 = vsel %vm2811, %v3144, %v3102
        %v3148 = vsel %vm2811, %v3145, %v3104
        %v3149 = vsel %vm2811, %v3146, %v3106
        %v3150 = vsel %vm2815, %v3147, %v3114
        %v3151 = vsel %vm2815, %v3148, %v3116
        %v3152 = vsel %vm2815, %v3149, %v3118
        %v3153 = vsel %vm2819, %v3150, %v3126
        %v3154 = vsel %vm2819, %v3151, %v3128
        %v3155 = vsel %vm2819, %v3152, %v3130
        %s3156 = scalar_lea.vmem [#allocation24], 4
        %v3157 = vld [vmem:[%s3156] sm:$0x7]
        %s3158 = scalar_lea.vmem [#allocation26], 4
        %v3159 = vld [vmem:[%s3158] sm:$0x7]
        %v3160 = vld [vmem:[#allocation12] sm:$0xff]
        %v3161 = vld [vmem:[#allocation12 + $0x8] sm:$0xff]
        %v3162 = vld [vmem:[#allocation12 + $0x10] sm:$0xff]
        %v3163 = vld [vmem:[#allocation12 + $0x18] sm:$0xff]
        %v3164 = vld [vmem:[#allocation12 + $0x20] sm:$0xff]
        %v3165 = vld [vmem:[#allocation12 + $0x28] sm:$0xff]
        %v3166 = vld [vmem:[#allocation12 + $0x30] sm:$0xff]
        %v3167 = vld [vmem:[#allocation12 + $0x38] sm:$0xf]
        %v3168 = vld [vmem:[#allocation14] sm:$0x1]
        %v3170 = vlaneseq
        %v3171 = vshrl.u32 %v3170, 7
        %v3172 = vsub.s32 0, %v3171
        %v3173 = vrot.slane %v3168, %v3172
        %vm3175 = vcmask 490496
        %v3177 = vsel %vm3175, %v3153, 0
        %v3180 = vsel %vm3175, %v3154, 0
        %v3183 = vsel %vm3175, %v3155, 0
        %vm3185 = vcmask 1043456
        %v3187 = vsel %vm3185, %v3167, 0
        %3189 = vmatprep.subr.mxu0 0.0
        %3190 = vmatpush1.msra.mxu0 %v3160
        %3191 = vmatprep.subr.mxu0 0.0
        %3192 = vmatpush1.msra.mxu0 %v3161
        %3193 = vmatprep.subr.mxu0 0.0
        %3194 = vmatpush1.msra.mxu0 %v3162
        %3195 = vmatprep.subr.mxu0 0.0
        %3196 = vmatpush1.msra.mxu0 %v3163
        %3197 = vmatprep.subr.mxu0 0.0
        %3198 = vmatpush1.msra.mxu0 %v3164
        %3199 = vmatprep.subr.mxu0 0.0
        %3200 = vmatpush1.msra.mxu0 %v3165
        %3201 = vmatprep.subr.mxu0 0.0
        %3202 = vmatpush1.msra.mxu0 %v3166
        %3203 = vmatprep.subr.mxu0 0.0
        %3204 = vmatpush1.msra.mxu0 %v3187
        %3205 = vmatprep.subr.mxu0 0.0
        %3206 = vmatpush1.msra.mxu0 0.0
        %3207 = vmatprep.subr.mxu0 0.0
        %3208 = vmatpush1.msra.mxu0 0.0
        %3209 = vmatprep.subr.mxu0 0.0
        %3210 = vmatpush1.msra.mxu0 0.0
        %3211 = vmatprep.subr.mxu0 0.0
        %3212 = vmatpush1.msra.mxu0 0.0
        %3213 = vmatprep.subr.mxu0 0.0
        %3214 = vmatpush1.msra.mxu0 0.0
        %3215 = vmatprep.subr.mxu0 0.0
        %3216 = vmatpush1.msra.mxu0 0.0
        %3217 = vmatprep.subr.mxu0 0.0
        %3218 = vmatpush1.msra.mxu0 0.0
        %3219 = vmatprep.subr.mxu0 0.0
        %3220 = vmatpush1.msra.mxu0 0.0
        %3221 = vmatprep.subr.mxu0 0.0
        %3222 = vmatpush1.msra.mxu0 0.0
        %3223 = vmatprep.subr.mxu0 0.0
        %3224 = vmatpush1.msra.mxu0 0.0
        %3225 = vmatprep.subr.mxu0 0.0
        %3226 = vmatpush1.msra.mxu0 0.0
        %3227 = vmatprep.subr.mxu0 0.0
        %3228 = vmatpush1.msra.mxu0 0.0
        %3229 = vmatprep.subr.mxu0 0.0
        %3230 = vmatpush1.msra.mxu0 0.0
        %3231 = vmatprep.subr.mxu0 0.0
        %3232 = vmatpush1.msra.mxu0 0.0
        %3233 = vmatprep.subr.mxu0 0.0
        %3234 = vmatpush1.msra.mxu0 0.0
        %3235 = vmatprep.subr.mxu0 0.0
        %3236 = vmatpush1.msra.mxu0 0.0
        %3237 = vmatprep.subr.mxu0 0.0
        %3238 = vmatpush1.msra.mxu0 0.0
        %3239 = vmatprep.subr.mxu0 0.0
        %3240 = vmatpush1.msra.mxu0 0.0
        %3241 = vmatprep.subr.mxu0 0.0
        %3242 = vmatpush1.msra.mxu0 0.0
        %3243 = vmatprep.subr.mxu0 0.0
        %3244 = vmatpush1.msra.mxu0 0.0
        %3245 = vmatprep.subr.mxu0 0.0
        %3246 = vmatpush1.msra.mxu0 0.0
        %3247 = vmatprep.subr.mxu0 0.0
        %3248 = vmatpush1.msra.mxu0 0.0
        %3249 = vmatprep.subr.mxu0 0.0
        %3250 = vmatpush1.msra.mxu0 0.0
        %3251 = vmatprep.subr.mxu0 0.0
        %3252 = vmatpush1.msra.mxu0 0.0
        %3253 = vmatprep.mubr.f32.mxu0 0.0
        %3254 = vmatmul.mubr.f32.gmra.mrb[0].mxu0 %v3177
        %v3255 = vpop.f32.mrb[0].mxu0
        %v3256 = vadd.f32 %v3173, %v3255
        %v3257 = vpop.f32.mrb[0].mxu0
        %3258 = vmatprep.mubr.f32.mxu0 0.0
        %3259 = vmatmul.mubr.f32.gmra.mrb[0].mxu0 %v3180
        %v3260 = vpop.f32.mrb[0].mxu0
        %v3261 = vadd.f32 %v3173, %v3260
        %v3262 = vpop.f32.mrb[0].mxu0
        %3263 = vmatprep.mubr.f32.mxu0 0.0
        %3264 = vmatmul.mubr.f32.gmra.mrb[0].mxu0 %v3183
        %v3265 = vpop.f32.mrb[0].mxu0
        %v3266 = vadd.f32 %v3173, %v3265
        %v3267 = vpop.f32.mrb[0].mxu0
        %3268 = vdwg.mxu0
        %v3269 = vadd.f32 %v3256, %v3261
        %v3270 = vadd.f32 %v3269, %v3266
        %v3271 = vmul.f32 %v3270, 0.33333334
        %v3272 = vsub.f32 %v3256, %v3271
        %v3273 = vsub.f32 %v3261, %v3271
        %v3274 = vsub.f32 %v3266, %v3271
        %v3275 = vmul.f32 %v3272, %v3272
        %v3276 = vmul.f32 %v3273, %v3273
        %v3277 = vadd.f32 %v3275, %v3276
        %v3278 = vmul.f32 %v3274, %v3274
        %v3279 = vadd.f32 %v3277, %v3278
        %v3280 = vmul.f32 %v3279, 0.33333334
        %v3281 = vadd.f32 %v3280, 1e-05
        %v3282 = vrsqrt.pop %v3281
        %v3283 = vmul.f32 %v3272, %v3282
        %v3284 = vmul.f32 %v3273, %v3282
        %v3285 = vmul.f32 %v3274, %v3282
        %v3288 = vunpack.c.l.s4 1966171168
        %v3289 = vunpack.c.0.s8 %v3288
        %v3290 = vlaneseq
        %v3291 = vshrl.u32 %v3290, 7
        %v3292 = vsub.s32 %v3289, %v3291
        %v3293 = vrot.slane %v3157, %v3292
        %v3294 = vcombine.high %v3293, %v3293
        %v3296 = vunpack.c.l.s4 1966171168
        %v3297 = vunpack.c.0.s8 %v3296
        %v3298 = vlaneseq
        %v3299 = vshrl.u32 %v3298, 7
        %v3300 = vsub.s32 %v3297, %v3299
        %v3301 = vrot.slane %v3293, %v3300
        %v3303 = vunpack.c.l.s4 1966171168
        %v3304 = vunpack.c.0.s8 %v3303
        %v3305 = vlaneseq
        %v3306 = vshrl.u32 %v3305, 7
        %v3307 = vsub.s32 %v3304, %v3306
        %v3308 = vrot.slane %v3294, %v3307
        %v3309 = vcombine.high %v3301, %v3301
        %v3310 = vlaneseq
        %v3311 = vshrl.u32 %v3310, 7
        %v3312 = vsub.s32 0, %v3311
        %v3313 = vrot.slane %v3301, %v3312
        %v3314 = vlaneseq
        %v3315 = vshrl.u32 %v3314, 7
        %v3316 = vsub.s32 0, %v3315
        %v3317 = vrot.slane %v3308, %v3316
        %v3318 = vlaneseq
        %v3319 = vshrl.u32 %v3318, 7
        %v3320 = vsub.s32 0, %v3319
        %v3321 = vrot.slane %v3309, %v3320
        %3322 = vset.pattern.permute.xlu0 0
        %3323 = vperm.xlu0 %3322, %v3313
        %v3324 = vpop.permute.xlu0 %3323
        %3326 = vset.pattern.permute.xlu0 0
        %3327 = vperm.xlu0 %3326, %v3317
        %v3328 = vpop.permute.xlu0 %3327
        %3330 = vset.pattern.permute.xlu0 0
        %3331 = vperm.xlu0 %3330, %v3321
        %v3332 = vpop.permute.xlu0 %3331
        %v3334 = vmul.f32 %v3283, %v3324
        %v3335 = vmul.f32 %v3284, %v3328
        %v3336 = vmul.f32 %v3285, %v3332
        %v3339 = vunpack.c.l.s4 1966171168
        %v3340 = vunpack.c.0.s8 %v3339
        %v3341 = vlaneseq
        %v3342 = vshrl.u32 %v3341, 7
        %v3343 = vsub.s32 %v3340, %v3342
        %v3344 = vrot.slane %v3159, %v3343
        %v3345 = vcombine.high %v3344, %v3344
        %v3347 = vunpack.c.l.s4 1966171168
        %v3348 = vunpack.c.0.s8 %v3347
        %v3349 = vlaneseq
        %v3350 = vshrl.u32 %v3349, 7
        %v3351 = vsub.s32 %v3348, %v3350
        %v3352 = vrot.slane %v3344, %v3351
        %v3354 = vunpack.c.l.s4 1966171168
        %v3355 = vunpack.c.0.s8 %v3354
        %v3356 = vlaneseq
        %v3357 = vshrl.u32 %v3356, 7
        %v3358 = vsub.s32 %v3355, %v3357
        %v3359 = vrot.slane %v3345, %v3358
        %v3360 = vcombine.high %v3352, %v3352
        %v3361 = vlaneseq
        %v3362 = vshrl.u32 %v3361, 7
        %v3363 = vsub.s32 0, %v3362
        %v3364 = vrot.slane %v3352, %v3363
        %v3365 = vlaneseq
        %v3366 = vshrl.u32 %v3365, 7
        %v3367 = vsub.s32 0, %v3366
        %v3368 = vrot.slane %v3359, %v3367
        %v3369 = vlaneseq
        %v3370 = vshrl.u32 %v3369, 7
        %v3371 = vsub.s32 0, %v3370
        %v3372 = vrot.slane %v3360, %v3371
        %3373 = vset.pattern.permute.xlu0 0
        %3374 = vperm.xlu0 %3373, %v3364
        %v3375 = vpop.permute.xlu0 %3374
        %3377 = vset.pattern.permute.xlu0 0
        %3378 = vperm.xlu0 %3377, %v3368
        %v3379 = vpop.permute.xlu0 %3378
        %3381 = vset.pattern.permute.xlu0 0
        %3382 = vperm.xlu0 %3381, %v3372
        %v3383 = vpop.permute.xlu0 %3382
        %v3385 = vadd.f32 %v3334, %v3375
        %v3386 = vadd.f32 %v3335, %v3379
        %v3387 = vadd.f32 %v3336, %v3383
        %v3388 = vmax.f32 %v3385, 0.0
        %v3389 = vmax.f32 %v3386, 0.0
        %v3390 = vmax.f32 %v3387, 0.0
        %s3391 = scalar_lea.vmem [#allocation24], 8
        %v3392 = vld [vmem:[%s3391] sm:$0x7]
        %s3393 = scalar_lea.vmem [#allocation26], 8
        %v3394 = vld [vmem:[%s3393] sm:$0x7]
        %v3395 = vld [vmem:[#allocation15] sm:$0xff]
        %v3396 = vld [vmem:[#allocation15 + $0x8] sm:$0xff]
        %v3397 = vld [vmem:[#allocation15 + $0x10] sm:$0xff]
        %v3398 = vld [vmem:[#allocation15 + $0x18] sm:$0x3f]
        %v3399 = vld [vmem:[#allocation17] sm:$0x1]
        %v3401 = vlaneseq
        %v3402 = vshrl.u32 %v3401, 7
        %v3403 = vsub.s32 0, %v3402
        %v3404 = vrot.slane %v3399, %v3403
        %vm3406 = vcmask 244736
        %v3408 = vsel %vm3406, %v3388, 0
        %v3411 = vsel %vm3406, %v3389, 0
        %v3414 = vsel %vm3406, %v3390, 0
        %vm3416 = vcmask 1045504
        %v3418 = vsel %vm3416, %v3398, 0
        %3420 = vmatprep.subr.mxu0 0.0
        %3421 = vmatpush1.msra.mxu0 %v3395
        %3422 = vmatprep.subr.mxu0 0.0
        %3423 = vmatpush1.msra.mxu0 %v3396
        %3424 = vmatprep.subr.mxu0 0.0
        %3425 = vmatpush1.msra.mxu0 %v3397
        %3426 = vmatprep.subr.mxu0 0.0
        %3427 = vmatpush1.msra.mxu0 %v3418
        %3428 = vmatprep.subr.mxu0 0.0
        %3429 = vmatpush1.msra.mxu0 0.0
        %3430 = vmatprep.subr.mxu0 0.0
        %3431 = vmatpush1.msra.mxu0 0.0
        %3432 = vmatprep.subr.mxu0 0.0
        %3433 = vmatpush1.msra.mxu0 0.0
        %3434 = vmatprep.subr.mxu0 0.0
        %3435 = vmatpush1.msra.mxu0 0.0
        %3436 = vmatprep.subr.mxu0 0.0
        %3437 = vmatpush1.msra.mxu0 0.0
        %3438 = vmatprep.subr.mxu0 0.0
        %3439 = vmatpush1.msra.mxu0 0.0
        %3440 = vmatprep.subr.mxu0 0.0
        %3441 = vmatpush1.msra.mxu0 0.0
        %3442 = vmatprep.subr.mxu0 0.0
        %3443 = vmatpush1.msra.mxu0 0.0
        %3444 = vmatprep.subr.mxu0 0.0
        %3445 = vmatpush1.msra.mxu0 0.0
        %3446 = vmatprep.subr.mxu0 0.0
        %3447 = vmatpush1.msra.mxu0 0.0
        %3448 = vmatprep.subr.mxu0 0.0
        %3449 = vmatpush1.msra.mxu0 0.0
        %3450 = vmatprep.subr.mxu0 0.0
        %3451 = vmatpush1.msra.mxu0 0.0
        %3452 = vmatprep.subr.mxu0 0.0
        %3453 = vmatpush1.msra.mxu0 0.0
        %3454 = vmatprep.subr.mxu0 0.0
        %3455 = vmatpush1.msra.mxu0 0.0
        %3456 = vmatprep.subr.mxu0 0.0
        %3457 = vmatpush1.msra.mxu0 0.0
        %3458 = vmatprep.subr.mxu0 0.0
        %3459 = vmatpush1.msra.mxu0 0.0
        %3460 = vmatprep.subr.mxu0 0.0
        %3461 = vmatpush1.msra.mxu0 0.0
        %3462 = vmatprep.subr.mxu0 0.0
        %3463 = vmatpush1.msra.mxu0 0.0
        %3464 = vmatprep.subr.mxu0 0.0
        %3465 = vmatpush1.msra.mxu0 0.0
        %3466 = vmatprep.subr.mxu0 0.0
        %3467 = vmatpush1.msra.mxu0 0.0
        %3468 = vmatprep.subr.mxu0 0.0
        %3469 = vmatpush1.msra.mxu0 0.0
        %3470 = vmatprep.subr.mxu0 0.0
        %3471 = vmatpush1.msra.mxu0 0.0
        %3472 = vmatprep.subr.mxu0 0.0
        %3473 = vmatpush1.msra.mxu0 0.0
        %3474 = vmatprep.subr.mxu0 0.0
        %3475 = vmatpush1.msra.mxu0 0.0
        %3476 = vmatprep.subr.mxu0 0.0
        %3477 = vmatpush1.msra.mxu0 0.0
        %3478 = vmatprep.subr.mxu0 0.0
        %3479 = vmatpush1.msra.mxu0 0.0
        %3480 = vmatprep.subr.mxu0 0.0
        %3481 = vmatpush1.msra.mxu0 0.0
        %3482 = vmatprep.subr.mxu0 0.0
        %3483 = vmatpush1.msra.mxu0 0.0
        %3484 = vmatprep.mubr.f32.mxu0 0.0
        %3485 = vmatmul.mubr.f32.gmra.mrb[0].mxu0 %v3408
        %v3486 = vpop.f32.mrb[0].mxu0
        %v3487 = vadd.f32 %v3404, %v3486
        %v3488 = vpop.f32.mrb[0].mxu0
        %3489 = vmatprep.mubr.f32.mxu0 0.0
        %3490 = vmatmul.mubr.f32.gmra.mrb[0].mxu0 %v3411
        %v3491 = vpop.f32.mrb[0].mxu0
        %v3492 = vadd.f32 %v3404, %v3491
        %v3493 = vpop.f32.mrb[0].mxu0
        %3494 = vmatprep.mubr.f32.mxu0 0.0
        %3495 = vmatmul.mubr.f32.gmra.mrb[0].mxu0 %v3414
        %v3496 = vpop.f32.mrb[0].mxu0
        %v3497 = vadd.f32 %v3404, %v3496
        %v3498 = vpop.f32.mrb[0].mxu0
        %3499 = vdwg.mxu0
        %v3500 = vadd.f32 %v3487, %v3492
        %v3501 = vadd.f32 %v3500, %v3497
        %v3502 = vmul.f32 %v3501, 0.33333334
        %v3503 = vsub.f32 %v3487, %v3502
        %v3504 = vsub.f32 %v3492, %v3502
        %v3505 = vsub.f32 %v3497, %v3502
        %v3506 = vmul.f32 %v3503, %v3503
        %v3507 = vmul.f32 %v3504, %v3504
        %v3508 = vadd.f32 %v3506, %v3507
        %v3509 = vmul.f32 %v3505, %v3505
        %v3510 = vadd.f32 %v3508, %v3509
        %v3511 = vmul.f32 %v3510, 0.33333334
        %v3512 = vadd.f32 %v3511, 1e-05
        %v3513 = vrsqrt.pop %v3512
        %v3514 = vmul.f32 %v3503, %v3513
        %v3515 = vmul.f32 %v3504, %v3513
        %v3516 = vmul.f32 %v3505, %v3513
        %v3519 = vunpack.c.l.s4 1966171168
        %v3520 = vunpack.c.0.s8 %v3519
        %v3521 = vlaneseq
        %v3522 = vshrl.u32 %v3521, 7
        %v3523 = vsub.s32 %v3520, %v3522
        %v3524 = vrot.slane %v3392, %v3523
        %v3525 = vcombine.high %v3524, %v3524
        %v3527 = vunpack.c.l.s4 1966171168
        %v3528 = vunpack.c.0.s8 %v3527
        %v3529 = vlaneseq
        %v3530 = vshrl.u32 %v3529, 7
        %v3531 = vsub.s32 %v3528, %v3530
        %v3532 = vrot.slane %v3524, %v3531
        %v3534 = vunpack.c.l.s4 1966171168
        %v3535 = vunpack.c.0.s8 %v3534
        %v3536 = vlaneseq
        %v3537 = vshrl.u32 %v3536, 7
        %v3538 = vsub.s32 %v3535, %v3537
        %v3539 = vrot.slane %v3525, %v3538
        %v3540 = vcombine.high %v3532, %v3532
        %v3541 = vlaneseq
        %v3542 = vshrl.u32 %v3541, 7
        %v3543 = vsub.s32 0, %v3542
        %v3544 = vrot.slane %v3532, %v3543
        %v3545 = vlaneseq
        %v3546 = vshrl.u32 %v3545, 7
        %v3547 = vsub.s32 0, %v3546
        %v3548 = vrot.slane %v3539, %v3547
        %v3549 = vlaneseq
        %v3550 = vshrl.u32 %v3549, 7
        %v3551 = vsub.s32 0, %v3550
        %v3552 = vrot.slane %v3540, %v3551
        %3553 = vset.pattern.permute.xlu0 0
        %3554 = vperm.xlu0 %3553, %v3544
        %v3555 = vpop.permute.xlu0 %3554
        %3557 = vset.pattern.permute.xlu0 0
        %3558 = vperm.xlu0 %3557, %v3548
        %v3559 = vpop.permute.xlu0 %3558
        %3561 = vset.pattern.permute.xlu0 0
        %3562 = vperm.xlu0 %3561, %v3552
        %v3563 = vpop.permute.xlu0 %3562
        %v3565 = vmul.f32 %v3514, %v3555
        %v3566 = vmul.f32 %v3515, %v3559
        %v3567 = vmul.f32 %v3516, %v3563
        %v3570 = vunpack.c.l.s4 1966171168
        %v3571 = vunpack.c.0.s8 %v3570
        %v3572 = vlaneseq
        %v3573 = vshrl.u32 %v3572, 7
        %v3574 = vsub.s32 %v3571, %v3573
        %v3575 = vrot.slane %v3394, %v3574
        %v3576 = vcombine.high %v3575, %v3575
        %v3578 = vunpack.c.l.s4 1966171168
        %v3579 = vunpack.c.0.s8 %v3578
        %v3580 = vlaneseq
        %v3581 = vshrl.u32 %v3580, 7
        %v3582 = vsub.s32 %v3579, %v3581
        %v3583 = vrot.slane %v3575, %v3582
        %v3585 = vunpack.c.l.s4 1966171168
        %v3586 = vunpack.c.0.s8 %v3585
        %v3587 = vlaneseq
        %v3588 = vshrl.u32 %v3587, 7
        %v3589 = vsub.s32 %v3586, %v3588
        %v3590 = vrot.slane %v3576, %v3589
        %v3591 = vcombine.high %v3583, %v3583
        %v3592 = vlaneseq
        %v3593 = vshrl.u32 %v3592, 7
        %v3594 = vsub.s32 0, %v3593
        %v3595 = vrot.slane %v3583, %v3594
        %v3596 = vlaneseq
        %v3597 = vshrl.u32 %v3596, 7
        %v3598 = vsub.s32 0, %v3597
        %v3599 = vrot.slane %v3590, %v3598
        %v3600 = vlaneseq
        %v3601 = vshrl.u32 %v3600, 7
        %v3602 = vsub.s32 0, %v3601
        %v3603 = vrot.slane %v3591, %v3602
        %3604 = vset.pattern.permute.xlu0 0
        %3605 = vperm.xlu0 %3604, %v3595
        %v3606 = vpop.permute.xlu0 %3605
        %3608 = vset.pattern.permute.xlu0 0
        %3609 = vperm.xlu0 %3608, %v3599
        %v3610 = vpop.permute.xlu0 %3609
        %3612 = vset.pattern.permute.xlu0 0
        %3613 = vperm.xlu0 %3612, %v3603
        %v3614 = vpop.permute.xlu0 %3613
        %v3616 = vadd.f32 %v3565, %v3606
        %v3617 = vadd.f32 %v3566, %v3610
        %v3618 = vadd.f32 %v3567, %v3614
        %v3619 = vmax.f32 %v3616, 0.0
        %v3620 = vmax.f32 %v3617, 0.0
        %v3621 = vmax.f32 %v3618, 0.0
        %s3622 = scalar_lea.vmem [#allocation24], 12
        %v3623 = vld [vmem:[%s3622] sm:$0x7]
        %s3624 = scalar_lea.vmem [#allocation26], 12
        %v3625 = vld [vmem:[%s3624] sm:$0x7]
        %v3626 = vld [vmem:[#allocation18] sm:$0xff]
        %v3627 = vld [vmem:[#allocation18 + $0x8] sm:$0x7f]
        %v3628 = vld [vmem:[#allocation20] sm:$0x1]
        %v3630 = vlaneseq
        %v3631 = vshrl.u32 %v3630, 7
        %v3632 = vsub.s32 0, %v3631
        %v3633 = vrot.slane %v3628, %v3632
        %vm3635 = vcmask 121856
        %v3637 = vsel %vm3635, %v3619, 0
        %v3640 = vsel %vm3635, %v3620, 0
        %v3643 = vsel %vm3635, %v3621, 0
        %vm3645 = vcmask 1046528
        %v3647 = vsel %vm3645, %v3627, 0
        %3649 = vmatprep.subr.mxu0 0.0
        %3650 = vmatpush1.msra.mxu0 %v3626
        %3651 = vmatprep.subr.mxu0 0.0
        %3652 = vmatpush1.msra.mxu0 %v3647
        %3653 = vmatprep.subr.mxu0 0.0
        %3654 = vmatpush1.msra.mxu0 0.0
        %3655 = vmatprep.subr.mxu0 0.0
        %3656 = vmatpush1.msra.mxu0 0.0
        %3657 = vmatprep.subr.mxu0 0.0
        %3658 = vmatpush1.msra.mxu0 0.0
        %3659 = vmatprep.subr.mxu0 0.0
        %3660 = vmatpush1.msra.mxu0 0.0
        %3661 = vmatprep.subr.mxu0 0.0
        %3662 = vmatpush1.msra.mxu0 0.0
        %3663 = vmatprep.subr.mxu0 0.0
        %3664 = vmatpush1.msra.mxu0 0.0
        %3665 = vmatprep.subr.mxu0 0.0
        %3666 = vmatpush1.msra.mxu0 0.0
        %3667 = vmatprep.subr.mxu0 0.0
        %3668 = vmatpush1.msra.mxu0 0.0
        %3669 = vmatprep.subr.mxu0 0.0
        %3670 = vmatpush1.msra.mxu0 0.0
        %3671 = vmatprep.subr.mxu0 0.0
        %3672 = vmatpush1.msra.mxu0 0.0
        %3673 = vmatprep.subr.mxu0 0.0
        %3674 = vmatpush1.msra.mxu0 0.0
        %3675 = vmatprep.subr.mxu0 0.0
        %3676 = vmatpush1.msra.mxu0 0.0
        %3677 = vmatprep.subr.mxu0 0.0
        %3678 = vmatpush1.msra.mxu0 0.0
        %3679 = vmatprep.subr.mxu0 0.0
        %3680 = vmatpush1.msra.mxu0 0.0
        %3681 = vmatprep.subr.mxu0 0.0
        %3682 = vmatpush1.msra.mxu0 0.0
        %3683 = vmatprep.subr.mxu0 0.0
        %3684 = vmatpush1.msra.mxu0 0.0
        %3685 = vmatprep.subr.mxu0 0.0
        %3686 = vmatpush1.msra.mxu0 0.0
        %3687 = vmatprep.subr.mxu0 0.0
        %3688 = vmatpush1.msra.mxu0 0.0
        %3689 = vmatprep.subr.mxu0 0.0
        %3690 = vmatpush1.msra.mxu0 0.0
        %3691 = vmatprep.subr.mxu0 0.0
        %3692 = vmatpush1.msra.mxu0 0.0
        %3693 = vmatprep.subr.mxu0 0.0
        %3694 = vmatpush1.msra.mxu0 0.0
        %3695 = vmatprep.subr.mxu0 0.0
        %3696 = vmatpush1.msra.mxu0 0.0
        %3697 = vmatprep.subr.mxu0 0.0
        %3698 = vmatpush1.msra.mxu0 0.0
        %3699 = vmatprep.subr.mxu0 0.0
        %3700 = vmatpush1.msra.mxu0 0.0
        %3701 = vmatprep.subr.mxu0 0.0
        %3702 = vmatpush1.msra.mxu0 0.0
        %3703 = vmatprep.subr.mxu0 0.0
        %3704 = vmatpush1.msra.mxu0 0.0
        %3705 = vmatprep.subr.mxu0 0.0
        %3706 = vmatpush1.msra.mxu0 0.0
        %3707 = vmatprep.subr.mxu0 0.0
        %3708 = vmatpush1.msra.mxu0 0.0
        %3709 = vmatprep.subr.mxu0 0.0
        %3710 = vmatpush1.msra.mxu0 0.0
        %3711 = vmatprep.subr.mxu0 0.0
        %3712 = vmatpush1.msra.mxu0 0.0
        %3713 = vmatprep.mubr.f32.mxu0 0.0
        %3714 = vmatmul.mubr.f32.gmra.mrb[0].mxu0 %v3637
        %v3715 = vpop.f32.mrb[0].mxu0
        %v3716 = vadd.f32 %v3633, %v3715
        %v3717 = vpop.f32.mrb[0].mxu0
        %3718 = vmatprep.mubr.f32.mxu0 0.0
        %3719 = vmatmul.mubr.f32.gmra.mrb[0].mxu0 %v3640
        %v3720 = vpop.f32.mrb[0].mxu0
        %v3721 = vadd.f32 %v3633, %v3720
        %v3722 = vpop.f32.mrb[0].mxu0
        %3723 = vmatprep.mubr.f32.mxu0 0.0
        %3724 = vmatmul.mubr.f32.gmra.mrb[0].mxu0 %v3643
        %v3725 = vpop.f32.mrb[0].mxu0
        %v3726 = vadd.f32 %v3633, %v3725
        %v3727 = vpop.f32.mrb[0].mxu0
        %3728 = vdwg.mxu0
        %v3729 = vadd.f32 %v3716, %v3721
        %v3730 = vadd.f32 %v3729, %v3726
        %v3731 = vmul.f32 %v3730, 0.33333334
        %v3732 = vsub.f32 %v3716, %v3731
        %v3733 = vsub.f32 %v3721, %v3731
        %v3734 = vsub.f32 %v3726, %v3731
        %v3735 = vmul.f32 %v3732, %v3732
        %v3736 = vmul.f32 %v3733, %v3733
        %v3737 = vadd.f32 %v3735, %v3736
        %v3738 = vmul.f32 %v3734, %v3734
        %v3739 = vadd.f32 %v3737, %v3738
        %v3740 = vmul.f32 %v3739, 0.33333334
        %v3741 = vadd.f32 %v3740, 1e-05
        %v3742 = vrsqrt.pop %v3741
        %v3743 = vmul.f32 %v3732, %v3742
        %v3744 = vmul.f32 %v3733, %v3742
        %v3745 = vmul.f32 %v3734, %v3742
        %v3748 = vunpack.c.l.s4 1966171168
        %v3749 = vunpack.c.0.s8 %v3748
        %v3750 = vlaneseq
        %v3751 = vshrl.u32 %v3750, 7
        %v3752 = vsub.s32 %v3749, %v3751
        %v3753 = vrot.slane %v3623, %v3752
        %v3754 = vcombine.high %v3753, %v3753
        %v3756 = vunpack.c.l.s4 1966171168
        %v3757 = vunpack.c.0.s8 %v3756
        %v3758 = vlaneseq
        %v3759 = vshrl.u32 %v3758, 7
        %v3760 = vsub.s32 %v3757, %v3759
        %v3761 = vrot.slane %v3753, %v3760
        %v3763 = vunpack.c.l.s4 1966171168
        %v3764 = vunpack.c.0.s8 %v3763
        %v3765 = vlaneseq
        %v3766 = vshrl.u32 %v3765, 7
        %v3767 = vsub.s32 %v3764, %v3766
        %v3768 = vrot.slane %v3754, %v3767
        %v3769 = vcombine.high %v3761, %v3761
        %v3770 = vlaneseq
        %v3771 = vshrl.u32 %v3770, 7
        %v3772 = vsub.s32 0, %v3771
        %v3773 = vrot.slane %v3761, %v3772
        %v3774 = vlaneseq
        %v3775 = vshrl.u32 %v3774, 7
        %v3776 = vsub.s32 0, %v3775
        %v3777 = vrot.slane %v3768, %v3776
        %v3778 = vlaneseq
        %v3779 = vshrl.u32 %v3778, 7
        %v3780 = vsub.s32 0, %v3779
        %v3781 = vrot.slane %v3769, %v3780
        %3782 = vset.pattern.permute.xlu0 0
        %3783 = vperm.xlu0 %3782, %v3773
        %v3784 = vpop.permute.xlu0 %3783
        %3786 = vset.pattern.permute.xlu0 0
        %3787 = vperm.xlu0 %3786, %v3777
        %v3788 = vpop.permute.xlu0 %3787
        %3790 = vset.pattern.permute.xlu0 0
        %3791 = vperm.xlu0 %3790, %v3781
        %v3792 = vpop.permute.xlu0 %3791
        %v3794 = vmul.f32 %v3743, %v3784
        %v3795 = vmul.f32 %v3744, %v3788
        %v3796 = vmul.f32 %v3745, %v3792
        %v3799 = vunpack.c.l.s4 1966171168
        %v3800 = vunpack.c.0.s8 %v3799
        %v3801 = vlaneseq
        %v3802 = vshrl.u32 %v3801, 7
        %v3803 = vsub.s32 %v3800, %v3802
        %v3804 = vrot.slane %v3625, %v3803
        %v3805 = vcombine.high %v3804, %v3804
        %v3807 = vunpack.c.l.s4 1966171168
        %v3808 = vunpack.c.0.s8 %v3807
        %v3809 = vlaneseq
        %v3810 = vshrl.u32 %v3809, 7
        %v3811 = vsub.s32 %v3808, %v3810
        %v3812 = vrot.slane %v3804, %v3811
        %v3814 = vunpack.c.l.s4 1966171168
        %v3815 = vunpack.c.0.s8 %v3814
        %v3816 = vlaneseq
        %v3817 = vshrl.u32 %v3816, 7
        %v3818 = vsub.s32 %v3815, %v3817
        %v3819 = vrot.slane %v3805, %v3818
        %v3820 = vcombine.high %v3812, %v3812
        %v3821 = vlaneseq
        %v3822 = vshrl.u32 %v3821, 7
        %v3823 = vsub.s32 0, %v3822
        %v3824 = vrot.slane %v3812, %v3823
        %v3825 = vlaneseq
        %v3826 = vshrl.u32 %v3825, 7
        %v3827 = vsub.s32 0, %v3826
        %v3828 = vrot.slane %v3819, %v3827
        %v3829 = vlaneseq
        %v3830 = vshrl.u32 %v3829, 7
        %v3831 = vsub.s32 0, %v3830
        %v3832 = vrot.slane %v3820, %v3831
        %3833 = vset.pattern.permute.xlu0 0
        %3834 = vperm.xlu0 %3833, %v3824
        %v3835 = vpop.permute.xlu0 %3834
        %3837 = vset.pattern.permute.xlu0 0
        %3838 = vperm.xlu0 %3837, %v3828
        %v3839 = vpop.permute.xlu0 %3838
        %3841 = vset.pattern.permute.xlu0 0
        %3842 = vperm.xlu0 %3841, %v3832
        %v3843 = vpop.permute.xlu0 %3842
        %v3845 = vadd.f32 %v3794, %v3835
        %v3846 = vadd.f32 %v3795, %v3839
        %v3847 = vadd.f32 %v3796, %v3843
        %v3848 = vmax.f32 %v3845, 0.0
        %v3849 = vmax.f32 %v3846, 0.0
        %v3850 = vmax.f32 %v3847, 0.0
        %s3851 = scalar_lea.vmem [#allocation24], 16
        %v3852 = vld [vmem:[%s3851] sm:$0x7]
        %s3853 = scalar_lea.vmem [#allocation26], 16
        %v3854 = vld [vmem:[%s3853] sm:$0x7]
        %v3855 = vld [vmem:[#allocation21] sm:$0x7f]
        %v3856 = vld [vmem:[#allocation23] sm:$0x1]
        %v3858 = vlaneseq
        %v3859 = vshrl.u32 %v3858, 7
        %v3860 = vsub.s32 0, %v3859
        %v3861 = vrot.slane %v3856, %v3860
        %vm3863 = vcmask 56320
        %v3865 = vsel %vm3863, %v3848, 0
        %v3868 = vsel %vm3863, %v3849, 0
        %v3871 = vsel %vm3863, %v3850, 0
        %v3874 = vsel %vm3645, %v3855, 0
        %3876 = vmatprep.subr.mxu0 0.0
        %3877 = vmatpush1.msra.mxu0 %v3874
        %3878 = vmatprep.subr.mxu0 0.0
        %3879 = vmatpush1.msra.mxu0 0.0
        %3880 = vmatprep.subr.mxu0 0.0
        %3881 = vmatpush1.msra.mxu0 0.0
        %3882 = vmatprep.subr.mxu0 0.0
        %3883 = vmatpush1.msra.mxu0 0.0
        %3884 = vmatprep.subr.mxu0 0.0
        %3885 = vmatpush1.msra.mxu0 0.0
        %3886 = vmatprep.subr.mxu0 0.0
        %3887 = vmatpush1.msra.mxu0 0.0
        %3888 = vmatprep.subr.mxu0 0.0
        %3889 = vmatpush1.msra.mxu0 0.0
        %3890 = vmatprep.subr.mxu0 0.0
        %3891 = vmatpush1.msra.mxu0 0.0
        %3892 = vmatprep.subr.mxu0 0.0
        %3893 = vmatpush1.msra.mxu0 0.0
        %3894 = vmatprep.subr.mxu0 0.0
        %3895 = vmatpush1.msra.mxu0 0.0
        %3896 = vmatprep.subr.mxu0 0.0
        %3897 = vmatpush1.msra.mxu0 0.0
        %3898 = vmatprep.subr.mxu0 0.0
        %3899 = vmatpush1.msra.mxu0 0.0
        %3900 = vmatprep.subr.mxu0 0.0
        %3901 = vmatpush1.msra.mxu0 0.0
        %3902 = vmatprep.subr.mxu0 0.0
        %3903 = vmatpush1.msra.mxu0 0.0
        %3904 = vmatprep.subr.mxu0 0.0
        %3905 = vmatpush1.msra.mxu0 0.0
        %3906 = vmatprep.subr.mxu0 0.0
        %3907 = vmatpush1.msra.mxu0 0.0
        %3908 = vmatprep.subr.mxu0 0.0
        %3909 = vmatpush1.msra.mxu0 0.0
        %3910 = vmatprep.subr.mxu0 0.0
        %3911 = vmatpush1.msra.mxu0 0.0
        %3912 = vmatprep.subr.mxu0 0.0
        %3913 = vmatpush1.msra.mxu0 0.0
        %3914 = vmatprep.subr.mxu0 0.0
        %3915 = vmatpush1.msra.mxu0 0.0
        %3916 = vmatprep.subr.mxu0 0.0
        %3917 = vmatpush1.msra.mxu0 0.0
        %3918 = vmatprep.subr.mxu0 0.0
        %3919 = vmatpush1.msra.mxu0 0.0
        %3920 = vmatprep.subr.mxu0 0.0
        %3921 = vmatpush1.msra.mxu0 0.0
        %3922 = vmatprep.subr.mxu0 0.0
        %3923 = vmatpush1.msra.mxu0 0.0
        %3924 = vmatprep.subr.mxu0 0.0
        %3925 = vmatpush1.msra.mxu0 0.0
        %3926 = vmatprep.subr.mxu0 0.0
        %3927 = vmatpush1.msra.mxu0 0.0
        %3928 = vmatprep.subr.mxu0 0.0
        %3929 = vmatpush1.msra.mxu0 0.0
        %3930 = vmatprep.subr.mxu0 0.0
        %3931 = vmatpush1.msra.mxu0 0.0
        %3932 = vmatprep.subr.mxu0 0.0
        %3933 = vmatpush1.msra.mxu0 0.0
        %3934 = vmatprep.subr.mxu0 0.0
        %3935 = vmatpush1.msra.mxu0 0.0
        %3936 = vmatprep.subr.mxu0 0.0
        %3937 = vmatpush1.msra.mxu0 0.0
        %3938 = vmatprep.subr.mxu0 0.0
        %3939 = vmatpush1.msra.mxu0 0.0
        %3940 = vmatprep.mubr.f32.mxu0 0.0
        %3941 = vmatmul.mubr.f32.gmra.mrb[0].mxu0 %v3865
        %v3942 = vpop.f32.mrb[0].mxu0
        %v3943 = vadd.f32 %v3861, %v3942
        %v3944 = vpop.f32.mrb[0].mxu0
        %3945 = vmatprep.mubr.f32.mxu0 0.0
        %3946 = vmatmul.mubr.f32.gmra.mrb[0].mxu0 %v3868
        %v3947 = vpop.f32.mrb[0].mxu0
        %v3948 = vadd.f32 %v3861, %v3947
        %v3949 = vpop.f32.mrb[0].mxu0
        %3950 = vmatprep.mubr.f32.mxu0 0.0
        %3951 = vmatmul.mubr.f32.gmra.mrb[0].mxu0 %v3871
        %v3952 = vpop.f32.mrb[0].mxu0
        %v3953 = vadd.f32 %v3861, %v3952
        %v3954 = vpop.f32.mrb[0].mxu0
        %3955 = vdwg.mxu0
        %v3956 = vadd.f32 %v3943, %v3948
        %v3957 = vadd.f32 %v3956, %v3953
        %v3958 = vmul.f32 %v3957, 0.33333334
        %v3959 = vsub.f32 %v3943, %v3958
        %v3960 = vsub.f32 %v3948, %v3958
        %v3961 = vsub.f32 %v3953, %v3958
        %v3962 = vmul.f32 %v3959, %v3959
        %v3963 = vmul.f32 %v3960, %v3960
        %v3964 = vadd.f32 %v3962, %v3963
        %v3965 = vmul.f32 %v3961, %v3961
        %v3966 = vadd.f32 %v3964, %v3965
        %v3967 = vmul.f32 %v3966, 0.33333334
        %v3968 = vadd.f32 %v3967, 1e-05
        %v3969 = vrsqrt.pop %v3968
        %v3970 = vmul.f32 %v3959, %v3969
        %v3971 = vmul.f32 %v3960, %v3969
        %v3972 = vmul.f32 %v3961, %v3969
        %v3975 = vunpack.c.l.s4 1966171168
        %v3976 = vunpack.c.0.s8 %v3975
        %v3977 = vlaneseq
        %v3978 = vshrl.u32 %v3977, 7
        %v3979 = vsub.s32 %v3976, %v3978
        %v3980 = vrot.slane %v3852, %v3979
        %v3981 = vcombine.high %v3980, %v3980
        %v3983 = vunpack.c.l.s4 1966171168
        %v3984 = vunpack.c.0.s8 %v3983
        %v3985 = vlaneseq
        %v3986 = vshrl.u32 %v3985, 7
        %v3987 = vsub.s32 %v3984, %v3986
        %v3988 = vrot.slane %v3980, %v3987
        %v3990 = vunpack.c.l.s4 1966171168
        %v3991 = vunpack.c.0.s8 %v3990
        %v3992 = vlaneseq
        %v3993 = vshrl.u32 %v3992, 7
        %v3994 = vsub.s32 %v3991, %v3993
        %v3995 = vrot.slane %v3981, %v3994
        %v3996 = vcombine.high %v3988, %v3988
        %v3997 = vlaneseq
        %v3998 = vshrl.u32 %v3997, 7
        %v3999 = vsub.s32 0, %v3998
        %v4000 = vrot.slane %v3988, %v3999
        %v4001 = vlaneseq
        %v4002 = vshrl.u32 %v4001, 7
        %v4003 = vsub.s32 0, %v4002
        %v4004 = vrot.slane %v3995, %v4003
        %v4005 = vlaneseq
        %v4006 = vshrl.u32 %v4005, 7
        %v4007 = vsub.s32 0, %v4006
        %v4008 = vrot.slane %v3996, %v4007
        %4009 = vset.pattern.permute.xlu0 0
        %4010 = vperm.xlu0 %4009, %v4000
        %v4011 = vpop.permute.xlu0 %4010
        %4013 = vset.pattern.permute.xlu0 0
        %4014 = vperm.xlu0 %4013, %v4004
        %v4015 = vpop.permute.xlu0 %4014
        %4017 = vset.pattern.permute.xlu0 0
        %4018 = vperm.xlu0 %4017, %v4008
        %v4019 = vpop.permute.xlu0 %4018
        %v4021 = vmul.f32 %v3970, %v4011
        %v4022 = vmul.f32 %v3971, %v4015
        %v4023 = vmul.f32 %v3972, %v4019
        %v4026 = vunpack.c.l.s4 1966171168
        %v4027 = vunpack.c.0.s8 %v4026
        %v4028 = vlaneseq
        %v4029 = vshrl.u32 %v4028, 7
        %v4030 = vsub.s32 %v4027, %v4029
        %v4031 = vrot.slane %v3854, %v4030
        %v4032 = vcombine.high %v4031, %v4031
        %v4034 = vunpack.c.l.s4 1966171168
        %v4035 = vunpack.c.0.s8 %v4034
        %v4036 = vlaneseq
        %v4037 = vshrl.u32 %v4036, 7
        %v4038 = vsub.s32 %v4035, %v4037
        %v4039 = vrot.slane %v4031, %v4038
        %v4041 = vunpack.c.l.s4 1966171168
        %v4042 = vunpack.c.0.s8 %v4041
        %v4043 = vlaneseq
        %v4044 = vshrl.u32 %v4043, 7
        %v4045 = vsub.s32 %v4042, %v4044
        %v4046 = vrot.slane %v4032, %v4045
        %v4047 = vcombine.high %v4039, %v4039
        %v4048 = vlaneseq
        %v4049 = vshrl.u32 %v4048, 7
        %v4050 = vsub.s32 0, %v4049
        %v4051 = vrot.slane %v4039, %v4050
        %v4052 = vlaneseq
        %v4053 = vshrl.u32 %v4052, 7
        %v4054 = vsub.s32 0, %v4053
        %v4055 = vrot.slane %v4046, %v4054
        %v4056 = vlaneseq
        %v4057 = vshrl.u32 %v4056, 7
        %v4058 = vsub.s32 0, %v4057
        %v4059 = vrot.slane %v4047, %v4058
        %4060 = vset.pattern.permute.xlu0 0
        %4061 = vperm.xlu0 %4060, %v4051
        %v4062 = vpop.permute.xlu0 %4061
        %4064 = vset.pattern.permute.xlu0 0
        %4065 = vperm.xlu0 %4064, %v4055
        %v4066 = vpop.permute.xlu0 %4065
        %4068 = vset.pattern.permute.xlu0 0
        %4069 = vperm.xlu0 %4068, %v4059
        %v4070 = vpop.permute.xlu0 %4069
        %v4072 = vadd.f32 %v4021, %v4062
        %v4073 = vadd.f32 %v4022, %v4066
        %v4074 = vadd.f32 %v4023, %v4070
        %v4075 = vmax.f32 %v4072, 0.0
        %v4076 = vmax.f32 %v4073, 0.0
        %v4077 = vmax.f32 %v4074, 0.0
        %v4078 = vld [vmem:[#allocation27] sm:$0x7]
        %v4079 = vld [vmem:[#allocation30] sm:$0x1]
        %v4081 = vlaneseq
        %v4082 = vshrl.u32 %v4081, 7
        %v4083 = vsub.s32 0, %v4082
        %v4084 = vrot.slane %v4079, %v4083
        %v4087 = vsel %vm1774, %v4075, 0
        %v4090 = vsel %vm1774, %v4076, 0
        %v4093 = vsel %vm1774, %v4077, 0
        %vm4095 = vcmask 1042432
        %v4097 = vsel %vm4095, %v4078, 0
        %4099 = vmatprep.subr.mxu0 0.0
        %4100 = vmatpush1.msra.mxu0 %v4097
        %4101 = vmatprep.subr.mxu0 0.0
        %4102 = vmatpush1.msra.mxu0 0.0
        %4103 = vmatprep.subr.mxu0 0.0
        %4104 = vmatpush1.msra.mxu0 0.0
        %4105 = vmatprep.subr.mxu0 0.0
        %4106 = vmatpush1.msra.mxu0 0.0
        %4107 = vmatprep.subr.mxu0 0.0
        %4108 = vmatpush1.msra.mxu0 0.0
        %4109 = vmatprep.subr.mxu0 0.0
        %4110 = vmatpush1.msra.mxu0 0.0
        %4111 = vmatprep.subr.mxu0 0.0
        %4112 = vmatpush1.msra.mxu0 0.0
        %4113 = vmatprep.subr.mxu0 0.0
        %4114 = vmatpush1.msra.mxu0 0.0
        %4115 = vmatprep.subr.mxu0 0.0
        %4116 = vmatpush1.msra.mxu0 0.0
        %4117 = vmatprep.subr.mxu0 0.0
        %4118 = vmatpush1.msra.mxu0 0.0
        %4119 = vmatprep.subr.mxu0 0.0
        %4120 = vmatpush1.msra.mxu0 0.0
        %4121 = vmatprep.subr.mxu0 0.0
        %4122 = vmatpush1.msra.mxu0 0.0
        %4123 = vmatprep.subr.mxu0 0.0
        %4124 = vmatpush1.msra.mxu0 0.0
        %4125 = vmatprep.subr.mxu0 0.0
        %4126 = vmatpush1.msra.mxu0 0.0
        %4127 = vmatprep.subr.mxu0 0.0
        %4128 = vmatpush1.msra.mxu0 0.0
        %4129 = vmatprep.subr.mxu0 0.0
        %4130 = vmatpush1.msra.mxu0 0.0
        %4131 = vmatprep.subr.mxu0 0.0
        %4132 = vmatpush1.msra.mxu0 0.0
        %4133 = vmatprep.subr.mxu0 0.0
        %4134 = vmatpush1.msra.mxu0 0.0
        %4135 = vmatprep.subr.mxu0 0.0
        %4136 = vmatpush1.msra.mxu0 0.0
        %4137 = vmatprep.subr.mxu0 0.0
        %4138 = vmatpush1.msra.mxu0 0.0
        %4139 = vmatprep.subr.mxu0 0.0
        %4140 = vmatpush1.msra.mxu0 0.0
        %4141 = vmatprep.subr.mxu0 0.0
        %4142 = vmatpush1.msra.mxu0 0.0
        %4143 = vmatprep.subr.mxu0 0.0
        %4144 = vmatpush1.msra.mxu0 0.0
        %4145 = vmatprep.subr.mxu0 0.0
        %4146 = vmatpush1.msra.mxu0 0.0
        %4147 = vmatprep.subr.mxu0 0.0
        %4148 = vmatpush1.msra.mxu0 0.0
        %4149 = vmatprep.subr.mxu0 0.0
        %4150 = vmatpush1.msra.mxu0 0.0
        %4151 = vmatprep.subr.mxu0 0.0
        %4152 = vmatpush1.msra.mxu0 0.0
        %4153 = vmatprep.subr.mxu0 0.0
        %4154 = vmatpush1.msra.mxu0 0.0
        %4155 = vmatprep.subr.mxu0 0.0
        %4156 = vmatpush1.msra.mxu0 0.0
        %4157 = vmatprep.subr.mxu0 0.0
        %4158 = vmatpush1.msra.mxu0 0.0
        %4159 = vmatprep.subr.mxu0 0.0
        %4160 = vmatpush1.msra.mxu0 0.0
        %4161 = vmatprep.subr.mxu0 0.0
        %4162 = vmatpush1.msra.mxu0 0.0
        %4163 = vmatprep.mubr.f32.mxu0 0.0
        %4164 = vmatmul.mubr.f32.gmra.mrb[0].mxu0 %v4087
        %v4165 = vpop.f32.mrb[0].mxu0
        %v4166 = vadd.f32 %v4084, %v4165
        %v4167 = vpop.f32.mrb[0].mxu0
        %4168 = vmatprep.mubr.f32.mxu0 0.0
        %4169 = vmatmul.mubr.f32.gmra.mrb[0].mxu0 %v4090
        %v4170 = vpop.f32.mrb[0].mxu0
        %v4171 = vadd.f32 %v4084, %v4170
        %v4172 = vpop.f32.mrb[0].mxu0
        %4173 = vmatprep.mubr.f32.mxu0 0.0
        %4174 = vmatmul.mubr.f32.gmra.mrb[0].mxu0 %v4093
        %v4175 = vpop.f32.mrb[0].mxu0
        %v4176 = vadd.f32 %v4084, %v4175
        %v4177 = vpop.f32.mrb[0].mxu0
        %4178 = vdwg.mxu0
        %v4179 = vld [vmem:[#allocation29] sm:$0xff]
        %v4180 = vld [vmem:[#allocation29 + $0x8] sm:$0xff]
        %v4181 = vld [vmem:[#allocation29 + $0x10] sm:$0xff]
        %v4182 = vld [vmem:[#allocation29 + $0x18] sm:$0x3f]
        %v4184 = vsel %vm3406, 0.0, 0
        %v4187 = vsel %vm3416, %v4182, 0
        %4189 = vmatprep.subr.mxu0 0.0
        %4190 = vmatpush1.msra.mxu0 %v4179
        %4191 = vmatprep.subr.mxu0 0.0
        %4192 = vmatpush1.msra.mxu0 %v4180
        %4193 = vmatprep.subr.mxu0 0.0
        %4194 = vmatpush1.msra.mxu0 %v4181
        %4195 = vmatprep.subr.mxu0 0.0
        %4196 = vmatpush1.msra.mxu0 %v4187
        %4197 = vmatprep.subr.mxu0 0.0
        %4198 = vmatpush1.msra.mxu0 0.0
        %4199 = vmatprep.subr.mxu0 0.0
        %4200 = vmatpush1.msra.mxu0 0.0
        %4201 = vmatprep.subr.mxu0 0.0
        %4202 = vmatpush1.msra.mxu0 0.0
        %4203 = vmatprep.subr.mxu0 0.0
        %4204 = vmatpush1.msra.mxu0 0.0
        %4205 = vmatprep.subr.mxu0 0.0
        %4206 = vmatpush1.msra.mxu0 0.0
        %4207 = vmatprep.subr.mxu0 0.0
        %4208 = vmatpush1.msra.mxu0 0.0
        %4209 = vmatprep.subr.mxu0 0.0
        %4210 = vmatpush1.msra.mxu0 0.0
        %4211 = vmatprep.subr.mxu0 0.0
        %4212 = vmatpush1.msra.mxu0 0.0
        %4213 = vmatprep.subr.mxu0 0.0
        %4214 = vmatpush1.msra.mxu0 0.0
        %4215 = vmatprep.subr.mxu0 0.0
        %4216 = vmatpush1.msra.mxu0 0.0
        %4217 = vmatprep.subr.mxu0 0.0
        %4218 = vmatpush1.msra.mxu0 0.0
        %4219 = vmatprep.subr.mxu0 0.0
        %4220 = vmatpush1.msra.mxu0 0.0
        %4221 = vmatprep.subr.mxu0 0.0
        %4222 = vmatpush1.msra.mxu0 0.0
        %4223 = vmatprep.subr.mxu0 0.0
        %4224 = vmatpush1.msra.mxu0 0.0
        %4225 = vmatprep.subr.mxu0 0.0
        %4226 = vmatpush1.msra.mxu0 0.0
        %4227 = vmatprep.subr.mxu0 0.0
        %4228 = vmatpush1.msra.mxu0 0.0
        %4229 = vmatprep.subr.mxu0 0.0
        %4230 = vmatpush1.msra.mxu0 0.0
        %4231 = vmatprep.subr.mxu0 0.0
        %4232 = vmatpush1.msra.mxu0 0.0
        %4233 = vmatprep.subr.mxu0 0.0
        %4234 = vmatpush1.msra.mxu0 0.0
        %4235 = vmatprep.subr.mxu0 0.0
        %4236 = vmatpush1.msra.mxu0 0.0
        %4237 = vmatprep.subr.mxu0 0.0
        %4238 = vmatpush1.msra.mxu0 0.0
        %4239 = vmatprep.subr.mxu0 0.0
        %4240 = vmatpush1.msra.mxu0 0.0
        %4241 = vmatprep.subr.mxu0 0.0
        %4242 = vmatpush1.msra.mxu0 0.0
        %4243 = vmatprep.subr.mxu0 0.0
        %4244 = vmatpush1.msra.mxu0 0.0
        %4245 = vmatprep.subr.mxu0 0.0
        %4246 = vmatpush1.msra.mxu0 0.0
        %4247 = vmatprep.subr.mxu0 0.0
        %4248 = vmatpush1.msra.mxu0 0.0
        %4249 = vmatprep.subr.mxu0 0.0
        %4250 = vmatpush1.msra.mxu0 0.0
        %4251 = vmatprep.subr.mxu0 0.0
        %4252 = vmatpush1.msra.mxu0 0.0
        %4253 = vmatprep.mubr.f32.mxu0 0.0
        %4254 = vmatmul.mubr.f32.gmra.mrb[0].mxu0 %v4184
        %v4255 = vpop.f32.mrb[0].mxu0
        %v4256 = vadd.f32 0.0, %v4255
        %v4257 = vpop.f32.mrb[0].mxu0
        %4258 = vdwg.mxu0
        %v4259 = vadd.f32 %v4166, %v4256
        %v4260 = vsub.f32 0.0, %v4259
        %v4261 = vmul.f32 %v4260, 1.442695
        %v4262 = vpow.pop %v4261
        %v4263 = vadd.f32 %v4262, 1.0
        %v4264 = vrcp.pop %v4263
        %v4265 = vmul.f32 1.0, %v4264
        %v4266 = vtanh.pop %v4259
        %v4267 = vmul.f32 %v4265, 0.0
        %4269 = vrot.lane.b32.xlu0 %v4266, 68
        %v4270 = vpop.permute.xlu0 %4269
        %v4272 = vmul.f32 %v4265, %v4270
        %4274 = vrot.lane.b32.xlu0 %v4272, 30
        %v4275 = vpop.permute.xlu0 %4274
        %v4277 = vadd.f32 %v4267, %v4275
        %v4278 = vtanh.pop %v4277
        %4280 = vrot.lane.b32.xlu0 %v4278, 60
        %v4281 = vpop.permute.xlu0 %4280
        %v4283 = vmul.f32 %v4265, %v4281
        %4285 = vrot.lane.b32.xlu0 %v4283, 38
        %v4286 = vpop.permute.xlu0 %4285
        %v4287 = vsel %vm3406, %v4286, 0
        %4289 = vmatprep.subr.mxu0 0.0
        %4290 = vmatpush1.msra.mxu0 %v4179
        %4291 = vmatprep.subr.mxu0 0.0
        %4292 = vmatpush1.msra.mxu0 %v4180
        %4293 = vmatprep.subr.mxu0 0.0
        %4294 = vmatpush1.msra.mxu0 %v4181
        %4295 = vmatprep.subr.mxu0 0.0
        %4296 = vmatpush1.msra.mxu0 %v4187
        %4297 = vmatprep.subr.mxu0 0.0
        %4298 = vmatpush1.msra.mxu0 0.0
        %4299 = vmatprep.subr.mxu0 0.0
        %4300 = vmatpush1.msra.mxu0 0.0
        %4301 = vmatprep.subr.mxu0 0.0
        %4302 = vmatpush1.msra.mxu0 0.0
        %4303 = vmatprep.subr.mxu0 0.0
        %4304 = vmatpush1.msra.mxu0 0.0
        %4305 = vmatprep.subr.mxu0 0.0
        %4306 = vmatpush1.msra.mxu0 0.0
        %4307 = vmatprep.subr.mxu0 0.0
        %4308 = vmatpush1.msra.mxu0 0.0
        %4309 = vmatprep.subr.mxu0 0.0
        %4310 = vmatpush1.msra.mxu0 0.0
        %4311 = vmatprep.subr.mxu0 0.0
        %4312 = vmatpush1.msra.mxu0 0.0
        %4313 = vmatprep.subr.mxu0 0.0
        %4314 = vmatpush1.msra.mxu0 0.0
        %4315 = vmatprep.subr.mxu0 0.0
        %4316 = vmatpush1.msra.mxu0 0.0
        %4317 = vmatprep.subr.mxu0 0.0
        %4318 = vmatpush1.msra.mxu0 0.0
        %4319 = vmatprep.subr.mxu0 0.0
        %4320 = vmatpush1.msra.mxu0 0.0
        %4321 = vmatprep.subr.mxu0 0.0
        %4322 = vmatpush1.msra.mxu0 0.0
        %4323 = vmatprep.subr.mxu0 0.0
        %4324 = vmatpush1.msra.mxu0 0.0
        %4325 = vmatprep.subr.mxu0 0.0
        %4326 = vmatpush1.msra.mxu0 0.0
        %4327 = vmatprep.subr.mxu0 0.0
        %4328 = vmatpush1.msra.mxu0 0.0
        %4329 = vmatprep.subr.mxu0 0.0
        %4330 = vmatpush1.msra.mxu0 0.0
        %4331 = vmatprep.subr.mxu0 0.0
        %4332 = vmatpush1.msra.mxu0 0.0
        %4333 = vmatprep.subr.mxu0 0.0
        %4334 = vmatpush1.msra.mxu0 0.0
        %4335 = vmatprep.subr.mxu0 0.0
        %4336 = vmatpush1.msra.mxu0 0.0
        %4337 = vmatprep.subr.mxu0 0.0
        %4338 = vmatpush1.msra.mxu0 0.0
        %4339 = vmatprep.subr.mxu0 0.0
        %4340 = vmatpush1.msra.mxu0 0.0
        %4341 = vmatprep.subr.mxu0 0.0
        %4342 = vmatpush1.msra.mxu0 0.0
        %4343 = vmatprep.subr.mxu0 0.0
        %4344 = vmatpush1.msra.mxu0 0.0
        %4345 = vmatprep.subr.mxu0 0.0
        %4346 = vmatpush1.msra.mxu0 0.0
        %4347 = vmatprep.subr.mxu0 0.0
        %4348 = vmatpush1.msra.mxu0 0.0
        %4349 = vmatprep.subr.mxu0 0.0
        %4350 = vmatpush1.msra.mxu0 0.0
        %4351 = vmatprep.subr.mxu0 0.0
        %4352 = vmatpush1.msra.mxu0 0.0
        %4353 = vmatprep.mubr.f32.mxu0 0.0
        %4354 = vmatmul.mubr.f32.gmra.mrb[0].mxu0 %v4287
        %v4355 = vpop.f32.mrb[0].mxu0
        %v4356 = vadd.f32 0.0, %v4355
        %v4357 = vpop.f32.mrb[0].mxu0
        %4358 = vdwg.mxu0
        %v4359 = vadd.f32 %v4171, %v4356
        %v4360 = vsub.f32 0.0, %v4359
        %v4361 = vmul.f32 %v4360, 1.442695
        %v4362 = vpow.pop %v4361
        %v4363 = vadd.f32 %v4362, 1.0
        %v4364 = vrcp.pop %v4363
        %v4365 = vmul.f32 1.0, %v4364
        %v4366 = vtanh.pop %v4359
        %v4367 = vmul.f32 %v4365, %v4277
        %4369 = vrot.lane.b32.xlu0 %v4366, 68
        %v4370 = vpop.permute.xlu0 %4369
        %v4372 = vmul.f32 %v4365, %v4370
        %4374 = vrot.lane.b32.xlu0 %v4372, 30
        %v4375 = vpop.permute.xlu0 %4374
        %v4377 = vadd.f32 %v4367, %v4375
        %v4378 = vtanh.pop %v4377
        %4380 = vrot.lane.b32.xlu0 %v4378, 60
        %v4381 = vpop.permute.xlu0 %4380
        %v4383 = vmul.f32 %v4365, %v4381
        %4385 = vrot.lane.b32.xlu0 %v4383, 38
        %v4386 = vpop.permute.xlu0 %4385
        %v4387 = vsel %vm3406, %v4386, 0
        %4389 = vmatprep.subr.mxu0 0.0
        %4390 = vmatpush1.msra.mxu0 %v4179
        %4391 = vmatprep.subr.mxu0 0.0
        %4392 = vmatpush1.msra.mxu0 %v4180
        %4393 = vmatprep.subr.mxu0 0.0
        %4394 = vmatpush1.msra.mxu0 %v4181
        %4395 = vmatprep.subr.mxu0 0.0
        %4396 = vmatpush1.msra.mxu0 %v4187
        %4397 = vmatprep.subr.mxu0 0.0
        %4398 = vmatpush1.msra.mxu0 0.0
        %4399 = vmatprep.subr.mxu0 0.0
        %4400 = vmatpush1.msra.mxu0 0.0
        %4401 = vmatprep.subr.mxu0 0.0
        %4402 = vmatpush1.msra.mxu0 0.0
        %4403 = vmatprep.subr.mxu0 0.0
        %4404 = vmatpush1.msra.mxu0 0.0
        %4405 = vmatprep.subr.mxu0 0.0
        %4406 = vmatpush1.msra.mxu0 0.0
        %4407 = vmatprep.subr.mxu0 0.0
        %4408 = vmatpush1.msra.mxu0 0.0
        %4409 = vmatprep.subr.mxu0 0.0
        %4410 = vmatpush1.msra.mxu0 0.0
        %4411 = vmatprep.subr.mxu0 0.0
        %4412 = vmatpush1.msra.mxu0 0.0
        %4413 = vmatprep.subr.mxu0 0.0
        %4414 = vmatpush1.msra.mxu0 0.0
        %4415 = vmatprep.subr.mxu0 0.0
        %4416 = vmatpush1.msra.mxu0 0.0
        %4417 = vmatprep.subr.mxu0 0.0
        %4418 = vmatpush1.msra.mxu0 0.0
        %4419 = vmatprep.subr.mxu0 0.0
        %4420 = vmatpush1.msra.mxu0 0.0
        %4421 = vmatprep.subr.mxu0 0.0
        %4422 = vmatpush1.msra.mxu0 0.0
        %4423 = vmatprep.subr.mxu0 0.0
        %4424 = vmatpush1.msra.mxu0 0.0
        %4425 = vmatprep.subr.mxu0 0.0
        %4426 = vmatpush1.msra.mxu0 0.0
        %4427 = vmatprep.subr.mxu0 0.0
        %4428 = vmatpush1.msra.mxu0 0.0
        %4429 = vmatprep.subr.mxu0 0.0
        %4430 = vmatpush1.msra.mxu0 0.0
        %4431 = vmatprep.subr.mxu0 0.0
        %4432 = vmatpush1.msra.mxu0 0.0
        %4433 = vmatprep.subr.mxu0 0.0
        %4434 = vmatpush1.msra.mxu0 0.0
        %4435 = vmatprep.subr.mxu0 0.0
        %4436 = vmatpush1.msra.mxu0 0.0
        %4437 = vmatprep.subr.mxu0 0.0
        %4438 = vmatpush1.msra.mxu0 0.0
        %4439 = vmatprep.subr.mxu0 0.0
        %4440 = vmatpush1.msra.mxu0 0.0
        %4441 = vmatprep.subr.mxu0 0.0
        %4442 = vmatpush1.msra.mxu0 0.0
        %4443 = vmatprep.subr.mxu0 0.0
        %4444 = vmatpush1.msra.mxu0 0.0
        %4445 = vmatprep.subr.mxu0 0.0
        %4446 = vmatpush1.msra.mxu0 0.0
        %4447 = vmatprep.subr.mxu0 0.0
        %4448 = vmatpush1.msra.mxu0 0.0
        %4449 = vmatprep.subr.mxu0 0.0
        %4450 = vmatpush1.msra.mxu0 0.0
        %4451 = vmatprep.subr.mxu0 0.0
        %4452 = vmatpush1.msra.mxu0 0.0
        %4453 = vmatprep.mubr.f32.mxu0 0.0
        %4454 = vmatmul.mubr.f32.gmra.mrb[0].mxu0 %v4387
        %v4455 = vpop.f32.mrb[0].mxu0
        %v4456 = vadd.f32 0.0, %v4455
        %v4457 = vpop.f32.mrb[0].mxu0
        %4458 = vdwg.mxu0
        %v4459 = vadd.f32 %v4176, %v4456
        %v4460 = vsub.f32 0.0, %v4459
        %v4461 = vmul.f32 %v4460, 1.442695
        %v4462 = vpow.pop %v4461
        %v4463 = vadd.f32 %v4462, 1.0
        %v4464 = vrcp.pop %v4463
        %v4465 = vmul.f32 1.0, %v4464
        %v4466 = vtanh.pop %v4459
        %v4467 = vmul.f32 %v4465, %v4377
        %4469 = vrot.lane.b32.xlu0 %v4466, 68
        %v4470 = vpop.permute.xlu0 %4469
        %v4472 = vmul.f32 %v4465, %v4470
        %4474 = vrot.lane.b32.xlu0 %v4472, 30
        %v4475 = vpop.permute.xlu0 %4474
        %v4477 = vadd.f32 %v4467, %v4475
        %v4478 = vtanh.pop %v4477
        %4480 = vrot.lane.b32.xlu0 %v4478, 60
        %v4481 = vpop.permute.xlu0 %4480
        %v4483 = vmul.f32 %v4465, %v4481
        %v4484 = vadd.f32 %v4283, %v4383
        %v4485 = vadd.f32 %v4484, %v4483
        %v4486 = vmul.f32 %v4485, 0.33333334
        %v4487 = vsub.f32 %v4283, %v4486
        %v4488 = vsub.f32 %v4383, %v4486
        %v4489 = vsub.f32 %v4483, %v4486
        %v4490 = vmul.f32 %v4487, %v4487
        %v4491 = vmul.f32 %v4488, %v4488
        %v4492 = vadd.f32 %v4490, %v4491
        %v4493 = vmul.f32 %v4489, %v4489
        %v4494 = vadd.f32 %v4492, %v4493
        %v4495 = vmul.f32 %v4494, 0.33333334
        %v4496 = vadd.f32 %v4495, 1e-05
        %v4497 = vrsqrt.pop %v4496
        %s4498 = scalar_lea.vmem [#allocation24], 20
        %v4499 = vld [vmem:[%s4498] sm:$0x7]
        %s4500 = scalar_lea.vmem [#allocation26], 20
        %v4501 = vld [vmem:[%s4500] sm:$0x7]
        %v4502 = vmul.f32 %v4487, %v4497
        %s4504 = vtos %v4499
        %v4505 = vstv %s4504
        %v4507 = vmul.f32 %v4502, %v4505
        %s4509 = vtos %v4501
        %v4510 = vstv %s4509
        %v4512 = vadd.f32 %v4507, %v4510
        %v4513 = vld [vmem:[#allocation32] sm:$0x1]
        %v4514 = vlaneseq
        %v4515 = vshrl.u32 %v4514, 7
        %v4516 = vsub.s32 0, %v4515
        %v4517 = vrot.slane %v4513, %v4516
        %4519 = vrot.lane.b32.xlu0 %v4517, 90
        %v4520 = vpop.permute.xlu0 %4519
        %v4522 = vmul.f32 %v4512, %v4520
        %v4523 = vadd.f32 %v4522, 0.0
        %v4524 = vmul.f32 %v4488, %v4497
        %v4525 = vrot.slane %v4499, 1
        %s4526 = vtos %v4525
        %v4527 = vstv %s4526
        %v4529 = vmul.f32 %v4524, %v4527
        %v4530 = vrot.slane %v4501, 1
        %s4531 = vtos %v4530
        %v4532 = vstv %s4531
        %v4534 = vadd.f32 %v4529, %v4532
        %v4535 = vld [vmem:[#allocation32 + $0x1] sm:$0x1]
        %v4536 = vlaneseq
        %v4537 = vshrl.u32 %v4536, 7
        %v4538 = vsub.s32 0, %v4537
        %v4539 = vrot.slane %v4535, %v4538
        %4541 = vrot.lane.b32.xlu0 %v4539, 90
        %v4542 = vpop.permute.xlu0 %4541
        %v4544 = vmul.f32 %v4534, %v4542
        %v4545 = vadd.f32 %v4523, %v4544
        %v4546 = vmul.f32 %v4489, %v4497
        %v4547 = vrot.slane %v4499, 2
        %s4548 = vtos %v4547
        %v4549 = vstv %s4548
        %v4551 = vmul.f32 %v4546, %v4549
        %v4552 = vrot.slane %v4501, 2
        %s4553 = vtos %v4552
        %v4554 = vstv %s4553
        %v4556 = vadd.f32 %v4551, %v4554
        %v4557 = vld [vmem:[#allocation32 + $0x2] sm:$0x1]
        %v4558 = vlaneseq
        %v4559 = vshrl.u32 %v4558, 7
        %v4560 = vsub.s32 0, %v4559
        %v4561 = vrot.slane %v4557, %v4560
        %4563 = vrot.lane.b32.xlu0 %v4561, 90
        %v4564 = vpop.permute.xlu0 %4563
        %v4566 = vmul.f32 %v4556, %v4564
        %v4567 = vadd.f32 %v4545, %v4566
        %4569 = vrot.lane.b32.xlu0 %v4567, 38
        %v4570 = vpop.permute.xlu0 %4569
        %v4572 = vsel %vm3406, %v4570, 0.0
        %4573 = vadd.xlane.f32.xlu0 %v4572
        %v4574 = vpop.xlane.xlu0 %4573
        %v4575 = vld [vmem:[#allocation2] sm:$0x1]
        %v4577 = vlaneseq
        %v4578 = vshrl.u32 %v4577, 7
        %v4579 = vsub.s32 0, %v4578
        %v4580 = vrot.slane %v4575, %v4579
        %v4582 = vadd.f32 %v4574, %v4580
        %vm4583 = vcmask 7168
        %4584 = vst.msk [vmem:[%s891] sm:$0xff] %vm4583, %v4582
        %s4585 = sand.u32 %s481, 1
        %s4586 = scalar_lea.sflag [#allocation5], %s4585
        %s4587 = sand.u32 %s481, 1
        %s4588 = smul.addr %s4587, 8
        %s4589 = scalar_lea.vmem [#allocation33], %s4588
        // Predicated region
        $region177: #{_lambda_.1} parent=99 // pred_check
          %p4590 = pneg %p491
        $region178: #{_lambda_.1} parent=99 // pred_check_branch
          %4592 = sbr.rel (%p4590) target = $region180
        $region179: #{_lambda_.1} parent=99 // pred_region
          %s4594 = ssub.s32 128, 128
          %4595 = vsyncadd %s4586, %s4594
          %s4596 = smul.addr %s48, 128
          %s4597 = scalar_lea.hbm %s20, %s4596
          %s4599 = sshll.u32 %s4589, 4
          %s4600 = int_to_ptr.vmem [resolvable:$true] %s4599
          %4602 = dma.vmem_to_hbm [thread:$0]  %s4600, 128, %s4597, %s4586
        $region180: #{_lambda_.1} parent=99 // pred_fallthru
          _
      $region100: #{_lambda_.1} parent=5 // pred_fallthru
        _
      %p4603 = scmp.le.s32.totalorder 2, %s43
      // Predicated region
      $region181: #{_lambda_.1} parent=5 // pred_check
        %p4604 = pneg %p4603
      $region182: #{_lambda_.1} parent=5 // pred_check_branch
        %4606 = sbr.rel (%p4604) target = $region184
      $region183: #{_lambda_.1} parent=5 // pred_region
        %s4607 = ssub.s32 %s43, 2
        // Predicated region
        $region185: #{_lambda_.1} parent=183 // pred_check
          %p4608 = pneg %p497
        $region186: #{_lambda_.1} parent=183 // pred_check_branch
          %4610 = sbr.rel (%p4608) target = $region188
        $region187: #{_lambda_.1} parent=183 // pred_region
          %s4611 = sand.u32 %s482, 1
          %s4612 = scalar_lea.sflag [#allocation5], %s4611
          %s4613 = sand.u32 %s482, 1
          %s4614 = smul.addr %s4613, 8
          %s4615 = scalar_lea.vmem [#allocation33], %s4614
          %4616 = dma.done %s4612, 128
        $region188: #{_lambda_.1} parent=183 // pred_fallthru
          _
      $region184: #{_lambda_.1} parent=5 // pred_fallthru
        _
    $region6: #{_lambda_.1} parent=1 // loop_footer
      %s47 = sadd.s32 1, %s43
    $region7: #{_lambda_.1} parent=1 // loop_footer_branch
      %42 = sbr.rel target = $region3
    $region8: #{_lambda_.1} parent=1 // loop_exit
      _
    %4617 = vsyncpa [#allocation4], 1
    %s4618 = scalar_lea.sflag [#allocation4], 1
    %4619 = vsyncpa %s4618, 1
    %4620 = vsyncpa [#allocation7], 1
    %4621 = vsyncpa [#allocation10], 1
    %4622 = vsyncpa [#allocation13], 1
    %4623 = vsyncpa [#allocation16], 1
    %4624 = vsyncpa [#allocation19], 1
    %4625 = vsyncpa [#allocation22], 1
    %4626 = vsyncpa [#allocation25], 1
    %4627 = vsyncpa [#allocation28], 1
    %4628 = vsyncpa [#allocation31], 1
    %4629 = vsyncpa [#allocation5], 1
    %s4630 = scalar_lea.sflag [#allocation5], 1
    %4631 = vsyncpa %s4630, 1

</llo_original>
